<compile_context>
chip_gen: v7x
topology: tpu7x:2x2x1
jax: 0.10.0
libtpu: 0.0.40
codegen_flags: <defaults>
</compile_context>

<pallas_src>
from functools import partial

import jax
import jax.numpy as jnp
from jax import lax
from jax.experimental import pallas as pl
from jax.experimental.pallas import tpu as pltpu


def _attention_kernel(x_ref, wq_ref, wk_ref, wv_ref, wproj_ref, bproj_ref,
                      o_ref, y_ref, *, num_heads, head_dim, scale):
    # x_ref:    (1, N, C)  one batch element, MXU dtype (bf16 or f32)
    # wq/wk/wv: (H, C, hd) per-head Q/K/V weight blocks (VMEM resident)
    # wproj:    (C, C)     output projection (= W_proj.T), VMEM resident
    # bproj:    (1, C)     f32 bias
    # y_ref:    (N, C)     f32 scratch slab: merged head outputs
    x = x_ref[0]                                              # (N, C)

    # Per-head attention.  Heads are selected on the leading (untiled) axis of
    # the pre-blocked weights -> pure address math, no lane slicing of values.
    # The loop is statically unrolled; every slice offset below is static, and
    # each iteration's intermediates die at the scratch store (bounded liveness).
    for h in range(num_heads):
        wq = wq_ref[h]                                        # (C, hd)
        wk = wk_ref[h]
        wv = wv_ref[h]

        q = jnp.dot(x, wq)                                    # (N, hd) MXU dtype
        k = jnp.dot(x, wk)                                    # (N, hd)
        v = jnp.dot(x, wv)                                    # (N, hd)

        # Scores and softmax in f32 (VPU/EUP math stays f32; only MXU sees bf16).
        s = jnp.dot(q, k.T, preferred_element_type=jnp.float32) * scale   # (N, N)
        s = s - jnp.max(s, axis=-1, keepdims=True)
        p = jnp.exp(s)
        p = p * pl.reciprocal(jnp.sum(p, axis=-1, keepdims=True), approx=True)

        pv = jnp.dot(p.astype(v.dtype), v,
                     preferred_element_type=jnp.float32)      # (N, hd) f32

        # Write this head's output directly into the merged (N, C) slab.
        y_ref[:, h * head_dim:(h + 1) * head_dim] = pv

    # Output projection (single deep matmul over the full channel dim) + bias.
    y = y_ref[...].astype(wproj_ref.dtype)                    # bf16 for the MXU
    out = jnp.dot(y, wproj_ref[...], preferred_element_type=jnp.float32)
    o_ref[0] = (out + bproj_ref[...]).astype(o_ref.dtype)     # (N, C)


def attention_pallas(x, wqkv, wproj, bproj, *, num_heads,
                     mxu_dtype=jnp.bfloat16):
    """Fused attention forward.

    x:     (B, N, C)
    wqkv:  (3C, C)  nn.Linear(dim, 3*dim, bias=False).weight
    wproj: (C, C)   nn.Linear(dim, dim).weight
    bproj: (C,)     nn.Linear(dim, dim).bias
    """
    B, N, C = x.shape
    H = num_heads
    hd = C // H
    scale = hd ** (-0.5)

    # nn.Linear computes y = x @ W.T + b.  Rearrange the qkv weight so heads sit
    # on a leading axis:  wq_r[h, c, d] = W_qkv.T[c, h*hd + d]  (and K/V blocks).
    wqkv_t = wqkv.T                                            # (C, 3C)

    def per_head(wt):                                          # (C, C) -> (H, C, hd)
        return wt.reshape(C, H, hd).transpose(1, 0, 2)

    wq_r = per_head(wqkv_t[:, 0 * C:1 * C]).astype(mxu_dtype)
    wk_r = per_head(wqkv_t[:, 1 * C:2 * C]).astype(mxu_dtype)
    wv_r = per_head(wqkv_t[:, 2 * C:3 * C]).astype(mxu_dtype)
    wproj_t = wproj.T.astype(mxu_dtype)                        # (C, C)
    bproj_2d = bproj.reshape(1, C).astype(jnp.float32)         # bias stays f32

    x_in = x.astype(mxu_dtype)

    kernel = partial(_attention_kernel, num_heads=H, head_dim=hd, scale=scale)

    return pl.pallas_call(
        kernel,
        out_shape=jax.ShapeDtypeStruct((B, N, C), x.dtype),
        grid_spec=pltpu.PrefetchScalarGridSpec(
            num_scalar_prefetch=0,
            grid=(B,),
            in_specs=[
                pl.BlockSpec((1, N, C), lambda b: (b, 0, 0)),   # x, one batch elem
                pl.BlockSpec((H, C, hd), lambda b: (0, 0, 0)),  # Wq blocks (resident)
                pl.BlockSpec((H, C, hd), lambda b: (0, 0, 0)),  # Wk blocks (resident)
                pl.BlockSpec((H, C, hd), lambda b: (0, 0, 0)),  # Wv blocks (resident)
                pl.BlockSpec((C, C), lambda b: (0, 0)),         # Wproj^T  (resident)
                pl.BlockSpec((1, C), lambda b: (0, 0)),         # bias
            ],
            out_specs=pl.BlockSpec((1, N, C), lambda b: (b, 0, 0)),
            scratch_shapes=[pltpu.VMEM((N, C), jnp.float32)],   # merged-heads slab
        ),
        compiler_params=pltpu.CompilerParams(
            dimension_semantics=("parallel",)),
    )(x_in, wq_r, wk_r, wv_r, wproj_t, bproj_2d)


def attention_ref(x, wqkv, wproj, bproj, *, num_heads):
    """Pure-JAX reference mirroring the PyTorch forward (high precision)."""
    B, N, C = x.shape
    hd = C // num_heads
    scale = hd ** (-0.5)
    hi = lax.Precision.HIGHEST
    qkv = jnp.einsum('bnc,dc->bnd', x, wqkv, precision=hi)     # (B, N, 3C)
    qkv = qkv.reshape(B, N, 3, num_heads, hd).transpose(2, 0, 3, 1, 4)
    q, k, v = qkv[0], qkv[1], qkv[2]                           # (B, H, N, hd)
    attn = jnp.einsum('bhnd,bhmd->bhnm', q, k, precision=hi) * scale
    attn = jax.nn.softmax(attn, axis=-1)
    y = jnp.einsum('bhnm,bhmd->bhnd', attn, v, precision=hi)   # (B, H, N, hd)
    y = y.transpose(0, 2, 1, 3).reshape(B, N, C)
    return jnp.einsum('bnc,dc->bnd', y, wproj, precision=hi) + bproj


if __name__ == "__main__":
    # Small shapes consistent with the module: dim=C=32, num_heads=8 -> head_dim=4
    B, N, C = 2, 8, 32
    num_heads = 8

    key = jax.random.PRNGKey(0)
    kx, kqkv, kproj, kb = jax.random.split(key, 4)

    x = jax.random.normal(kx, (B, N, C), dtype=jnp.float32)
    wqkv = jax.random.normal(kqkv, (3 * C, C), dtype=jnp.float32) * 0.05
    wproj = jax.random.normal(kproj, (C, C), dtype=jnp.float32) * 0.05
    bproj = jax.random.normal(kb, (C,), dtype=jnp.float32) * 0.01

    ref = attention_ref(x, wqkv, wproj, bproj, num_heads=num_heads)

    # f32 MXU path: tight check (only approx-reciprocal / ordering differences).
    out_f32 = jax.block_until_ready(
        attention_pallas(x, wqkv, wproj, bproj, num_heads=num_heads,
                         mxu_dtype=jnp.float32))
    assert out_f32.shape == (B, N, C)
    assert jnp.allclose(out_f32, ref, atol=2e-3, rtol=2e-3), "f32 path mismatch"

    # bf16 MXU path (recommended on v6e/v7x): bf16-level tolerance.
    out_bf16 = jax.block_until_ready(
        attention_pallas(x, wqkv, wproj, bproj, num_heads=num_heads,
                         mxu_dtype=jnp.bfloat16))
    assert out_bf16.shape == (B, N, C)
    assert jnp.allclose(out_bf16, ref, atol=3e-2, rtol=3e-2), "bf16 path mismatch"

    print("KERNEL_OK")
</pallas_src>

<mosaic_0001>
module attributes {stable_mosaic.version = 11 : i64} {
  func.func @_attention_kernel(%arg0: i32, %arg1: memref<1x8x32xf32, #tpu.memory_space<vmem>>, %arg2: memref<8x32x4xf32, #tpu.memory_space<vmem>>, %arg3: memref<8x32x4xf32, #tpu.memory_space<vmem>>, %arg4: memref<8x32x4xf32, #tpu.memory_space<vmem>>, %arg5: memref<32x32xf32, #tpu.memory_space<vmem>>, %arg6: memref<1x32xf32, #tpu.memory_space<vmem>>, %arg7: memref<1x8x32xf32, #tpu.memory_space<vmem>>, %arg8: memref<8x32xf32, #tpu.memory_space<vmem>>) attributes {dimension_semantics = [#tpu.dimension_semantics<parallel>], iteration_bounds = array<i64: 2>, scalar_prefetch = 0 : i64, scratch_operands = 1 : i64, tpu.core_type = #tpu.core_type<tc>, window_params = [{transform_indices = @transform_0, window_bounds = array<i64: 1, 8, 32>}, {pipeline_mode = #tpu.pipeline_mode<synchronous>, transform_indices = @transform_1, window_bounds = array<i64: 8, 32, 4>}, {pipeline_mode = #tpu.pipeline_mode<synchronous>, transform_indices = @transform_2, window_bounds = array<i64: 8, 32, 4>}, {pipeline_mode = #tpu.pipeline_mode<synchronous>, transform_indices = @transform_3, window_bounds = array<i64: 8, 32, 4>}, {pipeline_mode = #tpu.pipeline_mode<synchronous>, transform_indices = @transform_4, window_bounds = array<i64: 32, 32>}, {pipeline_mode = #tpu.pipeline_mode<synchronous>, transform_indices = @transform_5, window_bounds = array<i64: 1, 32>}, {transform_indices = @transform_6, window_bounds = array<i64: 1, 8, 32>}]} {
    %c0 = arith.constant 0 : index
    %c0_0 = arith.constant 0 : index
    %c0_1 = arith.constant 0 : index
    %0 = vector.load %arg1[%c0, %c0_0, %c0_1] : memref<1x8x32xf32, #tpu.memory_space<vmem>>, vector<1x8x32xf32>
    %1 = vector.shape_cast %0 : vector<1x8x32xf32> to vector<8x32xf32>
    %c0_2 = arith.constant 0 : index
    %c0_3 = arith.constant 0 : index
    %c0_4 = arith.constant 0 : index
    %2 = vector.load %arg2[%c0_2, %c0_3, %c0_4] : memref<8x32x4xf32, #tpu.memory_space<vmem>>, vector<1x32x4xf32>
    %3 = vector.shape_cast %2 : vector<1x32x4xf32> to vector<32x4xf32>
    %c0_5 = arith.constant 0 : index
    %c0_6 = arith.constant 0 : index
    %c0_7 = arith.constant 0 : index
    %4 = vector.load %arg3[%c0_5, %c0_6, %c0_7] : memref<8x32x4xf32, #tpu.memory_space<vmem>>, vector<1x32x4xf32>
    %5 = vector.shape_cast %4 : vector<1x32x4xf32> to vector<32x4xf32>
    %c0_8 = arith.constant 0 : index
    %c0_9 = arith.constant 0 : index
    %c0_10 = arith.constant 0 : index
    %6 = vector.load %arg4[%c0_8, %c0_9, %c0_10] : memref<8x32x4xf32, #tpu.memory_space<vmem>>, vector<1x32x4xf32>
    %7 = vector.shape_cast %6 : vector<1x32x4xf32> to vector<32x4xf32>
    %cst = arith.constant dense<0.000000e+00> : vector<8x4xf32>
    %8 = tpu.matmul %1, %3, %cst {dimension_numbers = #tpu.dot_dimension_numbers<[1], [0], [0], [1], [0, 0, 1, 1], [], []>} : vector<8x32xf32>, vector<32x4xf32>, vector<8x4xf32> -> vector<8x4xf32>
    %cst_11 = arith.constant dense<0.000000e+00> : vector<8x4xf32>
    %9 = tpu.matmul %1, %5, %cst_11 {dimension_numbers = #tpu.dot_dimension_numbers<[1], [0], [0], [1], [0, 0, 1, 1], [], []>} : vector<8x32xf32>, vector<32x4xf32>, vector<8x4xf32> -> vector<8x4xf32>
    %cst_12 = arith.constant dense<0.000000e+00> : vector<8x4xf32>
    %10 = tpu.matmul %1, %7, %cst_12 {dimension_numbers = #tpu.dot_dimension_numbers<[1], [0], [0], [1], [0, 0, 1, 1], [], []>} : vector<8x32xf32>, vector<32x4xf32>, vector<8x4xf32> -> vector<8x4xf32>
    %11 = tpu.transpose %9, [1, 0] : vector<8x4xf32> -> vector<4x8xf32>
    %cst_13 = arith.constant dense<0.000000e+00> : vector<8x8xf32>
    %12 = tpu.matmul %8, %11, %cst_13 {dimension_numbers = #tpu.dot_dimension_numbers<[1], [0], [0], [1], [0, 0, 1, 1], [], []>} : vector<8x4xf32>, vector<4x8xf32>, vector<8x8xf32> -> vector<8x8xf32>
    %cst_14 = arith.constant 5.000000e-01 : f32
    %13 = vector.broadcast %cst_14 : f32 to vector<8x8xf32>
    %14 = arith.mulf %12, %13 : vector<8x8xf32>
    %cst_15 = arith.constant dense<0xFF800000> : vector<8xf32>
    %15 = vector.multi_reduction <maximumf>, %14, %cst_15 [1] : vector<8x8xf32> to vector<8xf32>
    %16 = vector.shape_cast %15 : vector<8xf32> to vector<8x1xf32>
    %17 = vector.broadcast %16 : vector<8x1xf32> to vector<8x8xf32>
    %18 = arith.subf %14, %17 : vector<8x8xf32>
    %19 = math.exp %18 : vector<8x8xf32>
    %cst_16 = arith.constant dense<0.000000e+00> : vector<8xf32>
    %20 = vector.multi_reduction <add>, %19, %cst_16 [1] : vector<8x8xf32> to vector<8xf32>
    %21 = vector.shape_cast %20 : vector<8xf32> to vector<8x1xf32>
    %22 = tpu.reciprocal %21 {approx = true} : vector<8x1xf32> -> vector<8x1xf32>
    %23 = vector.broadcast %22 : vector<8x1xf32> to vector<8x8xf32>
    %24 = arith.mulf %19, %23 : vector<8x8xf32>
    %cst_17 = arith.constant dense<0.000000e+00> : vector<8x4xf32>
    %25 = tpu.matmul %24, %10, %cst_17 {dimension_numbers = #tpu.dot_dimension_numbers<[1], [0], [0], [1], [0, 0, 1, 1], [], []>} : vector<8x8xf32>, vector<8x4xf32>, vector<8x4xf32> -> vector<8x4xf32>
    %c0_18 = arith.constant 0 : index
    %c0_19 = arith.constant 0 : index
    %26 = vector.load %arg8[%c0_18, %c0_19] : memref<8x32xf32, #tpu.memory_space<vmem>>, vector<8x4xf32>
    tpu.vector_store %arg8[%c0_18, %c0_19], %25 {strides = array<i32>} : memref<8x32xf32, #tpu.memory_space<vmem>>, vector<8x4xf32>,
    %c1 = arith.constant 1 : index
    %c0_20 = arith.constant 0 : index
    %c0_21 = arith.constant 0 : index
    %27 = vector.load %arg2[%c1, %c0_20, %c0_21] : memref<8x32x4xf32, #tpu.memory_space<vmem>>, vector<1x32x4xf32>
    %28 = vector.shape_cast %27 : vector<1x32x4xf32> to vector<32x4xf32>
    %c1_22 = arith.constant 1 : index
    %c0_23 = arith.constant 0 : index
    %c0_24 = arith.constant 0 : index
    %29 = vector.load %arg3[%c1_22, %c0_23, %c0_24] : memref<8x32x4xf32, #tpu.memory_space<vmem>>, vector<1x32x4xf32>
    %30 = vector.shape_cast %29 : vector<1x32x4xf32> to vector<32x4xf32>
    %c1_25 = arith.constant 1 : index
    %c0_26 = arith.constant 0 : index
    %c0_27 = arith.constant 0 : index
    %31 = vector.load %arg4[%c1_25, %c0_26, %c0_27] : memref<8x32x4xf32, #tpu.memory_space<vmem>>, vector<1x32x4xf32>
    %32 = vector.shape_cast %31 : vector<1x32x4xf32> to vector<32x4xf32>
    %cst_28 = arith.constant dense<0.000000e+00> : vector<8x4xf32>
    %33 = tpu.matmul %1, %28, %cst_28 {dimension_numbers = #tpu.dot_dimension_numbers<[1], [0], [0], [1], [0, 0, 1, 1], [], []>} : vector<8x32xf32>, vector<32x4xf32>, vector<8x4xf32> -> vector<8x4xf32>
    %cst_29 = arith.constant dense<0.000000e+00> : vector<8x4xf32>
    %34 = tpu.matmul %1, %30, %cst_29 {dimension_numbers = #tpu.dot_dimension_numbers<[1], [0], [0], [1], [0, 0, 1, 1], [], []>} : vector<8x32xf32>, vector<32x4xf32>, vector<8x4xf32> -> vector<8x4xf32>
    %cst_30 = arith.constant dense<0.000000e+00> : vector<8x4xf32>
    %35 = tpu.matmul %1, %32, %cst_30 {dimension_numbers = #tpu.dot_dimension_numbers<[1], [0], [0], [1], [0, 0, 1, 1], [], []>} : vector<8x32xf32>, vector<32x4xf32>, vector<8x4xf32> -> vector<8x4xf32>
    %36 = tpu.transpose %34, [1, 0] : vector<8x4xf32> -> vector<4x8xf32>
    %cst_31 = arith.constant dense<0.000000e+00> : vector<8x8xf32>
    %37 = tpu.matmul %33, %36, %cst_31 {dimension_numbers = #tpu.dot_dimension_numbers<[1], [0], [0], [1], [0, 0, 1, 1], [], []>} : vector<8x4xf32>, vector<4x8xf32>, vector<8x8xf32> -> vector<8x8xf32>
    %cst_32 = arith.constant 5.000000e-01 : f32
    %38 = vector.broadcast %cst_32 : f32 to vector<8x8xf32>
    %39 = arith.mulf %37, %38 : vector<8x8xf32>
    %cst_33 = arith.constant dense<0xFF800000> : vector<8xf32>
    %40 = vector.multi_reduction <maximumf>, %39, %cst_33 [1] : vector<8x8xf32> to vector<8xf32>
    %41 = vector.shape_cast %40 : vector<8xf32> to vector<8x1xf32>
    %42 = vector.broadcast %41 : vector<8x1xf32> to vector<8x8xf32>
    %43 = arith.subf %39, %42 : vector<8x8xf32>
    %44 = math.exp %43 : vector<8x8xf32>
    %cst_34 = arith.constant dense<0.000000e+00> : vector<8xf32>
    %45 = vector.multi_reduction <add>, %44, %cst_34 [1] : vector<8x8xf32> to vector<8xf32>
    %46 = vector.shape_cast %45 : vector<8xf32> to vector<8x1xf32>
    %47 = tpu.reciprocal %46 {approx = true} : vector<8x1xf32> -> vector<8x1xf32>
    %48 = vector.broadcast %47 : vector<8x1xf32> to vector<8x8xf32>
    %49 = arith.mulf %44, %48 : vector<8x8xf32>
    %cst_35 = arith.constant dense<0.000000e+00> : vector<8x4xf32>
    %50 = tpu.matmul %49, %35, %cst_35 {dimension_numbers = #tpu.dot_dimension_numbers<[1], [0], [0], [1], [0, 0, 1, 1], [], []>} : vector<8x8xf32>, vector<8x4xf32>, vector<8x4xf32> -> vector<8x4xf32>
    %c0_36 = arith.constant 0 : index
    %c4 = arith.constant 4 : index
    %51 = vector.load %arg8[%c0_36, %c4] : memref<8x32xf32, #tpu.memory_space<vmem>>, vector<8x4xf32>
    tpu.vector_store %arg8[%c0_36, %c4], %50 {strides = array<i32>} : memref<8x32xf32, #tpu.memory_space<vmem>>, vector<8x4xf32>,
    %c2 = arith.constant 2 : index
    %c0_37 = arith.constant 0 : index
    %c0_38 = arith.constant 0 : index
    %52 = vector.load %arg2[%c2, %c0_37, %c0_38] : memref<8x32x4xf32, #tpu.memory_space<vmem>>, vector<1x32x4xf32>
    %53 = vector.shape_cast %52 : vector<1x32x4xf32> to vector<32x4xf32>
    %c2_39 = arith.constant 2 : index
    %c0_40 = arith.constant 0 : index
    %c0_41 = arith.constant 0 : index
    %54 = vector.load %arg3[%c2_39, %c0_40, %c0_41] : memref<8x32x4xf32, #tpu.memory_space<vmem>>, vector<1x32x4xf32>
    %55 = vector.shape_cast %54 : vector<1x32x4xf32> to vector<32x4xf32>
    %c2_42 = arith.constant 2 : index
    %c0_43 = arith.constant 0 : index
    %c0_44 = arith.constant 0 : index
    %56 = vector.load %arg4[%c2_42, %c0_43, %c0_44] : memref<8x32x4xf32, #tpu.memory_space<vmem>>, vector<1x32x4xf32>
    %57 = vector.shape_cast %56 : vector<1x32x4xf32> to vector<32x4xf32>
    %cst_45 = arith.constant dense<0.000000e+00> : vector<8x4xf32>
    %58 = tpu.matmul %1, %53, %cst_45 {dimension_numbers = #tpu.dot_dimension_numbers<[1], [0], [0], [1], [0, 0, 1, 1], [], []>} : vector<8x32xf32>, vector<32x4xf32>, vector<8x4xf32> -> vector<8x4xf32>
    %cst_46 = arith.constant dense<0.000000e+00> : vector<8x4xf32>
    %59 = tpu.matmul %1, %55, %cst_46 {dimension_numbers = #tpu.dot_dimension_numbers<[1], [0], [0], [1], [0, 0, 1, 1], [], []>} : vector<8x32xf32>, vector<32x4xf32>, vector<8x4xf32> -> vector<8x4xf32>
    %cst_47 = arith.constant dense<0.000000e+00> : vector<8x4xf32>
    %60 = tpu.matmul %1, %57, %cst_47 {dimension_numbers = #tpu.dot_dimension_numbers<[1], [0], [0], [1], [0, 0, 1, 1], [], []>} : vector<8x32xf32>, vector<32x4xf32>, vector<8x4xf32> -> vector<8x4xf32>
    %61 = tpu.transpose %59, [1, 0] : vector<8x4xf32> -> vector<4x8xf32>
    %cst_48 = arith.constant dense<0.000000e+00> : vector<8x8xf32>
    %62 = tpu.matmul %58, %61, %cst_48 {dimension_numbers = #tpu.dot_dimension_numbers<[1], [0], [0], [1], [0, 0, 1, 1], [], []>} : vector<8x4xf32>, vector<4x8xf32>, vector<8x8xf32> -> vector<8x8xf32>
    %cst_49 = arith.constant 5.000000e-01 : f32
    %63 = vector.broadcast %cst_49 : f32 to vector<8x8xf32>
    %64 = arith.mulf %62, %63 : vector<8x8xf32>
    %cst_50 = arith.constant dense<0xFF800000> : vector<8xf32>
    %65 = vector.multi_reduction <maximumf>, %64, %cst_50 [1] : vector<8x8xf32> to vector<8xf32>
    %66 = vector.shape_cast %65 : vector<8xf32> to vector<8x1xf32>
    %67 = vector.broadcast %66 : vector<8x1xf32> to vector<8x8xf32>
    %68 = arith.subf %64, %67 : vector<8x8xf32>
    %69 = math.exp %68 : vector<8x8xf32>
    %cst_51 = arith.constant dense<0.000000e+00> : vector<8xf32>
    %70 = vector.multi_reduction <add>, %69, %cst_51 [1] : vector<8x8xf32> to vector<8xf32>
    %71 = vector.shape_cast %70 : vector<8xf32> to vector<8x1xf32>
    %72 = tpu.reciprocal %71 {approx = true} : vector<8x1xf32> -> vector<8x1xf32>
    %73 = vector.broadcast %72 : vector<8x1xf32> to vector<8x8xf32>
    %74 = arith.mulf %69, %73 : vector<8x8xf32>
    %cst_52 = arith.constant dense<0.000000e+00> : vector<8x4xf32>
    %75 = tpu.matmul %74, %60, %cst_52 {dimension_numbers = #tpu.dot_dimension_numbers<[1], [0], [0], [1], [0, 0, 1, 1], [], []>} : vector<8x8xf32>, vector<8x4xf32>, vector<8x4xf32> -> vector<8x4xf32>
    %c0_53 = arith.constant 0 : index
    %c8 = arith.constant 8 : index
    %76 = vector.load %arg8[%c0_53, %c8] : memref<8x32xf32, #tpu.memory_space<vmem>>, vector<8x4xf32>
    tpu.vector_store %arg8[%c0_53, %c8], %75 {strides = array<i32>} : memref<8x32xf32, #tpu.memory_space<vmem>>, vector<8x4xf32>,
    %c3 = arith.constant 3 : index
    %c0_54 = arith.constant 0 : index
    %c0_55 = arith.constant 0 : index
    %77 = vector.load %arg2[%c3, %c0_54, %c0_55] : memref<8x32x4xf32, #tpu.memory_space<vmem>>, vector<1x32x4xf32>
    %78 = vector.shape_cast %77 : vector<1x32x4xf32> to vector<32x4xf32>
    %c3_56 = arith.constant 3 : index
    %c0_57 = arith.constant 0 : index
    %c0_58 = arith.constant 0 : index
    %79 = vector.load %arg3[%c3_56, %c0_57, %c0_58] : memref<8x32x4xf32, #tpu.memory_space<vmem>>, vector<1x32x4xf32>
    %80 = vector.shape_cast %79 : vector<1x32x4xf32> to vector<32x4xf32>
    %c3_59 = arith.constant 3 : index
    %c0_60 = arith.constant 0 : index
    %c0_61 = arith.constant 0 : index
    %81 = vector.load %arg4[%c3_59, %c0_60, %c0_61] : memref<8x32x4xf32, #tpu.memory_space<vmem>>, vector<1x32x4xf32>
    %82 = vector.shape_cast %81 : vector<1x32x4xf32> to vector<32x4xf32>
    %cst_62 = arith.constant dense<0.000000e+00> : vector<8x4xf32>
    %83 = tpu.matmul %1, %78, %cst_62 {dimension_numbers = #tpu.dot_dimension_numbers<[1], [0], [0], [1], [0, 0, 1, 1], [], []>} : vector<8x32xf32>, vector<32x4xf32>, vector<8x4xf32> -> vector<8x4xf32>
    %cst_63 = arith.constant dense<0.000000e+00> : vector<8x4xf32>
    %84 = tpu.matmul %1, %80, %cst_63 {dimension_numbers = #tpu.dot_dimension_numbers<[1], [0], [0], [1], [0, 0, 1, 1], [], []>} : vector<8x32xf32>, vector<32x4xf32>, vector<8x4xf32> -> vector<8x4xf32>
    %cst_64 = arith.constant dense<0.000000e+00> : vector<8x4xf32>
    %85 = tpu.matmul %1, %82, %cst_64 {dimension_numbers = #tpu.dot_dimension_numbers<[1], [0], [0], [1], [0, 0, 1, 1], [], []>} : vector<8x32xf32>, vector<32x4xf32>, vector<8x4xf32> -> vector<8x4xf32>
    %86 = tpu.transpose %84, [1, 0] : vector<8x4xf32> -> vector<4x8xf32>
    %cst_65 = arith.constant dense<0.000000e+00> : vector<8x8xf32>
    %87 = tpu.matmul %83, %86, %cst_65 {dimension_numbers = #tpu.dot_dimension_numbers<[1], [0], [0], [1], [0, 0, 1, 1], [], []>} : vector<8x4xf32>, vector<4x8xf32>, vector<8x8xf32> -> vector<8x8xf32>
    %cst_66 = arith.constant 5.000000e-01 : f32
    %88 = vector.broadcast %cst_66 : f32 to vector<8x8xf32>
    %89 = arith.mulf %87, %88 : vector<8x8xf32>
    %cst_67 = arith.constant dense<0xFF800000> : vector<8xf32>
    %90 = vector.multi_reduction <maximumf>, %89, %cst_67 [1] : vector<8x8xf32> to vector<8xf32>
    %91 = vector.shape_cast %90 : vector<8xf32> to vector<8x1xf32>
    %92 = vector.broadcast %91 : vector<8x1xf32> to vector<8x8xf32>
    %93 = arith.subf %89, %92 : vector<8x8xf32>
    %94 = math.exp %93 : vector<8x8xf32>
    %cst_68 = arith.constant dense<0.000000e+00> : vector<8xf32>
    %95 = vector.multi_reduction <add>, %94, %cst_68 [1] : vector<8x8xf32> to vector<8xf32>
    %96 = vector.shape_cast %95 : vector<8xf32> to vector<8x1xf32>
    %97 = tpu.reciprocal %96 {approx = true} : vector<8x1xf32> -> vector<8x1xf32>
    %98 = vector.broadcast %97 : vector<8x1xf32> to vector<8x8xf32>
    %99 = arith.mulf %94, %98 : vector<8x8xf32>
    %cst_69 = arith.constant dense<0.000000e+00> : vector<8x4xf32>
    %100 = tpu.matmul %99, %85, %cst_69 {dimension_numbers = #tpu.dot_dimension_numbers<[1], [0], [0], [1], [0, 0, 1, 1], [], []>} : vector<8x8xf32>, vector<8x4xf32>, vector<8x4xf32> -> vector<8x4xf32>
    %c0_70 = arith.constant 0 : index
    %c12 = arith.constant 12 : index
    %101 = vector.load %arg8[%c0_70, %c12] : memref<8x32xf32, #tpu.memory_space<vmem>>, vector<8x4xf32>
    tpu.vector_store %arg8[%c0_70, %c12], %100 {strides = array<i32>} : memref<8x32xf32, #tpu.memory_space<vmem>>, vector<8x4xf32>,
    %c4_71 = arith.constant 4 : index
    %c0_72 = arith.constant 0 : index
    %c0_73 = arith.constant 0 : index
    %102 = vector.load %arg2[%c4_71, %c0_72, %c0_73] : memref<8x32x4xf32, #tpu.memory_space<vmem>>, vector<1x32x4xf32>
    %103 = vector.shape_cast %102 : vector<1x32x4xf32> to vector<32x4xf32>
    %c4_74 = arith.constant 4 : index
    %c0_75 = arith.constant 0 : index
    %c0_76 = arith.constant 0 : index
    %104 = vector.load %arg3[%c4_74, %c0_75, %c0_76] : memref<8x32x4xf32, #tpu.memory_space<vmem>>, vector<1x32x4xf32>
    %105 = vector.shape_cast %104 : vector<1x32x4xf32> to vector<32x4xf32>
    %c4_77 = arith.constant 4 : index
    %c0_78 = arith.constant 0 : index
    %c0_79 = arith.constant 0 : index
    %106 = vector.load %arg4[%c4_77, %c0_78, %c0_79] : memref<8x32x4xf32, #tpu.memory_space<vmem>>, vector<1x32x4xf32>
    %107 = vector.shape_cast %106 : vector<1x32x4xf32> to vector<32x4xf32>
    %cst_80 = arith.constant dense<0.000000e+00> : vector<8x4xf32>
    %108 = tpu.matmul %1, %103, %cst_80 {dimension_numbers = #tpu.dot_dimension_numbers<[1], [0], [0], [1], [0, 0, 1, 1], [], []>} : vector<8x32xf32>, vector<32x4xf32>, vector<8x4xf32> -> vector<8x4xf32>
    %cst_81 = arith.constant dense<0.000000e+00> : vector<8x4xf32>
    %109 = tpu.matmul %1, %105, %cst_81 {dimension_numbers = #tpu.dot_dimension_numbers<[1], [0], [0], [1], [0, 0, 1, 1], [], []>} : vector<8x32xf32>, vector<32x4xf32>, vector<8x4xf32> -> vector<8x4xf32>
    %cst_82 = arith.constant dense<0.000000e+00> : vector<8x4xf32>
    %110 = tpu.matmul %1, %107, %cst_82 {dimension_numbers = #tpu.dot_dimension_numbers<[1], [0], [0], [1], [0, 0, 1, 1], [], []>} : vector<8x32xf32>, vector<32x4xf32>, vector<8x4xf32> -> vector<8x4xf32>
    %111 = tpu.transpose %109, [1, 0] : vector<8x4xf32> -> vector<4x8xf32>
    %cst_83 = arith.constant dense<0.000000e+00> : vector<8x8xf32>
    %112 = tpu.matmul %108, %111, %cst_83 {dimension_numbers = #tpu.dot_dimension_numbers<[1], [0], [0], [1], [0, 0, 1, 1], [], []>} : vector<8x4xf32>, vector<4x8xf32>, vector<8x8xf32> -> vector<8x8xf32>
    %cst_84 = arith.constant 5.000000e-01 : f32
    %113 = vector.broadcast %cst_84 : f32 to vector<8x8xf32>
    %114 = arith.mulf %112, %113 : vector<8x8xf32>
    %cst_85 = arith.constant dense<0xFF800000> : vector<8xf32>
    %115 = vector.multi_reduction <maximumf>, %114, %cst_85 [1] : vector<8x8xf32> to vector<8xf32>
    %116 = vector.shape_cast %115 : vector<8xf32> to vector<8x1xf32>
    %117 = vector.broadcast %116 : vector<8x1xf32> to vector<8x8xf32>
    %118 = arith.subf %114, %117 : vector<8x8xf32>
    %119 = math.exp %118 : vector<8x8xf32>
    %cst_86 = arith.constant dense<0.000000e+00> : vector<8xf32>
    %120 = vector.multi_reduction <add>, %119, %cst_86 [1] : vector<8x8xf32> to vector<8xf32>
    %121 = vector.shape_cast %120 : vector<8xf32> to vector<8x1xf32>
    %122 = tpu.reciprocal %121 {approx = true} : vector<8x1xf32> -> vector<8x1xf32>
    %123 = vector.broadcast %122 : vector<8x1xf32> to vector<8x8xf32>
    %124 = arith.mulf %119, %123 : vector<8x8xf32>
    %cst_87 = arith.constant dense<0.000000e+00> : vector<8x4xf32>
    %125 = tpu.matmul %124, %110, %cst_87 {dimension_numbers = #tpu.dot_dimension_numbers<[1], [0], [0], [1], [0, 0, 1, 1], [], []>} : vector<8x8xf32>, vector<8x4xf32>, vector<8x4xf32> -> vector<8x4xf32>
    %c0_88 = arith.constant 0 : index
    %c16 = arith.constant 16 : index
    %126 = vector.load %arg8[%c0_88, %c16] : memref<8x32xf32, #tpu.memory_space<vmem>>, vector<8x4xf32>
    tpu.vector_store %arg8[%c0_88, %c16], %125 {strides = array<i32>} : memref<8x32xf32, #tpu.memory_space<vmem>>, vector<8x4xf32>,
    %c5 = arith.constant 5 : index
    %c0_89 = arith.constant 0 : index
    %c0_90 = arith.constant 0 : index
    %127 = vector.load %arg2[%c5, %c0_89, %c0_90] : memref<8x32x4xf32, #tpu.memory_space<vmem>>, vector<1x32x4xf32>
    %128 = vector.shape_cast %127 : vector<1x32x4xf32> to vector<32x4xf32>
    %c5_91 = arith.constant 5 : index
    %c0_92 = arith.constant 0 : index
    %c0_93 = arith.constant 0 : index
    %129 = vector.load %arg3[%c5_91, %c0_92, %c0_93] : memref<8x32x4xf32, #tpu.memory_space<vmem>>, vector<1x32x4xf32>
    %130 = vector.shape_cast %129 : vector<1x32x4xf32> to vector<32x4xf32>
    %c5_94 = arith.constant 5 : index
    %c0_95 = arith.constant 0 : index
    %c0_96 = arith.constant 0 : index
    %131 = vector.load %arg4[%c5_94, %c0_95, %c0_96] : memref<8x32x4xf32, #tpu.memory_space<vmem>>, vector<1x32x4xf32>
    %132 = vector.shape_cast %131 : vector<1x32x4xf32> to vector<32x4xf32>
    %cst_97 = arith.constant dense<0.000000e+00> : vector<8x4xf32>
    %133 = tpu.matmul %1, %128, %cst_97 {dimension_numbers = #tpu.dot_dimension_numbers<[1], [0], [0], [1], [0, 0, 1, 1], [], []>} : vector<8x32xf32>, vector<32x4xf32>, vector<8x4xf32> -> vector<8x4xf32>
    %cst_98 = arith.constant dense<0.000000e+00> : vector<8x4xf32>
    %134 = tpu.matmul %1, %130, %cst_98 {dimension_numbers = #tpu.dot_dimension_numbers<[1], [0], [0], [1], [0, 0, 1, 1], [], []>} : vector<8x32xf32>, vector<32x4xf32>, vector<8x4xf32> -> vector<8x4xf32>
    %cst_99 = arith.constant dense<0.000000e+00> : vector<8x4xf32>
    %135 = tpu.matmul %1, %132, %cst_99 {dimension_numbers = #tpu.dot_dimension_numbers<[1], [0], [0], [1], [0, 0, 1, 1], [], []>} : vector<8x32xf32>, vector<32x4xf32>, vector<8x4xf32> -> vector<8x4xf32>
    %136 = tpu.transpose %134, [1, 0] : vector<8x4xf32> -> vector<4x8xf32>
    %cst_100 = arith.constant dense<0.000000e+00> : vector<8x8xf32>
    %137 = tpu.matmul %133, %136, %cst_100 {dimension_numbers = #tpu.dot_dimension_numbers<[1], [0], [0], [1], [0, 0, 1, 1], [], []>} : vector<8x4xf32>, vector<4x8xf32>, vector<8x8xf32> -> vector<8x8xf32>
    %cst_101 = arith.constant 5.000000e-01 : f32
    %138 = vector.broadcast %cst_101 : f32 to vector<8x8xf32>
    %139 = arith.mulf %137, %138 : vector<8x8xf32>
    %cst_102 = arith.constant dense<0xFF800000> : vector<8xf32>
    %140 = vector.multi_reduction <maximumf>, %139, %cst_102 [1] : vector<8x8xf32> to vector<8xf32>
    %141 = vector.shape_cast %140 : vector<8xf32> to vector<8x1xf32>
    %142 = vector.broadcast %141 : vector<8x1xf32> to vector<8x8xf32>
    %143 = arith.subf %139, %142 : vector<8x8xf32>
    %144 = math.exp %143 : vector<8x8xf32>
    %cst_103 = arith.constant dense<0.000000e+00> : vector<8xf32>
    %145 = vector.multi_reduction <add>, %144, %cst_103 [1] : vector<8x8xf32> to vector<8xf32>
    %146 = vector.shape_cast %145 : vector<8xf32> to vector<8x1xf32>
    %147 = tpu.reciprocal %146 {approx = true} : vector<8x1xf32> -> vector<8x1xf32>
    %148 = vector.broadcast %147 : vector<8x1xf32> to vector<8x8xf32>
    %149 = arith.mulf %144, %148 : vector<8x8xf32>
    %cst_104 = arith.constant dense<0.000000e+00> : vector<8x4xf32>
    %150 = tpu.matmul %149, %135, %cst_104 {dimension_numbers = #tpu.dot_dimension_numbers<[1], [0], [0], [1], [0, 0, 1, 1], [], []>} : vector<8x8xf32>, vector<8x4xf32>, vector<8x4xf32> -> vector<8x4xf32>
    %c0_105 = arith.constant 0 : index
    %c20 = arith.constant 20 : index
    %151 = vector.load %arg8[%c0_105, %c20] : memref<8x32xf32, #tpu.memory_space<vmem>>, vector<8x4xf32>
    tpu.vector_store %arg8[%c0_105, %c20], %150 {strides = array<i32>} : memref<8x32xf32, #tpu.memory_space<vmem>>, vector<8x4xf32>,
    %c6 = arith.constant 6 : index
    %c0_106 = arith.constant 0 : index
    %c0_107 = arith.constant 0 : index
    %152 = vector.load %arg2[%c6, %c0_106, %c0_107] : memref<8x32x4xf32, #tpu.memory_space<vmem>>, vector<1x32x4xf32>
    %153 = vector.shape_cast %152 : vector<1x32x4xf32> to vector<32x4xf32>
    %c6_108 = arith.constant 6 : index
    %c0_109 = arith.constant 0 : index
    %c0_110 = arith.constant 0 : index
    %154 = vector.load %arg3[%c6_108, %c0_109, %c0_110] : memref<8x32x4xf32, #tpu.memory_space<vmem>>, vector<1x32x4xf32>
    %155 = vector.shape_cast %154 : vector<1x32x4xf32> to vector<32x4xf32>
    %c6_111 = arith.constant 6 : index
    %c0_112 = arith.constant 0 : index
    %c0_113 = arith.constant 0 : index
    %156 = vector.load %arg4[%c6_111, %c0_112, %c0_113] : memref<8x32x4xf32, #tpu.memory_space<vmem>>, vector<1x32x4xf32>
    %157 = vector.shape_cast %156 : vector<1x32x4xf32> to vector<32x4xf32>
    %cst_114 = arith.constant dense<0.000000e+00> : vector<8x4xf32>
    %158 = tpu.matmul %1, %153, %cst_114 {dimension_numbers = #tpu.dot_dimension_numbers<[1], [0], [0], [1], [0, 0, 1, 1], [], []>} : vector<8x32xf32>, vector<32x4xf32>, vector<8x4xf32> -> vector<8x4xf32>
    %cst_115 = arith.constant dense<0.000000e+00> : vector<8x4xf32>
    %159 = tpu.matmul %1, %155, %cst_115 {dimension_numbers = #tpu.dot_dimension_numbers<[1], [0], [0], [1], [0, 0, 1, 1], [], []>} : vector<8x32xf32>, vector<32x4xf32>, vector<8x4xf32> -> vector<8x4xf32>
    %cst_116 = arith.constant dense<0.000000e+00> : vector<8x4xf32>
    %160 = tpu.matmul %1, %157, %cst_116 {dimension_numbers = #tpu.dot_dimension_numbers<[1], [0], [0], [1], [0, 0, 1, 1], [], []>} : vector<8x32xf32>, vector<32x4xf32>, vector<8x4xf32> -> vector<8x4xf32>
    %161 = tpu.transpose %159, [1, 0] : vector<8x4xf32> -> vector<4x8xf32>
    %cst_117 = arith.constant dense<0.000000e+00> : vector<8x8xf32>
    %162 = tpu.matmul %158, %161, %cst_117 {dimension_numbers = #tpu.dot_dimension_numbers<[1], [0], [0], [1], [0, 0, 1, 1], [], []>} : vector<8x4xf32>, vector<4x8xf32>, vector<8x8xf32> -> vector<8x8xf32>
    %cst_118 = arith.constant 5.000000e-01 : f32
    %163 = vector.broadcast %cst_118 : f32 to vector<8x8xf32>
    %164 = arith.mulf %162, %163 : vector<8x8xf32>
    %cst_119 = arith.constant dense<0xFF800000> : vector<8xf32>
    %165 = vector.multi_reduction <maximumf>, %164, %cst_119 [1] : vector<8x8xf32> to vector<8xf32>
    %166 = vector.shape_cast %165 : vector<8xf32> to vector<8x1xf32>
    %167 = vector.broadcast %166 : vector<8x1xf32> to vector<8x8xf32>
    %168 = arith.subf %164, %167 : vector<8x8xf32>
    %169 = math.exp %168 : vector<8x8xf32>
    %cst_120 = arith.constant dense<0.000000e+00> : vector<8xf32>
    %170 = vector.multi_reduction <add>, %169, %cst_120 [1] : vector<8x8xf32> to vector<8xf32>
    %171 = vector.shape_cast %170 : vector<8xf32> to vector<8x1xf32>
    %172 = tpu.reciprocal %171 {approx = true} : vector<8x1xf32> -> vector<8x1xf32>
    %173 = vector.broadcast %172 : vector<8x1xf32> to vector<8x8xf32>
    %174 = arith.mulf %169, %173 : vector<8x8xf32>
    %cst_121 = arith.constant dense<0.000000e+00> : vector<8x4xf32>
    %175 = tpu.matmul %174, %160, %cst_121 {dimension_numbers = #tpu.dot_dimension_numbers<[1], [0], [0], [1], [0, 0, 1, 1], [], []>} : vector<8x8xf32>, vector<8x4xf32>, vector<8x4xf32> -> vector<8x4xf32>
    %c0_122 = arith.constant 0 : index
    %c24 = arith.constant 24 : index
    %176 = vector.load %arg8[%c0_122, %c24] : memref<8x32xf32, #tpu.memory_space<vmem>>, vector<8x4xf32>
    tpu.vector_store %arg8[%c0_122, %c24], %175 {strides = array<i32>} : memref<8x32xf32, #tpu.memory_space<vmem>>, vector<8x4xf32>,
    %c7 = arith.constant 7 : index
    %c0_123 = arith.constant 0 : index
    %c0_124 = arith.constant 0 : index
    %177 = vector.load %arg2[%c7, %c0_123, %c0_124] : memref<8x32x4xf32, #tpu.memory_space<vmem>>, vector<1x32x4xf32>
    %178 = vector.shape_cast %177 : vector<1x32x4xf32> to vector<32x4xf32>
    %c7_125 = arith.constant 7 : index
    %c0_126 = arith.constant 0 : index
    %c0_127 = arith.constant 0 : index
    %179 = vector.load %arg3[%c7_125, %c0_126, %c0_127] : memref<8x32x4xf32, #tpu.memory_space<vmem>>, vector<1x32x4xf32>
    %180 = vector.shape_cast %179 : vector<1x32x4xf32> to vector<32x4xf32>
    %c7_128 = arith.constant 7 : index
    %c0_129 = arith.constant 0 : index
    %c0_130 = arith.constant 0 : index
    %181 = vector.load %arg4[%c7_128, %c0_129, %c0_130] : memref<8x32x4xf32, #tpu.memory_space<vmem>>, vector<1x32x4xf32>
    %182 = vector.shape_cast %181 : vector<1x32x4xf32> to vector<32x4xf32>
    %cst_131 = arith.constant dense<0.000000e+00> : vector<8x4xf32>
    %183 = tpu.matmul %1, %178, %cst_131 {dimension_numbers = #tpu.dot_dimension_numbers<[1], [0], [0], [1], [0, 0, 1, 1], [], []>} : vector<8x32xf32>, vector<32x4xf32>, vector<8x4xf32> -> vector<8x4xf32>
    %cst_132 = arith.constant dense<0.000000e+00> : vector<8x4xf32>
    %184 = tpu.matmul %1, %180, %cst_132 {dimension_numbers = #tpu.dot_dimension_numbers<[1], [0], [0], [1], [0, 0, 1, 1], [], []>} : vector<8x32xf32>, vector<32x4xf32>, vector<8x4xf32> -> vector<8x4xf32>
    %cst_133 = arith.constant dense<0.000000e+00> : vector<8x4xf32>
    %185 = tpu.matmul %1, %182, %cst_133 {dimension_numbers = #tpu.dot_dimension_numbers<[1], [0], [0], [1], [0, 0, 1, 1], [], []>} : vector<8x32xf32>, vector<32x4xf32>, vector<8x4xf32> -> vector<8x4xf32>
    %186 = tpu.transpose %184, [1, 0] : vector<8x4xf32> -> vector<4x8xf32>
    %cst_134 = arith.constant dense<0.000000e+00> : vector<8x8xf32>
    %187 = tpu.matmul %183, %186, %cst_134 {dimension_numbers = #tpu.dot_dimension_numbers<[1], [0], [0], [1], [0, 0, 1, 1], [], []>} : vector<8x4xf32>, vector<4x8xf32>, vector<8x8xf32> -> vector<8x8xf32>
    %cst_135 = arith.constant 5.000000e-01 : f32
    %188 = vector.broadcast %cst_135 : f32 to vector<8x8xf32>
    %189 = arith.mulf %187, %188 : vector<8x8xf32>
    %cst_136 = arith.constant dense<0xFF800000> : vector<8xf32>
    %190 = vector.multi_reduction <maximumf>, %189, %cst_136 [1] : vector<8x8xf32> to vector<8xf32>
    %191 = vector.shape_cast %190 : vector<8xf32> to vector<8x1xf32>
    %192 = vector.broadcast %191 : vector<8x1xf32> to vector<8x8xf32>
    %193 = arith.subf %189, %192 : vector<8x8xf32>
    %194 = math.exp %193 : vector<8x8xf32>
    %cst_137 = arith.constant dense<0.000000e+00> : vector<8xf32>
    %195 = vector.multi_reduction <add>, %194, %cst_137 [1] : vector<8x8xf32> to vector<8xf32>
    %196 = vector.shape_cast %195 : vector<8xf32> to vector<8x1xf32>
    %197 = tpu.reciprocal %196 {approx = true} : vector<8x1xf32> -> vector<8x1xf32>
    %198 = vector.broadcast %197 : vector<8x1xf32> to vector<8x8xf32>
    %199 = arith.mulf %194, %198 : vector<8x8xf32>
    %cst_138 = arith.constant dense<0.000000e+00> : vector<8x4xf32>
    %200 = tpu.matmul %199, %185, %cst_138 {dimension_numbers = #tpu.dot_dimension_numbers<[1], [0], [0], [1], [0, 0, 1, 1], [], []>} : vector<8x8xf32>, vector<8x4xf32>, vector<8x4xf32> -> vector<8x4xf32>
    %c0_139 = arith.constant 0 : index
    %c28 = arith.constant 28 : index
    %201 = vector.load %arg8[%c0_139, %c28] : memref<8x32xf32, #tpu.memory_space<vmem>>, vector<8x4xf32>
    tpu.vector_store %arg8[%c0_139, %c28], %200 {strides = array<i32>} : memref<8x32xf32, #tpu.memory_space<vmem>>, vector<8x4xf32>,
    %c0_140 = arith.constant 0 : index
    %c0_141 = arith.constant 0 : index
    %202 = vector.load %arg8[%c0_140, %c0_141] : memref<8x32xf32, #tpu.memory_space<vmem>>, vector<8x32xf32>
    %c0_142 = arith.constant 0 : index
    %c0_143 = arith.constant 0 : index
    %203 = vector.load %arg5[%c0_142, %c0_143] : memref<32x32xf32, #tpu.memory_space<vmem>>, vector<32x32xf32>
    %cst_144 = arith.constant dense<0.000000e+00> : vector<8x32xf32>
    %204 = tpu.matmul %202, %203, %cst_144 {dimension_numbers = #tpu.dot_dimension_numbers<[1], [0], [0], [1], [0, 0, 1, 1], [], []>} : vector<8x32xf32>, vector<32x32xf32>, vector<8x32xf32> -> vector<8x32xf32>
    %c0_145 = arith.constant 0 : index
    %c0_146 = arith.constant 0 : index
    %205 = vector.load %arg6[%c0_145, %c0_146] : memref<1x32xf32, #tpu.memory_space<vmem>>, vector<1x32xf32>
    %206 = vector.broadcast %205 : vector<1x32xf32> to vector<8x32xf32>
    %207 = arith.addf %204, %206 : vector<8x32xf32>
    %c0_147 = arith.constant 0 : index
    %c0_148 = arith.constant 0 : index
    %c0_149 = arith.constant 0 : index
    %208 = vector.load %arg7[%c0_147, %c0_148, %c0_149] : memref<1x8x32xf32, #tpu.memory_space<vmem>>, vector<1x8x32xf32>
    %209 = vector.shape_cast %208 : vector<1x8x32xf32> to vector<8x32xf32>
    %210 = vector.shape_cast %207 : vector<8x32xf32> to vector<1x8x32xf32>
    tpu.vector_store %arg7[%c0_147, %c0_148, %c0_149], %210 {strides = array<i32>} : memref<1x8x32xf32, #tpu.memory_space<vmem>>, vector<1x8x32xf32>,
    return
  }
  func.func @transform_0(%arg0: i32) -> (i32, i32, i32) {
    %c0_i32 = arith.constant 0 : i32
    %c0_i32_0 = arith.constant 0 : i32
    %c0_i32_1 = arith.constant 0 : i32
    return %arg0, %c0_i32, %c0_i32_0 : i32, i32, i32
  }
  func.func @transform_1(%arg0: i32) -> (i32, i32, i32) {
    %c0_i32 = arith.constant 0 : i32
    %c0_i32_0 = arith.constant 0 : i32
    %c0_i32_1 = arith.constant 0 : i32
    %c0_i32_2 = arith.constant 0 : i32
    return %c0_i32, %c0_i32_0, %c0_i32_1 : i32, i32, i32
  }
  func.func @transform_2(%arg0: i32) -> (i32, i32, i32) {
    %c0_i32 = arith.constant 0 : i32
    %c0_i32_0 = arith.constant 0 : i32
    %c0_i32_1 = arith.constant 0 : i32
    %c0_i32_2 = arith.constant 0 : i32
    return %c0_i32, %c0_i32_0, %c0_i32_1 : i32, i32, i32
  }
  func.func @transform_3(%arg0: i32) -> (i32, i32, i32) {
    %c0_i32 = arith.constant 0 : i32
    %c0_i32_0 = arith.constant 0 : i32
    %c0_i32_1 = arith.constant 0 : i32
    %c0_i32_2 = arith.constant 0 : i32
    return %c0_i32, %c0_i32_0, %c0_i32_1 : i32, i32, i32
  }
  func.func @transform_4(%arg0: i32) -> (i32, i32) {
    %c0_i32 = arith.constant 0 : i32
    %c0_i32_0 = arith.constant 0 : i32
    %c0_i32_1 = arith.constant 0 : i32
    return %c0_i32, %c0_i32_0 : i32, i32
  }
  func.func @transform_5(%arg0: i32) -> (i32, i32) {
    %c0_i32 = arith.constant 0 : i32
    %c0_i32_0 = arith.constant 0 : i32
    %c0_i32_1 = arith.constant 0 : i32
    return %c0_i32, %c0_i32_0 : i32, i32
  }
  func.func @transform_6(%arg0: i32) -> (i32, i32, i32) {
    %c0_i32 = arith.constant 0 : i32
    %c0_i32_0 = arith.constant 0 : i32
    %c0_i32_1 = arith.constant 0 : i32
    return %arg0, %c0_i32, %c0_i32_0 : i32, i32, i32
  }
}

</mosaic_0001>

<llo_original>
// kernel: tpu_custom_call.1
$region0: #{tpu_custom_call.1}
  #allocation0 [shape = 'u32[]', space=smem, size = 0x4, offset = 0x4, fixed_abs, tag = 'smem constant byte address 0x4 - core index']
  #allocation1 [shape = 'u32[144,128]{1,0:T(1,128)}', space=vmem, size = 0x12000, scoped, tag = 'internal scratch']
  #allocation2 [shape = 'f32[8,32]{1,0:T(8,128)}', space=vmem, size = 0x1000, scoped, tag = 'scratch operand']
  %s0 = inlined_call_operand.vmem [shape: f32[2,8,32], index: 0, kind: input, shape index: {}]
  %s1 = inlined_call_operand.vmem [shape: f32[8,32,4], index: 1, kind: input, shape index: {}]
  %s2 = inlined_call_operand.vmem [shape: f32[8,32,4], index: 2, kind: input, shape index: {}]
  %s3 = inlined_call_operand.vmem [shape: f32[8,32,4], index: 3, kind: input, shape index: {}]
  %s4 = inlined_call_operand.vmem [shape: f32[32,32], index: 4, kind: input, shape index: {}]
  %s5 = inlined_call_operand.vmem [shape: f32[1,32], index: 5, kind: input, shape index: {}]
  %s6 = inlined_call_operand.hbm [shape: f32[2,8,32], index: 6, kind: output, shape index: {}]
  %s7 = sld [smem:[#allocation0]]
  $region57: #{tpu_custom_call.1} parent=0
    _
  %s9 = ssub.s32 1, %s7
  %s10 = scalar_select 0, %s9, %s7
  $region1: #{tpu_custom_call.1} parent=0
    #allocation3 [shape = 'u8[8192]{0}', space=vmem, size = 0x2000, scoped, tag = 'output window, operand 0']
    #allocation4 [shape = 's32[2]{0}', space=sflag, size = 0x8, scoped, tag = 'scoped memory for tpu_custom_call.1']
    %11 = vsyncpa [#allocation4], 0
    %s12 = scalar_lea.sflag [#allocation4], 1
    %13 = vsyncpa %s12, 0
    loop: start=0, step=1, limit=4
    $region2: #{tpu_custom_call.1} parent=1 // loop_pre_header
      _
    $region3: #{tpu_custom_call.1} parent=1 // loop_header
      %s15 = sphi 0, %s19
      %p16 = scmp.ge.s32.totalorder %s15, 4
      %s25 = sphi 0, %s27
      %s28 = sphi 0, %s25
      %s29 = sphi 0, %s28
      %s45 = sphi 0, %s29
      %s49 = sphi 0, %s49
      %s51 = sphi 0, %s49
      %s52 = sphi 0, %s51
      %s66 = sphi 0, %s52
      %s70 = sphi 0, %s70
      %s72 = sphi 0, %s70
      %s73 = sphi 0, %s72
      %s87 = sphi 0, %s73
      %s91 = sphi 0, %s91
      %s93 = sphi 0, %s91
      %s94 = sphi 0, %s93
      %s108 = sphi 0, %s94
      %s112 = sphi 0, %s112
      %s114 = sphi 0, %s112
      %s115 = sphi 0, %s114
      %s129 = sphi 0, %s115
      %s133 = sphi 0, %s133
      %s135 = sphi 0, %s133
      %s136 = sphi 0, %s135
      %s150 = sphi 0, %s136
      %s156 = sphi 0, %s158
      %s159 = sphi 0, %s156
      %s160 = sphi 0, %s159
      %s176 = sphi 0, %s160
    $region4: #{tpu_custom_call.1} parent=1 // loop_header_branch
      %18 = sbr.rel (%p16) target = $region8
    $region5: #{tpu_custom_call.1} parent=1 // loop_body
      %s20 = ssub.s32 %s15, 1
      %s21 = ssub.s32 %s15, 2
      %s22 = sadd.s32 %s15, 1
      %s23 = ssub.s32 %s15, %s22
      %p24 = scmp.eq.s32.totalorder %s23, 0
      %s26 = sadd.s32 %s25, 1
      %s27 = scalar_select %p24, %s25, %s26
      %p30 = pneg %p24
      %p31 = scmp.eq.s32.totalorder %s15, 1
      %p32 = por %p30, %p31
      %p33 = scmp.ne.s32.totalorder %s25, %s28
      %p34 = scmp.eq.s32.totalorder %s15, 0
      %p35 = por %p33, %p34
      %p36 = scmp.ne.s32.totalorder %s25, %s28
      %p37 = scmp.eq.s32.totalorder %s20, 1
      %p38 = por %p36, %p37
      %p39 = scmp.ne.s32.totalorder %s28, %s29
      %p40 = scmp.eq.s32.totalorder %s20, 0
      %p41 = por %p39, %p40
      %p42 = scmp.ne.s32.totalorder %s28, %s29
      %p43 = scmp.eq.s32.totalorder %s21, 1
      %p44 = por %p42, %p43
      %p46 = scmp.ne.s32.totalorder %s29, %s45
      %p47 = scmp.eq.s32.totalorder %s21, 0
      %p48 = por %p46, %p47
      %s50 = sadd.s32 %s49, 1
      %p53 = scmp.eq.s32.totalorder %s15, 1
      %p54 = scmp.ne.s32.totalorder %s49, %s51
      %p55 = scmp.eq.s32.totalorder %s15, 0
      %p56 = por %p54, %p55
      %p57 = scmp.ne.s32.totalorder %s49, %s51
      %p58 = scmp.eq.s32.totalorder %s20, 1
      %p59 = por %p57, %p58
      %p60 = scmp.ne.s32.totalorder %s51, %s52
      %p61 = scmp.eq.s32.totalorder %s20, 0
      %p62 = por %p60, %p61
      %p63 = scmp.ne.s32.totalorder %s51, %s52
      %p64 = scmp.eq.s32.totalorder %s21, 1
      %p65 = por %p63, %p64
      %p67 = scmp.ne.s32.totalorder %s52, %s66
      %p68 = scmp.eq.s32.totalorder %s21, 0
      %p69 = por %p67, %p68
      %s71 = sadd.s32 %s70, 1
      %p74 = scmp.eq.s32.totalorder %s15, 1
      %p75 = scmp.ne.s32.totalorder %s70, %s72
      %p76 = scmp.eq.s32.totalorder %s15, 0
      %p77 = por %p75, %p76
      %p78 = scmp.ne.s32.totalorder %s70, %s72
      %p79 = scmp.eq.s32.totalorder %s20, 1
      %p80 = por %p78, %p79
      %p81 = scmp.ne.s32.totalorder %s72, %s73
      %p82 = scmp.eq.s32.totalorder %s20, 0
      %p83 = por %p81, %p82
      %p84 = scmp.ne.s32.totalorder %s72, %s73
      %p85 = scmp.eq.s32.totalorder %s21, 1
      %p86 = por %p84, %p85
      %p88 = scmp.ne.s32.totalorder %s73, %s87
      %p89 = scmp.eq.s32.totalorder %s21, 0
      %p90 = por %p88, %p89
      %s92 = sadd.s32 %s91, 1
      %p95 = scmp.eq.s32.totalorder %s15, 1
      %p96 = scmp.ne.s32.totalorder %s91, %s93
      %p97 = scmp.eq.s32.totalorder %s15, 0
      %p98 = por %p96, %p97
      %p99 = scmp.ne.s32.totalorder %s91, %s93
      %p100 = scmp.eq.s32.totalorder %s20, 1
      %p101 = por %p99, %p100
      %p102 = scmp.ne.s32.totalorder %s93, %s94
      %p103 = scmp.eq.s32.totalorder %s20, 0
      %p104 = por %p102, %p103
      %p105 = scmp.ne.s32.totalorder %s93, %s94
      %p106 = scmp.eq.s32.totalorder %s21, 1
      %p107 = por %p105, %p106
      %p109 = scmp.ne.s32.totalorder %s94, %s108
      %p110 = scmp.eq.s32.totalorder %s21, 0
      %p111 = por %p109, %p110
      %s113 = sadd.s32 %s112, 1
      %p116 = scmp.eq.s32.totalorder %s15, 1
      %p117 = scmp.ne.s32.totalorder %s112, %s114
      %p118 = scmp.eq.s32.totalorder %s15, 0
      %p119 = por %p117, %p118
      %p120 = scmp.ne.s32.totalorder %s112, %s114
      %p121 = scmp.eq.s32.totalorder %s20, 1
      %p122 = por %p120, %p121
      %p123 = scmp.ne.s32.totalorder %s114, %s115
      %p124 = scmp.eq.s32.totalorder %s20, 0
      %p125 = por %p123, %p124
      %p126 = scmp.ne.s32.totalorder %s114, %s115
      %p127 = scmp.eq.s32.totalorder %s21, 1
      %p128 = por %p126, %p127
      %p130 = scmp.ne.s32.totalorder %s115, %s129
      %p131 = scmp.eq.s32.totalorder %s21, 0
      %p132 = por %p130, %p131
      %s134 = sadd.s32 %s133, 1
      %p137 = scmp.eq.s32.totalorder %s15, 1
      %p138 = scmp.ne.s32.totalorder %s133, %s135
      %p139 = scmp.eq.s32.totalorder %s15, 0
      %p140 = por %p138, %p139
      %p141 = scmp.ne.s32.totalorder %s133, %s135
      %p142 = scmp.eq.s32.totalorder %s20, 1
      %p143 = por %p141, %p142
      %p144 = scmp.ne.s32.totalorder %s135, %s136
      %p145 = scmp.eq.s32.totalorder %s20, 0
      %p146 = por %p144, %p145
      %p147 = scmp.ne.s32.totalorder %s135, %s136
      %p148 = scmp.eq.s32.totalorder %s21, 1
      %p149 = por %p147, %p148
      %p151 = scmp.ne.s32.totalorder %s136, %s150
      %p152 = scmp.eq.s32.totalorder %s21, 0
      %p153 = por %p151, %p152
      %s154 = ssub.s32 %s15, %s22
      %p155 = scmp.eq.s32.totalorder %s154, 0
      %s157 = sadd.s32 %s156, 1
      %s158 = scalar_select %p155, %s156, %s157
      %p161 = pneg %p155
      %p162 = scmp.eq.s32.totalorder %s15, 1
      %p163 = por %p161, %p162
      %p164 = scmp.ne.s32.totalorder %s156, %s159
      %p165 = scmp.eq.s32.totalorder %s15, 0
      %p166 = por %p164, %p165
      %p167 = scmp.ne.s32.totalorder %s156, %s159
      %p168 = scmp.eq.s32.totalorder %s20, 1
      %p169 = por %p167, %p168
      %p170 = scmp.ne.s32.totalorder %s159, %s160
      %p171 = scmp.eq.s32.totalorder %s20, 0
      %p172 = por %p170, %p171
      %p173 = scmp.ne.s32.totalorder %s159, %s160
      %p174 = scmp.eq.s32.totalorder %s21, 1
      %p175 = por %p173, %p174
      %p177 = scmp.ne.s32.totalorder %s160, %s176
      %p178 = scmp.eq.s32.totalorder %s21, 0
      %p179 = por %p177, %p178
      %p180 = scmp.le.s32.totalorder 1, %s15
      %p181 = scmp.lt.s32.totalorder %s15, 3
      %p182 = pnand %p180, %p181
      %p183 = pneg %p182
      // Predicated region
      $region9: #{tpu_custom_call.1} parent=5 // pred_check
        _
      $region10: #{tpu_custom_call.1} parent=5 // pred_check_branch
        %185 = sbr.rel (%p182) target = $region12
      $region11: #{tpu_custom_call.1} parent=5 // pred_region
        %s186 = ssub.s32 %s15, 1
        // Predicated region
        $region13: #{tpu_custom_call.1} parent=11 // pred_check
          %p187 = pneg %p62
        $region14: #{tpu_custom_call.1} parent=11 // pred_check_branch
          %189 = sbr.rel (%p187) target = $region16
        $region15: #{tpu_custom_call.1} parent=11 // pred_region
          _
        $region16: #{tpu_custom_call.1} parent=11 // pred_fallthru
          _
        // Predicated region
        $region17: #{tpu_custom_call.1} parent=11 // pred_check
          %p190 = pneg %p83
        $region18: #{tpu_custom_call.1} parent=11 // pred_check_branch
          %192 = sbr.rel (%p190) target = $region20
        $region19: #{tpu_custom_call.1} parent=11 // pred_region
          _
        $region20: #{tpu_custom_call.1} parent=11 // pred_fallthru
          _
        // Predicated region
        $region21: #{tpu_custom_call.1} parent=11 // pred_check
          %p193 = pneg %p104
        $region22: #{tpu_custom_call.1} parent=11 // pred_check_branch
          %195 = sbr.rel (%p193) target = $region24
        $region23: #{tpu_custom_call.1} parent=11 // pred_region
          _
        $region24: #{tpu_custom_call.1} parent=11 // pred_fallthru
          _
        // Predicated region
        $region25: #{tpu_custom_call.1} parent=11 // pred_check
          %p196 = pneg %p125
        $region26: #{tpu_custom_call.1} parent=11 // pred_check_branch
          %198 = sbr.rel (%p196) target = $region28
        $region27: #{tpu_custom_call.1} parent=11 // pred_region
          _
        $region28: #{tpu_custom_call.1} parent=11 // pred_fallthru
          _
        // Predicated region
        $region29: #{tpu_custom_call.1} parent=11 // pred_check
          %p199 = pneg %p146
        $region30: #{tpu_custom_call.1} parent=11 // pred_check_branch
          %201 = sbr.rel (%p199) target = $region32
        $region31: #{tpu_custom_call.1} parent=11 // pred_region
          _
        $region32: #{tpu_custom_call.1} parent=11 // pred_fallthru
          _
      $region12: #{tpu_custom_call.1} parent=5 // pred_fallthru
        _
      %p202 = scmp.lt.s32.totalorder %s15, 2
      // Predicated region
      $region33: #{tpu_custom_call.1} parent=5 // pred_check
        %p203 = pneg %p202
      $region34: #{tpu_custom_call.1} parent=5 // pred_check_branch
        %205 = sbr.rel (%p203) target = $region36
      $region35: #{tpu_custom_call.1} parent=5 // pred_region
        // Predicated region
        $region37: #{tpu_custom_call.1} parent=35 // pred_check
          %p206 = pneg %p35
        $region38: #{tpu_custom_call.1} parent=35 // pred_check_branch
          %208 = sbr.rel (%p206) target = $region40
        $region39: #{tpu_custom_call.1} parent=35 // pred_region
          %p209 = scmp.lt.s32.totalorder %s15, 1
          %s210 = scalar_select %p209, %s15, 1
          %s211 = smul.addr %s210, 8
          %s212 = scalar_lea.vmem %s0, %s211
        $region40: #{tpu_custom_call.1} parent=35 // pred_fallthru
          _
      $region36: #{tpu_custom_call.1} parent=5 // pred_fallthru
        _
      %p213 = scmp.le.s32.totalorder 1, %s15
      %p214 = scmp.lt.s32.totalorder %s15, 3
      %p215 = pnand %p213, %p214
      %p216 = pneg %p215
      // Predicated region
      $region41: #{tpu_custom_call.1} parent=5 // pred_check
        _
      $region42: #{tpu_custom_call.1} parent=5 // pred_check_branch
        %218 = sbr.rel (%p215) target = $region44
      $region43: #{tpu_custom_call.1} parent=5 // pred_region
        %s219 = ssub.s32 %s15, 1
        %p220 = scmp.lt.s32.totalorder %s20, 1
        %s221 = scalar_select %p220, %s20, 1
        %s222 = smul.addr %s221, 8
        %s223 = scalar_lea.vmem %s0, %s222
        %p224 = pneg %p41
        %p225 = pneg %p38
        %p226 = pneg %p62
        %p227 = pneg %p59
        %p228 = pneg %p83
        %p229 = pneg %p80
        %p230 = pneg %p104
        %p231 = pneg %p101
        %p232 = pneg %p125
        %p233 = pneg %p122
        %p234 = pneg %p146
        %p235 = pneg %p143
        %p236 = pneg %p172
        %p237 = pneg %p169
        %s238 = sand.u32 %s159, 1
        %s239 = scalar_lea.sflag [#allocation4], %s238
        %s240 = sand.u32 %s159, 1
        %s241 = smul.addr %s240, 8
        %s242 = scalar_lea.vmem [#allocation3], %s241
        %p243 = scmp.lt.s32.totalorder %s20, 1
        %s244 = scalar_select %p243, %s20, 1
        %s245 = smul.addr %s244, 8
        %s246 = scalar_lea.vmem %s0, %s245
        %v247 = vld [vmem:[%s246] sm:$0xff]
        %v248 = vld [vmem:[%s1] sm:$0xff]
        %v249 = vld [vmem:[%s1 + $0x8] sm:$0xff]
        %v250 = vld [vmem:[%s1 + $0x10] sm:$0xff]
        %v251 = vld [vmem:[%s1 + $0x18] sm:$0xff]
        %v252 = vld [vmem:[%s2] sm:$0xff]
        %v253 = vld [vmem:[%s2 + $0x8] sm:$0xff]
        %v254 = vld [vmem:[%s2 + $0x10] sm:$0xff]
        %v255 = vld [vmem:[%s2 + $0x18] sm:$0xff]
        %v256 = vld [vmem:[%s3] sm:$0xff]
        %v257 = vld [vmem:[%s3 + $0x8] sm:$0xff]
        %v258 = vld [vmem:[%s3 + $0x10] sm:$0xff]
        %v259 = vld [vmem:[%s3 + $0x18] sm:$0xff]
        %vm260 = vcmask 261120
        %v262 = vsel %vm260, %v247, 0
        %264 = vmatprep.subr.mxu0 0.0
        %265 = vmatpush1.msra.mxu0 %v248
        %266 = vmatprep.subr.mxu0 0.0
        %267 = vmatpush1.msra.mxu0 %v249
        %268 = vmatprep.subr.mxu0 0.0
        %269 = vmatpush1.msra.mxu0 %v250
        %270 = vmatprep.subr.mxu0 0.0
        %271 = vmatpush1.msra.mxu0 %v251
        %272 = vmatprep.subr.mxu0 0.0
        %273 = vmatpush1.msra.mxu0 0.0
        %274 = vmatprep.subr.mxu0 0.0
        %275 = vmatpush1.msra.mxu0 0.0
        %276 = vmatprep.subr.mxu0 0.0
        %277 = vmatpush1.msra.mxu0 0.0
        %278 = vmatprep.subr.mxu0 0.0
        %279 = vmatpush1.msra.mxu0 0.0
        %280 = vmatprep.subr.mxu0 0.0
        %281 = vmatpush1.msra.mxu0 0.0
        %282 = vmatprep.subr.mxu0 0.0
        %283 = vmatpush1.msra.mxu0 0.0
        %284 = vmatprep.subr.mxu0 0.0
        %285 = vmatpush1.msra.mxu0 0.0
        %286 = vmatprep.subr.mxu0 0.0
        %287 = vmatpush1.msra.mxu0 0.0
        %288 = vmatprep.subr.mxu0 0.0
        %289 = vmatpush1.msra.mxu0 0.0
        %290 = vmatprep.subr.mxu0 0.0
        %291 = vmatpush1.msra.mxu0 0.0
        %292 = vmatprep.subr.mxu0 0.0
        %293 = vmatpush1.msra.mxu0 0.0
        %294 = vmatprep.subr.mxu0 0.0
        %295 = vmatpush1.msra.mxu0 0.0
        %296 = vmatprep.subr.mxu0 0.0
        %297 = vmatpush1.msra.mxu0 0.0
        %298 = vmatprep.subr.mxu0 0.0
        %299 = vmatpush1.msra.mxu0 0.0
        %300 = vmatprep.subr.mxu0 0.0
        %301 = vmatpush1.msra.mxu0 0.0
        %302 = vmatprep.subr.mxu0 0.0
        %303 = vmatpush1.msra.mxu0 0.0
        %304 = vmatprep.subr.mxu0 0.0
        %305 = vmatpush1.msra.mxu0 0.0
        %306 = vmatprep.subr.mxu0 0.0
        %307 = vmatpush1.msra.mxu0 0.0
        %308 = vmatprep.subr.mxu0 0.0
        %309 = vmatpush1.msra.mxu0 0.0
        %310 = vmatprep.subr.mxu0 0.0
        %311 = vmatpush1.msra.mxu0 0.0
        %312 = vmatprep.subr.mxu0 0.0
        %313 = vmatpush1.msra.mxu0 0.0
        %314 = vmatprep.subr.mxu0 0.0
        %315 = vmatpush1.msra.mxu0 0.0
        %316 = vmatprep.subr.mxu0 0.0
        %317 = vmatpush1.msra.mxu0 0.0
        %318 = vmatprep.subr.mxu0 0.0
        %319 = vmatpush1.msra.mxu0 0.0
        %320 = vmatprep.subr.mxu0 0.0
        %321 = vmatpush1.msra.mxu0 0.0
        %322 = vmatprep.subr.mxu0 0.0
        %323 = vmatpush1.msra.mxu0 0.0
        %324 = vmatprep.subr.mxu0 0.0
        %325 = vmatpush1.msra.mxu0 0.0
        %326 = vmatprep.subr.mxu0 0.0
        %327 = vmatpush1.msra.mxu0 0.0
        %328 = vmatprep.mubr.f32.mxu0 0.0
        %329 = vmatmul.mubr.f32.gmra.mrb[0].mxu0 %v262
        %v330 = vpop.f32.mrb[0].mxu0
        %v331 = vadd.f32 0.0, %v330
        %v332 = vpop.f32.mrb[0].mxu0
        %333 = vdwg.mxu0
        %334 = vmatprep.subr.mxu0 0.0
        %335 = vmatpush1.msra.mxu0 %v252
        %336 = vmatprep.subr.mxu0 0.0
        %337 = vmatpush1.msra.mxu0 %v253
        %338 = vmatprep.subr.mxu0 0.0
        %339 = vmatpush1.msra.mxu0 %v254
        %340 = vmatprep.subr.mxu0 0.0
        %341 = vmatpush1.msra.mxu0 %v255
        %342 = vmatprep.subr.mxu0 0.0
        %343 = vmatpush1.msra.mxu0 0.0
        %344 = vmatprep.subr.mxu0 0.0
        %345 = vmatpush1.msra.mxu0 0.0
        %346 = vmatprep.subr.mxu0 0.0
        %347 = vmatpush1.msra.mxu0 0.0
        %348 = vmatprep.subr.mxu0 0.0
        %349 = vmatpush1.msra.mxu0 0.0
        %350 = vmatprep.subr.mxu0 0.0
        %351 = vmatpush1.msra.mxu0 0.0
        %352 = vmatprep.subr.mxu0 0.0
        %353 = vmatpush1.msra.mxu0 0.0
        %354 = vmatprep.subr.mxu0 0.0
        %355 = vmatpush1.msra.mxu0 0.0
        %356 = vmatprep.subr.mxu0 0.0
        %357 = vmatpush1.msra.mxu0 0.0
        %358 = vmatprep.subr.mxu0 0.0
        %359 = vmatpush1.msra.mxu0 0.0
        %360 = vmatprep.subr.mxu0 0.0
        %361 = vmatpush1.msra.mxu0 0.0
        %362 = vmatprep.subr.mxu0 0.0
        %363 = vmatpush1.msra.mxu0 0.0
        %364 = vmatprep.subr.mxu0 0.0
        %365 = vmatpush1.msra.mxu0 0.0
        %366 = vmatprep.subr.mxu0 0.0
        %367 = vmatpush1.msra.mxu0 0.0
        %368 = vmatprep.subr.mxu0 0.0
        %369 = vmatpush1.msra.mxu0 0.0
        %370 = vmatprep.subr.mxu0 0.0
        %371 = vmatpush1.msra.mxu0 0.0
        %372 = vmatprep.subr.mxu0 0.0
        %373 = vmatpush1.msra.mxu0 0.0
        %374 = vmatprep.subr.mxu0 0.0
        %375 = vmatpush1.msra.mxu0 0.0
        %376 = vmatprep.subr.mxu0 0.0
        %377 = vmatpush1.msra.mxu0 0.0
        %378 = vmatprep.subr.mxu0 0.0
        %379 = vmatpush1.msra.mxu0 0.0
        %380 = vmatprep.subr.mxu0 0.0
        %381 = vmatpush1.msra.mxu0 0.0
        %382 = vmatprep.subr.mxu0 0.0
        %383 = vmatpush1.msra.mxu0 0.0
        %384 = vmatprep.subr.mxu0 0.0
        %385 = vmatpush1.msra.mxu0 0.0
        %386 = vmatprep.subr.mxu0 0.0
        %387 = vmatpush1.msra.mxu0 0.0
        %388 = vmatprep.subr.mxu0 0.0
        %389 = vmatpush1.msra.mxu0 0.0
        %390 = vmatprep.subr.mxu0 0.0
        %391 = vmatpush1.msra.mxu0 0.0
        %392 = vmatprep.subr.mxu0 0.0
        %393 = vmatpush1.msra.mxu0 0.0
        %394 = vmatprep.subr.mxu0 0.0
        %395 = vmatpush1.msra.mxu0 0.0
        %396 = vmatprep.subr.mxu0 0.0
        %397 = vmatpush1.msra.mxu0 0.0
        %398 = vmatprep.mubr.f32.mxu0 0.0
        %399 = vmatmul.mubr.f32.gmra.mrb[0].mxu0 %v262
        %v400 = vpop.f32.mrb[0].mxu0
        %v401 = vadd.f32 0.0, %v400
        %v402 = vpop.f32.mrb[0].mxu0
        %403 = vdwg.mxu0
        %404 = vmatprep.subr.mxu0 0.0
        %405 = vmatpush1.msra.mxu0 %v256
        %406 = vmatprep.subr.mxu0 0.0
        %407 = vmatpush1.msra.mxu0 %v257
        %408 = vmatprep.subr.mxu0 0.0
        %409 = vmatpush1.msra.mxu0 %v258
        %410 = vmatprep.subr.mxu0 0.0
        %411 = vmatpush1.msra.mxu0 %v259
        %412 = vmatprep.subr.mxu0 0.0
        %413 = vmatpush1.msra.mxu0 0.0
        %414 = vmatprep.subr.mxu0 0.0
        %415 = vmatpush1.msra.mxu0 0.0
        %416 = vmatprep.subr.mxu0 0.0
        %417 = vmatpush1.msra.mxu0 0.0
        %418 = vmatprep.subr.mxu0 0.0
        %419 = vmatpush1.msra.mxu0 0.0
        %420 = vmatprep.subr.mxu0 0.0
        %421 = vmatpush1.msra.mxu0 0.0
        %422 = vmatprep.subr.mxu0 0.0
        %423 = vmatpush1.msra.mxu0 0.0
        %424 = vmatprep.subr.mxu0 0.0
        %425 = vmatpush1.msra.mxu0 0.0
        %426 = vmatprep.subr.mxu0 0.0
        %427 = vmatpush1.msra.mxu0 0.0
        %428 = vmatprep.subr.mxu0 0.0
        %429 = vmatpush1.msra.mxu0 0.0
        %430 = vmatprep.subr.mxu0 0.0
        %431 = vmatpush1.msra.mxu0 0.0
        %432 = vmatprep.subr.mxu0 0.0
        %433 = vmatpush1.msra.mxu0 0.0
        %434 = vmatprep.subr.mxu0 0.0
        %435 = vmatpush1.msra.mxu0 0.0
        %436 = vmatprep.subr.mxu0 0.0
        %437 = vmatpush1.msra.mxu0 0.0
        %438 = vmatprep.subr.mxu0 0.0
        %439 = vmatpush1.msra.mxu0 0.0
        %440 = vmatprep.subr.mxu0 0.0
        %441 = vmatpush1.msra.mxu0 0.0
        %442 = vmatprep.subr.mxu0 0.0
        %443 = vmatpush1.msra.mxu0 0.0
        %444 = vmatprep.subr.mxu0 0.0
        %445 = vmatpush1.msra.mxu0 0.0
        %446 = vmatprep.subr.mxu0 0.0
        %447 = vmatpush1.msra.mxu0 0.0
        %448 = vmatprep.subr.mxu0 0.0
        %449 = vmatpush1.msra.mxu0 0.0
        %450 = vmatprep.subr.mxu0 0.0
        %451 = vmatpush1.msra.mxu0 0.0
        %452 = vmatprep.subr.mxu0 0.0
        %453 = vmatpush1.msra.mxu0 0.0
        %454 = vmatprep.subr.mxu0 0.0
        %455 = vmatpush1.msra.mxu0 0.0
        %456 = vmatprep.subr.mxu0 0.0
        %457 = vmatpush1.msra.mxu0 0.0
        %458 = vmatprep.subr.mxu0 0.0
        %459 = vmatpush1.msra.mxu0 0.0
        %460 = vmatprep.subr.mxu0 0.0
        %461 = vmatpush1.msra.mxu0 0.0
        %462 = vmatprep.subr.mxu0 0.0
        %463 = vmatpush1.msra.mxu0 0.0
        %464 = vmatprep.subr.mxu0 0.0
        %465 = vmatpush1.msra.mxu0 0.0
        %466 = vmatprep.subr.mxu0 0.0
        %467 = vmatpush1.msra.mxu0 0.0
        %468 = vmatprep.mubr.f32.mxu0 0.0
        %469 = vmatmul.mubr.f32.gmra.mrb[0].mxu0 %v262
        %v470 = vpop.f32.mrb[0].mxu0
        %v471 = vadd.f32 0.0, %v470
        %v472 = vpop.f32.mrb[0].mxu0
        %473 = vdwg.mxu0
        %vm474 = vcmask 31744
        %v476 = vsel %vm474, %v331, 0
        %v479 = vsel %vm474, %v401, 0
        %481 = vmatprep.subr.mxu0 0.0
        %482 = vmatpush1.xpose.msra.mxu0 %v479
        %483 = vmatprep.subr.mxu0 0.0
        %484 = vmatpush1.xpose.msra.mxu0 0.0
        %485 = vmatprep.subr.mxu0 0.0
        %486 = vmatpush1.xpose.msra.mxu0 0.0
        %487 = vmatprep.subr.mxu0 0.0
        %488 = vmatpush1.xpose.msra.mxu0 0.0
        %489 = vmatprep.subr.mxu0 0.0
        %490 = vmatpush1.xpose.msra.mxu0 0.0
        %491 = vmatprep.subr.mxu0 0.0
        %492 = vmatpush1.xpose.msra.mxu0 0.0
        %493 = vmatprep.subr.mxu0 0.0
        %494 = vmatpush1.xpose.msra.mxu0 0.0
        %495 = vmatprep.subr.mxu0 0.0
        %496 = vmatpush1.xpose.msra.mxu0 0.0
        %497 = vmatprep.subr.mxu0 0.0
        %498 = vmatpush1.xpose.msra.mxu0 0.0
        %499 = vmatprep.subr.mxu0 0.0
        %500 = vmatpush1.xpose.msra.mxu0 0.0
        %501 = vmatprep.subr.mxu0 0.0
        %502 = vmatpush1.xpose.msra.mxu0 0.0
        %503 = vmatprep.subr.mxu0 0.0
        %504 = vmatpush1.xpose.msra.mxu0 0.0
        %505 = vmatprep.subr.mxu0 0.0
        %506 = vmatpush1.xpose.msra.mxu0 0.0
        %507 = vmatprep.subr.mxu0 0.0
        %508 = vmatpush1.xpose.msra.mxu0 0.0
        %509 = vmatprep.subr.mxu0 0.0
        %510 = vmatpush1.xpose.msra.mxu0 0.0
        %511 = vmatprep.subr.mxu0 0.0
        %512 = vmatpush1.xpose.msra.mxu0 0.0
        %513 = vmatprep.subr.mxu0 0.0
        %514 = vmatpush1.xpose.msra.mxu0 0.0
        %515 = vmatprep.subr.mxu0 0.0
        %516 = vmatpush1.xpose.msra.mxu0 0.0
        %517 = vmatprep.subr.mxu0 0.0
        %518 = vmatpush1.xpose.msra.mxu0 0.0
        %519 = vmatprep.subr.mxu0 0.0
        %520 = vmatpush1.xpose.msra.mxu0 0.0
        %521 = vmatprep.subr.mxu0 0.0
        %522 = vmatpush1.xpose.msra.mxu0 0.0
        %523 = vmatprep.subr.mxu0 0.0
        %524 = vmatpush1.xpose.msra.mxu0 0.0
        %525 = vmatprep.subr.mxu0 0.0
        %526 = vmatpush1.xpose.msra.mxu0 0.0
        %527 = vmatprep.subr.mxu0 0.0
        %528 = vmatpush1.xpose.msra.mxu0 0.0
        %529 = vmatprep.subr.mxu0 0.0
        %530 = vmatpush1.xpose.msra.mxu0 0.0
        %531 = vmatprep.subr.mxu0 0.0
        %532 = vmatpush1.xpose.msra.mxu0 0.0
        %533 = vmatprep.subr.mxu0 0.0
        %534 = vmatpush1.xpose.msra.mxu0 0.0
        %535 = vmatprep.subr.mxu0 0.0
        %536 = vmatpush1.xpose.msra.mxu0 0.0
        %537 = vmatprep.subr.mxu0 0.0
        %538 = vmatpush1.xpose.msra.mxu0 0.0
        %539 = vmatprep.subr.mxu0 0.0
        %540 = vmatpush1.xpose.msra.mxu0 0.0
        %541 = vmatprep.subr.mxu0 0.0
        %542 = vmatpush1.xpose.msra.mxu0 0.0
        %543 = vmatprep.subr.mxu0 0.0
        %544 = vmatpush1.xpose.msra.mxu0 0.0
        %545 = vmatprep.mubr.f32.mxu0 0.0
        %546 = vmatmul.mubr.f32.gmra.mrb[0].mxu0 %v476
        %v547 = vpop.f32.mrb[0].mxu0
        %v548 = vadd.f32 0.0, %v547
        %v549 = vpop.f32.mrb[0].mxu0
        %550 = vdwg.mxu0
        %v551 = vmul.f32 %v548, 0.5
        %vm552 = vcmask 64512
        %v553 = vsel %vm552, %v551, -inf
        %554 = vmax.xlane.f32.xlu0 %v553
        %v555 = vpop.xlane.xlu0 %554
        %v556 = vsub.f32 %v551, %v555
        %v557 = vmul.f32 %v556, 1.442695
        %v558 = vpow.pop %v557
        %v559 = vsel %vm552, %v558, 0.0
        %560 = vadd.xlane.f32.xlu0 %v559
        %v561 = vpop.xlane.xlu0 %560
        %v562 = vrcp.pop %v561
        %v563 = vmul.f32 %v558, %v562
        %v565 = vsel %vm552, %v563, 0
        %567 = vmatprep.subr.mxu0 0.0
        %568 = vmatpush1.msra.mxu0 %v471
        %569 = vmatprep.subr.mxu0 0.0
        %570 = vmatpush1.msra.mxu0 0.0
        %571 = vmatprep.subr.mxu0 0.0
        %572 = vmatpush1.msra.mxu0 0.0
        %573 = vmatprep.subr.mxu0 0.0
        %574 = vmatpush1.msra.mxu0 0.0
        %575 = vmatprep.subr.mxu0 0.0
        %576 = vmatpush1.msra.mxu0 0.0
        %577 = vmatprep.subr.mxu0 0.0
        %578 = vmatpush1.msra.mxu0 0.0
        %579 = vmatprep.subr.mxu0 0.0
        %580 = vmatpush1.msra.mxu0 0.0
        %581 = vmatprep.subr.mxu0 0.0
        %582 = vmatpush1.msra.mxu0 0.0
        %583 = vmatprep.subr.mxu0 0.0
        %584 = vmatpush1.msra.mxu0 0.0
        %585 = vmatprep.subr.mxu0 0.0
        %586 = vmatpush1.msra.mxu0 0.0
        %587 = vmatprep.subr.mxu0 0.0
        %588 = vmatpush1.msra.mxu0 0.0
        %589 = vmatprep.subr.mxu0 0.0
        %590 = vmatpush1.msra.mxu0 0.0
        %591 = vmatprep.subr.mxu0 0.0
        %592 = vmatpush1.msra.mxu0 0.0
        %593 = vmatprep.subr.mxu0 0.0
        %594 = vmatpush1.msra.mxu0 0.0
        %595 = vmatprep.subr.mxu0 0.0
        %596 = vmatpush1.msra.mxu0 0.0
        %597 = vmatprep.subr.mxu0 0.0
        %598 = vmatpush1.msra.mxu0 0.0
        %599 = vmatprep.subr.mxu0 0.0
        %600 = vmatpush1.msra.mxu0 0.0
        %601 = vmatprep.subr.mxu0 0.0
        %602 = vmatpush1.msra.mxu0 0.0
        %603 = vmatprep.subr.mxu0 0.0
        %604 = vmatpush1.msra.mxu0 0.0
        %605 = vmatprep.subr.mxu0 0.0
        %606 = vmatpush1.msra.mxu0 0.0
        %607 = vmatprep.subr.mxu0 0.0
        %608 = vmatpush1.msra.mxu0 0.0
        %609 = vmatprep.subr.mxu0 0.0
        %610 = vmatpush1.msra.mxu0 0.0
        %611 = vmatprep.subr.mxu0 0.0
        %612 = vmatpush1.msra.mxu0 0.0
        %613 = vmatprep.subr.mxu0 0.0
        %614 = vmatpush1.msra.mxu0 0.0
        %615 = vmatprep.subr.mxu0 0.0
        %616 = vmatpush1.msra.mxu0 0.0
        %617 = vmatprep.subr.mxu0 0.0
        %618 = vmatpush1.msra.mxu0 0.0
        %619 = vmatprep.subr.mxu0 0.0
        %620 = vmatpush1.msra.mxu0 0.0
        %621 = vmatprep.subr.mxu0 0.0
        %622 = vmatpush1.msra.mxu0 0.0
        %623 = vmatprep.subr.mxu0 0.0
        %624 = vmatpush1.msra.mxu0 0.0
        %625 = vmatprep.subr.mxu0 0.0
        %626 = vmatpush1.msra.mxu0 0.0
        %627 = vmatprep.subr.mxu0 0.0
        %628 = vmatpush1.msra.mxu0 0.0
        %629 = vmatprep.subr.mxu0 0.0
        %630 = vmatpush1.msra.mxu0 0.0
        %631 = vmatprep.mubr.f32.mxu0 0.0
        %632 = vmatmul.mubr.f32.gmra.mrb[0].mxu0 %v565
        %v633 = vpop.f32.mrb[0].mxu0
        %v634 = vadd.f32 0.0, %v633
        %v635 = vpop.f32.mrb[0].mxu0
        %636 = vdwg.mxu0
        %637 = vst.msk [vmem:[#allocation2] sm:$0xff] %vm474, %v634
        %s638 = scalar_lea.vmem %s1, 32
        %v639 = vld [vmem:[%s638] sm:$0xff]
        %v640 = vld [vmem:[%s638 + $0x8] sm:$0xff]
        %v641 = vld [vmem:[%s638 + $0x10] sm:$0xff]
        %v642 = vld [vmem:[%s638 + $0x18] sm:$0xff]
        %s643 = scalar_lea.vmem %s2, 32
        %v644 = vld [vmem:[%s643] sm:$0xff]
        %v645 = vld [vmem:[%s643 + $0x8] sm:$0xff]
        %v646 = vld [vmem:[%s643 + $0x10] sm:$0xff]
        %v647 = vld [vmem:[%s643 + $0x18] sm:$0xff]
        %s648 = scalar_lea.vmem %s3, 32
        %v649 = vld [vmem:[%s648] sm:$0xff]
        %v650 = vld [vmem:[%s648 + $0x8] sm:$0xff]
        %v651 = vld [vmem:[%s648 + $0x10] sm:$0xff]
        %v652 = vld [vmem:[%s648 + $0x18] sm:$0xff]
        %653 = vmatprep.subr.mxu0 0.0
        %654 = vmatpush1.msra.mxu0 %v639
        %655 = vmatprep.subr.mxu0 0.0
        %656 = vmatpush1.msra.mxu0 %v640
        %657 = vmatprep.subr.mxu0 0.0
        %658 = vmatpush1.msra.mxu0 %v641
        %659 = vmatprep.subr.mxu0 0.0
        %660 = vmatpush1.msra.mxu0 %v642
        %661 = vmatprep.subr.mxu0 0.0
        %662 = vmatpush1.msra.mxu0 0.0
        %663 = vmatprep.subr.mxu0 0.0
        %664 = vmatpush1.msra.mxu0 0.0
        %665 = vmatprep.subr.mxu0 0.0
        %666 = vmatpush1.msra.mxu0 0.0
        %667 = vmatprep.subr.mxu0 0.0
        %668 = vmatpush1.msra.mxu0 0.0
        %669 = vmatprep.subr.mxu0 0.0
        %670 = vmatpush1.msra.mxu0 0.0
        %671 = vmatprep.subr.mxu0 0.0
        %672 = vmatpush1.msra.mxu0 0.0
        %673 = vmatprep.subr.mxu0 0.0
        %674 = vmatpush1.msra.mxu0 0.0
        %675 = vmatprep.subr.mxu0 0.0
        %676 = vmatpush1.msra.mxu0 0.0
        %677 = vmatprep.subr.mxu0 0.0
        %678 = vmatpush1.msra.mxu0 0.0
        %679 = vmatprep.subr.mxu0 0.0
        %680 = vmatpush1.msra.mxu0 0.0
        %681 = vmatprep.subr.mxu0 0.0
        %682 = vmatpush1.msra.mxu0 0.0
        %683 = vmatprep.subr.mxu0 0.0
        %684 = vmatpush1.msra.mxu0 0.0
        %685 = vmatprep.subr.mxu0 0.0
        %686 = vmatpush1.msra.mxu0 0.0
        %687 = vmatprep.subr.mxu0 0.0
        %688 = vmatpush1.msra.mxu0 0.0
        %689 = vmatprep.subr.mxu0 0.0
        %690 = vmatpush1.msra.mxu0 0.0
        %691 = vmatprep.subr.mxu0 0.0
        %692 = vmatpush1.msra.mxu0 0.0
        %693 = vmatprep.subr.mxu0 0.0
        %694 = vmatpush1.msra.mxu0 0.0
        %695 = vmatprep.subr.mxu0 0.0
        %696 = vmatpush1.msra.mxu0 0.0
        %697 = vmatprep.subr.mxu0 0.0
        %698 = vmatpush1.msra.mxu0 0.0
        %699 = vmatprep.subr.mxu0 0.0
        %700 = vmatpush1.msra.mxu0 0.0
        %701 = vmatprep.subr.mxu0 0.0
        %702 = vmatpush1.msra.mxu0 0.0
        %703 = vmatprep.subr.mxu0 0.0
        %704 = vmatpush1.msra.mxu0 0.0
        %705 = vmatprep.subr.mxu0 0.0
        %706 = vmatpush1.msra.mxu0 0.0
        %707 = vmatprep.subr.mxu0 0.0
        %708 = vmatpush1.msra.mxu0 0.0
        %709 = vmatprep.subr.mxu0 0.0
        %710 = vmatpush1.msra.mxu0 0.0
        %711 = vmatprep.subr.mxu0 0.0
        %712 = vmatpush1.msra.mxu0 0.0
        %713 = vmatprep.subr.mxu0 0.0
        %714 = vmatpush1.msra.mxu0 0.0
        %715 = vmatprep.subr.mxu0 0.0
        %716 = vmatpush1.msra.mxu0 0.0
        %717 = vmatprep.mubr.f32.mxu0 0.0
        %718 = vmatmul.mubr.f32.gmra.mrb[0].mxu0 %v262
        %v719 = vpop.f32.mrb[0].mxu0
        %v720 = vadd.f32 0.0, %v719
        %v721 = vpop.f32.mrb[0].mxu0
        %722 = vdwg.mxu0
        %723 = vmatprep.subr.mxu0 0.0
        %724 = vmatpush1.msra.mxu0 %v644
        %725 = vmatprep.subr.mxu0 0.0
        %726 = vmatpush1.msra.mxu0 %v645
        %727 = vmatprep.subr.mxu0 0.0
        %728 = vmatpush1.msra.mxu0 %v646
        %729 = vmatprep.subr.mxu0 0.0
        %730 = vmatpush1.msra.mxu0 %v647
        %731 = vmatprep.subr.mxu0 0.0
        %732 = vmatpush1.msra.mxu0 0.0
        %733 = vmatprep.subr.mxu0 0.0
        %734 = vmatpush1.msra.mxu0 0.0
        %735 = vmatprep.subr.mxu0 0.0
        %736 = vmatpush1.msra.mxu0 0.0
        %737 = vmatprep.subr.mxu0 0.0
        %738 = vmatpush1.msra.mxu0 0.0
        %739 = vmatprep.subr.mxu0 0.0
        %740 = vmatpush1.msra.mxu0 0.0
        %741 = vmatprep.subr.mxu0 0.0
        %742 = vmatpush1.msra.mxu0 0.0
        %743 = vmatprep.subr.mxu0 0.0
        %744 = vmatpush1.msra.mxu0 0.0
        %745 = vmatprep.subr.mxu0 0.0
        %746 = vmatpush1.msra.mxu0 0.0
        %747 = vmatprep.subr.mxu0 0.0
        %748 = vmatpush1.msra.mxu0 0.0
        %749 = vmatprep.subr.mxu0 0.0
        %750 = vmatpush1.msra.mxu0 0.0
        %751 = vmatprep.subr.mxu0 0.0
        %752 = vmatpush1.msra.mxu0 0.0
        %753 = vmatprep.subr.mxu0 0.0
        %754 = vmatpush1.msra.mxu0 0.0
        %755 = vmatprep.subr.mxu0 0.0
        %756 = vmatpush1.msra.mxu0 0.0
        %757 = vmatprep.subr.mxu0 0.0
        %758 = vmatpush1.msra.mxu0 0.0
        %759 = vmatprep.subr.mxu0 0.0
        %760 = vmatpush1.msra.mxu0 0.0
        %761 = vmatprep.subr.mxu0 0.0
        %762 = vmatpush1.msra.mxu0 0.0
        %763 = vmatprep.subr.mxu0 0.0
        %764 = vmatpush1.msra.mxu0 0.0
        %765 = vmatprep.subr.mxu0 0.0
        %766 = vmatpush1.msra.mxu0 0.0
        %767 = vmatprep.subr.mxu0 0.0
        %768 = vmatpush1.msra.mxu0 0.0
        %769 = vmatprep.subr.mxu0 0.0
        %770 = vmatpush1.msra.mxu0 0.0
        %771 = vmatprep.subr.mxu0 0.0
        %772 = vmatpush1.msra.mxu0 0.0
        %773 = vmatprep.subr.mxu0 0.0
        %774 = vmatpush1.msra.mxu0 0.0
        %775 = vmatprep.subr.mxu0 0.0
        %776 = vmatpush1.msra.mxu0 0.0
        %777 = vmatprep.subr.mxu0 0.0
        %778 = vmatpush1.msra.mxu0 0.0
        %779 = vmatprep.subr.mxu0 0.0
        %780 = vmatpush1.msra.mxu0 0.0
        %781 = vmatprep.subr.mxu0 0.0
        %782 = vmatpush1.msra.mxu0 0.0
        %783 = vmatprep.subr.mxu0 0.0
        %784 = vmatpush1.msra.mxu0 0.0
        %785 = vmatprep.subr.mxu0 0.0
        %786 = vmatpush1.msra.mxu0 0.0
        %787 = vmatprep.mubr.f32.mxu0 0.0
        %788 = vmatmul.mubr.f32.gmra.mrb[0].mxu0 %v262
        %v789 = vpop.f32.mrb[0].mxu0
        %v790 = vadd.f32 0.0, %v789
        %v791 = vpop.f32.mrb[0].mxu0
        %792 = vdwg.mxu0
        %793 = vmatprep.subr.mxu0 0.0
        %794 = vmatpush1.msra.mxu0 %v649
        %795 = vmatprep.subr.mxu0 0.0
        %796 = vmatpush1.msra.mxu0 %v650
        %797 = vmatprep.subr.mxu0 0.0
        %798 = vmatpush1.msra.mxu0 %v651
        %799 = vmatprep.subr.mxu0 0.0
        %800 = vmatpush1.msra.mxu0 %v652
        %801 = vmatprep.subr.mxu0 0.0
        %802 = vmatpush1.msra.mxu0 0.0
        %803 = vmatprep.subr.mxu0 0.0
        %804 = vmatpush1.msra.mxu0 0.0
        %805 = vmatprep.subr.mxu0 0.0
        %806 = vmatpush1.msra.mxu0 0.0
        %807 = vmatprep.subr.mxu0 0.0
        %808 = vmatpush1.msra.mxu0 0.0
        %809 = vmatprep.subr.mxu0 0.0
        %810 = vmatpush1.msra.mxu0 0.0
        %811 = vmatprep.subr.mxu0 0.0
        %812 = vmatpush1.msra.mxu0 0.0
        %813 = vmatprep.subr.mxu0 0.0
        %814 = vmatpush1.msra.mxu0 0.0
        %815 = vmatprep.subr.mxu0 0.0
        %816 = vmatpush1.msra.mxu0 0.0
        %817 = vmatprep.subr.mxu0 0.0
        %818 = vmatpush1.msra.mxu0 0.0
        %819 = vmatprep.subr.mxu0 0.0
        %820 = vmatpush1.msra.mxu0 0.0
        %821 = vmatprep.subr.mxu0 0.0
        %822 = vmatpush1.msra.mxu0 0.0
        %823 = vmatprep.subr.mxu0 0.0
        %824 = vmatpush1.msra.mxu0 0.0
        %825 = vmatprep.subr.mxu0 0.0
        %826 = vmatpush1.msra.mxu0 0.0
        %827 = vmatprep.subr.mxu0 0.0
        %828 = vmatpush1.msra.mxu0 0.0
        %829 = vmatprep.subr.mxu0 0.0
        %830 = vmatpush1.msra.mxu0 0.0
        %831 = vmatprep.subr.mxu0 0.0
        %832 = vmatpush1.msra.mxu0 0.0
        %833 = vmatprep.subr.mxu0 0.0
        %834 = vmatpush1.msra.mxu0 0.0
        %835 = vmatprep.subr.mxu0 0.0
        %836 = vmatpush1.msra.mxu0 0.0
        %837 = vmatprep.subr.mxu0 0.0
        %838 = vmatpush1.msra.mxu0 0.0
        %839 = vmatprep.subr.mxu0 0.0
        %840 = vmatpush1.msra.mxu0 0.0
        %841 = vmatprep.subr.mxu0 0.0
        %842 = vmatpush1.msra.mxu0 0.0
        %843 = vmatprep.subr.mxu0 0.0
        %844 = vmatpush1.msra.mxu0 0.0
        %845 = vmatprep.subr.mxu0 0.0
        %846 = vmatpush1.msra.mxu0 0.0
        %847 = vmatprep.subr.mxu0 0.0
        %848 = vmatpush1.msra.mxu0 0.0
        %849 = vmatprep.subr.mxu0 0.0
        %850 = vmatpush1.msra.mxu0 0.0
        %851 = vmatprep.subr.mxu0 0.0
        %852 = vmatpush1.msra.mxu0 0.0
        %853 = vmatprep.subr.mxu0 0.0
        %854 = vmatpush1.msra.mxu0 0.0
        %855 = vmatprep.subr.mxu0 0.0
        %856 = vmatpush1.msra.mxu0 0.0
        %857 = vmatprep.mubr.f32.mxu0 0.0
        %858 = vmatmul.mubr.f32.gmra.mrb[0].mxu0 %v262
        %v859 = vpop.f32.mrb[0].mxu0
        %v860 = vadd.f32 0.0, %v859
        %v861 = vpop.f32.mrb[0].mxu0
        %862 = vdwg.mxu0
        %v864 = vsel %vm474, %v720, 0
        %v867 = vsel %vm474, %v790, 0
        %869 = vmatprep.subr.mxu0 0.0
        %870 = vmatpush1.xpose.msra.mxu0 %v867
        %871 = vmatprep.subr.mxu0 0.0
        %872 = vmatpush1.xpose.msra.mxu0 0.0
        %873 = vmatprep.subr.mxu0 0.0
        %874 = vmatpush1.xpose.msra.mxu0 0.0
        %875 = vmatprep.subr.mxu0 0.0
        %876 = vmatpush1.xpose.msra.mxu0 0.0
        %877 = vmatprep.subr.mxu0 0.0
        %878 = vmatpush1.xpose.msra.mxu0 0.0
        %879 = vmatprep.subr.mxu0 0.0
        %880 = vmatpush1.xpose.msra.mxu0 0.0
        %881 = vmatprep.subr.mxu0 0.0
        %882 = vmatpush1.xpose.msra.mxu0 0.0
        %883 = vmatprep.subr.mxu0 0.0
        %884 = vmatpush1.xpose.msra.mxu0 0.0
        %885 = vmatprep.subr.mxu0 0.0
        %886 = vmatpush1.xpose.msra.mxu0 0.0
        %887 = vmatprep.subr.mxu0 0.0
        %888 = vmatpush1.xpose.msra.mxu0 0.0
        %889 = vmatprep.subr.mxu0 0.0
        %890 = vmatpush1.xpose.msra.mxu0 0.0
        %891 = vmatprep.subr.mxu0 0.0
        %892 = vmatpush1.xpose.msra.mxu0 0.0
        %893 = vmatprep.subr.mxu0 0.0
        %894 = vmatpush1.xpose.msra.mxu0 0.0
        %895 = vmatprep.subr.mxu0 0.0
        %896 = vmatpush1.xpose.msra.mxu0 0.0
        %897 = vmatprep.subr.mxu0 0.0
        %898 = vmatpush1.xpose.msra.mxu0 0.0
        %899 = vmatprep.subr.mxu0 0.0
        %900 = vmatpush1.xpose.msra.mxu0 0.0
        %901 = vmatprep.subr.mxu0 0.0
        %902 = vmatpush1.xpose.msra.mxu0 0.0
        %903 = vmatprep.subr.mxu0 0.0
        %904 = vmatpush1.xpose.msra.mxu0 0.0
        %905 = vmatprep.subr.mxu0 0.0
        %906 = vmatpush1.xpose.msra.mxu0 0.0
        %907 = vmatprep.subr.mxu0 0.0
        %908 = vmatpush1.xpose.msra.mxu0 0.0
        %909 = vmatprep.subr.mxu0 0.0
        %910 = vmatpush1.xpose.msra.mxu0 0.0
        %911 = vmatprep.subr.mxu0 0.0
        %912 = vmatpush1.xpose.msra.mxu0 0.0
        %913 = vmatprep.subr.mxu0 0.0
        %914 = vmatpush1.xpose.msra.mxu0 0.0
        %915 = vmatprep.subr.mxu0 0.0
        %916 = vmatpush1.xpose.msra.mxu0 0.0
        %917 = vmatprep.subr.mxu0 0.0
        %918 = vmatpush1.xpose.msra.mxu0 0.0
        %919 = vmatprep.subr.mxu0 0.0
        %920 = vmatpush1.xpose.msra.mxu0 0.0
        %921 = vmatprep.subr.mxu0 0.0
        %922 = vmatpush1.xpose.msra.mxu0 0.0
        %923 = vmatprep.subr.mxu0 0.0
        %924 = vmatpush1.xpose.msra.mxu0 0.0
        %925 = vmatprep.subr.mxu0 0.0
        %926 = vmatpush1.xpose.msra.mxu0 0.0
        %927 = vmatprep.subr.mxu0 0.0
        %928 = vmatpush1.xpose.msra.mxu0 0.0
        %929 = vmatprep.subr.mxu0 0.0
        %930 = vmatpush1.xpose.msra.mxu0 0.0
        %931 = vmatprep.subr.mxu0 0.0
        %932 = vmatpush1.xpose.msra.mxu0 0.0
        %933 = vmatprep.mubr.f32.mxu0 0.0
        %934 = vmatmul.mubr.f32.gmra.mrb[0].mxu0 %v864
        %v935 = vpop.f32.mrb[0].mxu0
        %v936 = vadd.f32 0.0, %v935
        %v937 = vpop.f32.mrb[0].mxu0
        %938 = vdwg.mxu0
        %v939 = vmul.f32 %v936, 0.5
        %v940 = vsel %vm552, %v939, -inf
        %941 = vmax.xlane.f32.xlu0 %v940
        %v942 = vpop.xlane.xlu0 %941
        %v943 = vsub.f32 %v939, %v942
        %v944 = vmul.f32 %v943, 1.442695
        %v945 = vpow.pop %v944
        %v946 = vsel %vm552, %v945, 0.0
        %947 = vadd.xlane.f32.xlu0 %v946
        %v948 = vpop.xlane.xlu0 %947
        %v949 = vrcp.pop %v948
        %v950 = vmul.f32 %v945, %v949
        %v952 = vsel %vm552, %v950, 0
        %954 = vmatprep.subr.mxu0 0.0
        %955 = vmatpush1.msra.mxu0 %v860
        %956 = vmatprep.subr.mxu0 0.0
        %957 = vmatpush1.msra.mxu0 0.0
        %958 = vmatprep.subr.mxu0 0.0
        %959 = vmatpush1.msra.mxu0 0.0
        %960 = vmatprep.subr.mxu0 0.0
        %961 = vmatpush1.msra.mxu0 0.0
        %962 = vmatprep.subr.mxu0 0.0
        %963 = vmatpush1.msra.mxu0 0.0
        %964 = vmatprep.subr.mxu0 0.0
        %965 = vmatpush1.msra.mxu0 0.0
        %966 = vmatprep.subr.mxu0 0.0
        %967 = vmatpush1.msra.mxu0 0.0
        %968 = vmatprep.subr.mxu0 0.0
        %969 = vmatpush1.msra.mxu0 0.0
        %970 = vmatprep.subr.mxu0 0.0
        %971 = vmatpush1.msra.mxu0 0.0
        %972 = vmatprep.subr.mxu0 0.0
        %973 = vmatpush1.msra.mxu0 0.0
        %974 = vmatprep.subr.mxu0 0.0
        %975 = vmatpush1.msra.mxu0 0.0
        %976 = vmatprep.subr.mxu0 0.0
        %977 = vmatpush1.msra.mxu0 0.0
        %978 = vmatprep.subr.mxu0 0.0
        %979 = vmatpush1.msra.mxu0 0.0
        %980 = vmatprep.subr.mxu0 0.0
        %981 = vmatpush1.msra.mxu0 0.0
        %982 = vmatprep.subr.mxu0 0.0
        %983 = vmatpush1.msra.mxu0 0.0
        %984 = vmatprep.subr.mxu0 0.0
        %985 = vmatpush1.msra.mxu0 0.0
        %986 = vmatprep.subr.mxu0 0.0
        %987 = vmatpush1.msra.mxu0 0.0
        %988 = vmatprep.subr.mxu0 0.0
        %989 = vmatpush1.msra.mxu0 0.0
        %990 = vmatprep.subr.mxu0 0.0
        %991 = vmatpush1.msra.mxu0 0.0
        %992 = vmatprep.subr.mxu0 0.0
        %993 = vmatpush1.msra.mxu0 0.0
        %994 = vmatprep.subr.mxu0 0.0
        %995 = vmatpush1.msra.mxu0 0.0
        %996 = vmatprep.subr.mxu0 0.0
        %997 = vmatpush1.msra.mxu0 0.0
        %998 = vmatprep.subr.mxu0 0.0
        %999 = vmatpush1.msra.mxu0 0.0
        %1000 = vmatprep.subr.mxu0 0.0
        %1001 = vmatpush1.msra.mxu0 0.0
        %1002 = vmatprep.subr.mxu0 0.0
        %1003 = vmatpush1.msra.mxu0 0.0
        %1004 = vmatprep.subr.mxu0 0.0
        %1005 = vmatpush1.msra.mxu0 0.0
        %1006 = vmatprep.subr.mxu0 0.0
        %1007 = vmatpush1.msra.mxu0 0.0
        %1008 = vmatprep.subr.mxu0 0.0
        %1009 = vmatpush1.msra.mxu0 0.0
        %1010 = vmatprep.subr.mxu0 0.0
        %1011 = vmatpush1.msra.mxu0 0.0
        %1012 = vmatprep.subr.mxu0 0.0
        %1013 = vmatpush1.msra.mxu0 0.0
        %1014 = vmatprep.subr.mxu0 0.0
        %1015 = vmatpush1.msra.mxu0 0.0
        %1016 = vmatprep.subr.mxu0 0.0
        %1017 = vmatpush1.msra.mxu0 0.0
        %1018 = vmatprep.mubr.f32.mxu0 0.0
        %1019 = vmatmul.mubr.f32.gmra.mrb[0].mxu0 %v952
        %v1020 = vpop.f32.mrb[0].mxu0
        %v1021 = vadd.f32 0.0, %v1020
        %v1022 = vpop.f32.mrb[0].mxu0
        %1023 = vdwg.mxu0
        %1025 = vrot.lane.b32.xlu0 %v1021, 4
        %v1026 = vpop.permute.xlu0 %1025
        %vm1028 = vcmask 64544
        %1029 = vst.msk [vmem:[#allocation2] sm:$0xff] %vm1028, %v1026
        %s1030 = scalar_lea.vmem %s1, 64
        %v1031 = vld [vmem:[%s1030] sm:$0xff]
        %v1032 = vld [vmem:[%s1030 + $0x8] sm:$0xff]
        %v1033 = vld [vmem:[%s1030 + $0x10] sm:$0xff]
        %v1034 = vld [vmem:[%s1030 + $0x18] sm:$0xff]
        %s1035 = scalar_lea.vmem %s2, 64
        %v1036 = vld [vmem:[%s1035] sm:$0xff]
        %v1037 = vld [vmem:[%s1035 + $0x8] sm:$0xff]
        %v1038 = vld [vmem:[%s1035 + $0x10] sm:$0xff]
        %v1039 = vld [vmem:[%s1035 + $0x18] sm:$0xff]
        %s1040 = scalar_lea.vmem %s3, 64
        %v1041 = vld [vmem:[%s1040] sm:$0xff]
        %v1042 = vld [vmem:[%s1040 + $0x8] sm:$0xff]
        %v1043 = vld [vmem:[%s1040 + $0x10] sm:$0xff]
        %v1044 = vld [vmem:[%s1040 + $0x18] sm:$0xff]
        %1045 = vmatprep.subr.mxu0 0.0
        %1046 = vmatpush1.msra.mxu0 %v1031
        %1047 = vmatprep.subr.mxu0 0.0
        %1048 = vmatpush1.msra.mxu0 %v1032
        %1049 = vmatprep.subr.mxu0 0.0
        %1050 = vmatpush1.msra.mxu0 %v1033
        %1051 = vmatprep.subr.mxu0 0.0
        %1052 = vmatpush1.msra.mxu0 %v1034
        %1053 = vmatprep.subr.mxu0 0.0
        %1054 = vmatpush1.msra.mxu0 0.0
        %1055 = vmatprep.subr.mxu0 0.0
        %1056 = vmatpush1.msra.mxu0 0.0
        %1057 = vmatprep.subr.mxu0 0.0
        %1058 = vmatpush1.msra.mxu0 0.0
        %1059 = vmatprep.subr.mxu0 0.0
        %1060 = vmatpush1.msra.mxu0 0.0
        %1061 = vmatprep.subr.mxu0 0.0
        %1062 = vmatpush1.msra.mxu0 0.0
        %1063 = vmatprep.subr.mxu0 0.0
        %1064 = vmatpush1.msra.mxu0 0.0
        %1065 = vmatprep.subr.mxu0 0.0
        %1066 = vmatpush1.msra.mxu0 0.0
        %1067 = vmatprep.subr.mxu0 0.0
        %1068 = vmatpush1.msra.mxu0 0.0
        %1069 = vmatprep.subr.mxu0 0.0
        %1070 = vmatpush1.msra.mxu0 0.0
        %1071 = vmatprep.subr.mxu0 0.0
        %1072 = vmatpush1.msra.mxu0 0.0
        %1073 = vmatprep.subr.mxu0 0.0
        %1074 = vmatpush1.msra.mxu0 0.0
        %1075 = vmatprep.subr.mxu0 0.0
        %1076 = vmatpush1.msra.mxu0 0.0
        %1077 = vmatprep.subr.mxu0 0.0
        %1078 = vmatpush1.msra.mxu0 0.0
        %1079 = vmatprep.subr.mxu0 0.0
        %1080 = vmatpush1.msra.mxu0 0.0
        %1081 = vmatprep.subr.mxu0 0.0
        %1082 = vmatpush1.msra.mxu0 0.0
        %1083 = vmatprep.subr.mxu0 0.0
        %1084 = vmatpush1.msra.mxu0 0.0
        %1085 = vmatprep.subr.mxu0 0.0
        %1086 = vmatpush1.msra.mxu0 0.0
        %1087 = vmatprep.subr.mxu0 0.0
        %1088 = vmatpush1.msra.mxu0 0.0
        %1089 = vmatprep.subr.mxu0 0.0
        %1090 = vmatpush1.msra.mxu0 0.0
        %1091 = vmatprep.subr.mxu0 0.0
        %1092 = vmatpush1.msra.mxu0 0.0
        %1093 = vmatprep.subr.mxu0 0.0
        %1094 = vmatpush1.msra.mxu0 0.0
        %1095 = vmatprep.subr.mxu0 0.0
        %1096 = vmatpush1.msra.mxu0 0.0
        %1097 = vmatprep.subr.mxu0 0.0
        %1098 = vmatpush1.msra.mxu0 0.0
        %1099 = vmatprep.subr.mxu0 0.0
        %1100 = vmatpush1.msra.mxu0 0.0
        %1101 = vmatprep.subr.mxu0 0.0
        %1102 = vmatpush1.msra.mxu0 0.0
        %1103 = vmatprep.subr.mxu0 0.0
        %1104 = vmatpush1.msra.mxu0 0.0
        %1105 = vmatprep.subr.mxu0 0.0
        %1106 = vmatpush1.msra.mxu0 0.0
        %1107 = vmatprep.subr.mxu0 0.0
        %1108 = vmatpush1.msra.mxu0 0.0
        %1109 = vmatprep.mubr.f32.mxu0 0.0
        %1110 = vmatmul.mubr.f32.gmra.mrb[0].mxu0 %v262
        %v1111 = vpop.f32.mrb[0].mxu0
        %v1112 = vadd.f32 0.0, %v1111
        %v1113 = vpop.f32.mrb[0].mxu0
        %1114 = vdwg.mxu0
        %1115 = vmatprep.subr.mxu0 0.0
        %1116 = vmatpush1.msra.mxu0 %v1036
        %1117 = vmatprep.subr.mxu0 0.0
        %1118 = vmatpush1.msra.mxu0 %v1037
        %1119 = vmatprep.subr.mxu0 0.0
        %1120 = vmatpush1.msra.mxu0 %v1038
        %1121 = vmatprep.subr.mxu0 0.0
        %1122 = vmatpush1.msra.mxu0 %v1039
        %1123 = vmatprep.subr.mxu0 0.0
        %1124 = vmatpush1.msra.mxu0 0.0
        %1125 = vmatprep.subr.mxu0 0.0
        %1126 = vmatpush1.msra.mxu0 0.0
        %1127 = vmatprep.subr.mxu0 0.0
        %1128 = vmatpush1.msra.mxu0 0.0
        %1129 = vmatprep.subr.mxu0 0.0
        %1130 = vmatpush1.msra.mxu0 0.0
        %1131 = vmatprep.subr.mxu0 0.0
        %1132 = vmatpush1.msra.mxu0 0.0
        %1133 = vmatprep.subr.mxu0 0.0
        %1134 = vmatpush1.msra.mxu0 0.0
        %1135 = vmatprep.subr.mxu0 0.0
        %1136 = vmatpush1.msra.mxu0 0.0
        %1137 = vmatprep.subr.mxu0 0.0
        %1138 = vmatpush1.msra.mxu0 0.0
        %1139 = vmatprep.subr.mxu0 0.0
        %1140 = vmatpush1.msra.mxu0 0.0
        %1141 = vmatprep.subr.mxu0 0.0
        %1142 = vmatpush1.msra.mxu0 0.0
        %1143 = vmatprep.subr.mxu0 0.0
        %1144 = vmatpush1.msra.mxu0 0.0
        %1145 = vmatprep.subr.mxu0 0.0
        %1146 = vmatpush1.msra.mxu0 0.0
        %1147 = vmatprep.subr.mxu0 0.0
        %1148 = vmatpush1.msra.mxu0 0.0
        %1149 = vmatprep.subr.mxu0 0.0
        %1150 = vmatpush1.msra.mxu0 0.0
        %1151 = vmatprep.subr.mxu0 0.0
        %1152 = vmatpush1.msra.mxu0 0.0
        %1153 = vmatprep.subr.mxu0 0.0
        %1154 = vmatpush1.msra.mxu0 0.0
        %1155 = vmatprep.subr.mxu0 0.0
        %1156 = vmatpush1.msra.mxu0 0.0
        %1157 = vmatprep.subr.mxu0 0.0
        %1158 = vmatpush1.msra.mxu0 0.0
        %1159 = vmatprep.subr.mxu0 0.0
        %1160 = vmatpush1.msra.mxu0 0.0
        %1161 = vmatprep.subr.mxu0 0.0
        %1162 = vmatpush1.msra.mxu0 0.0
        %1163 = vmatprep.subr.mxu0 0.0
        %1164 = vmatpush1.msra.mxu0 0.0
        %1165 = vmatprep.subr.mxu0 0.0
        %1166 = vmatpush1.msra.mxu0 0.0
        %1167 = vmatprep.subr.mxu0 0.0
        %1168 = vmatpush1.msra.mxu0 0.0
        %1169 = vmatprep.subr.mxu0 0.0
        %1170 = vmatpush1.msra.mxu0 0.0
        %1171 = vmatprep.subr.mxu0 0.0
        %1172 = vmatpush1.msra.mxu0 0.0
        %1173 = vmatprep.subr.mxu0 0.0
        %1174 = vmatpush1.msra.mxu0 0.0
        %1175 = vmatprep.subr.mxu0 0.0
        %1176 = vmatpush1.msra.mxu0 0.0
        %1177 = vmatprep.subr.mxu0 0.0
        %1178 = vmatpush1.msra.mxu0 0.0
        %1179 = vmatprep.mubr.f32.mxu0 0.0
        %1180 = vmatmul.mubr.f32.gmra.mrb[0].mxu0 %v262
        %v1181 = vpop.f32.mrb[0].mxu0
        %v1182 = vadd.f32 0.0, %v1181
        %v1183 = vpop.f32.mrb[0].mxu0
        %1184 = vdwg.mxu0
        %1185 = vmatprep.subr.mxu0 0.0
        %1186 = vmatpush1.msra.mxu0 %v1041
        %1187 = vmatprep.subr.mxu0 0.0
        %1188 = vmatpush1.msra.mxu0 %v1042
        %1189 = vmatprep.subr.mxu0 0.0
        %1190 = vmatpush1.msra.mxu0 %v1043
        %1191 = vmatprep.subr.mxu0 0.0
        %1192 = vmatpush1.msra.mxu0 %v1044
        %1193 = vmatprep.subr.mxu0 0.0
        %1194 = vmatpush1.msra.mxu0 0.0
        %1195 = vmatprep.subr.mxu0 0.0
        %1196 = vmatpush1.msra.mxu0 0.0
        %1197 = vmatprep.subr.mxu0 0.0
        %1198 = vmatpush1.msra.mxu0 0.0
        %1199 = vmatprep.subr.mxu0 0.0
        %1200 = vmatpush1.msra.mxu0 0.0
        %1201 = vmatprep.subr.mxu0 0.0
        %1202 = vmatpush1.msra.mxu0 0.0
        %1203 = vmatprep.subr.mxu0 0.0
        %1204 = vmatpush1.msra.mxu0 0.0
        %1205 = vmatprep.subr.mxu0 0.0
        %1206 = vmatpush1.msra.mxu0 0.0
        %1207 = vmatprep.subr.mxu0 0.0
        %1208 = vmatpush1.msra.mxu0 0.0
        %1209 = vmatprep.subr.mxu0 0.0
        %1210 = vmatpush1.msra.mxu0 0.0
        %1211 = vmatprep.subr.mxu0 0.0
        %1212 = vmatpush1.msra.mxu0 0.0
        %1213 = vmatprep.subr.mxu0 0.0
        %1214 = vmatpush1.msra.mxu0 0.0
        %1215 = vmatprep.subr.mxu0 0.0
        %1216 = vmatpush1.msra.mxu0 0.0
        %1217 = vmatprep.subr.mxu0 0.0
        %1218 = vmatpush1.msra.mxu0 0.0
        %1219 = vmatprep.subr.mxu0 0.0
        %1220 = vmatpush1.msra.mxu0 0.0
        %1221 = vmatprep.subr.mxu0 0.0
        %1222 = vmatpush1.msra.mxu0 0.0
        %1223 = vmatprep.subr.mxu0 0.0
        %1224 = vmatpush1.msra.mxu0 0.0
        %1225 = vmatprep.subr.mxu0 0.0
        %1226 = vmatpush1.msra.mxu0 0.0
        %1227 = vmatprep.subr.mxu0 0.0
        %1228 = vmatpush1.msra.mxu0 0.0
        %1229 = vmatprep.subr.mxu0 0.0
        %1230 = vmatpush1.msra.mxu0 0.0
        %1231 = vmatprep.subr.mxu0 0.0
        %1232 = vmatpush1.msra.mxu0 0.0
        %1233 = vmatprep.subr.mxu0 0.0
        %1234 = vmatpush1.msra.mxu0 0.0
        %1235 = vmatprep.subr.mxu0 0.0
        %1236 = vmatpush1.msra.mxu0 0.0
        %1237 = vmatprep.subr.mxu0 0.0
        %1238 = vmatpush1.msra.mxu0 0.0
        %1239 = vmatprep.subr.mxu0 0.0
        %1240 = vmatpush1.msra.mxu0 0.0
        %1241 = vmatprep.subr.mxu0 0.0
        %1242 = vmatpush1.msra.mxu0 0.0
        %1243 = vmatprep.subr.mxu0 0.0
        %1244 = vmatpush1.msra.mxu0 0.0
        %1245 = vmatprep.subr.mxu0 0.0
        %1246 = vmatpush1.msra.mxu0 0.0
        %1247 = vmatprep.subr.mxu0 0.0
        %1248 = vmatpush1.msra.mxu0 0.0
        %1249 = vmatprep.mubr.f32.mxu0 0.0
        %1250 = vmatmul.mubr.f32.gmra.mrb[0].mxu0 %v262
        %v1251 = vpop.f32.mrb[0].mxu0
        %v1252 = vadd.f32 0.0, %v1251
        %v1253 = vpop.f32.mrb[0].mxu0
        %1254 = vdwg.mxu0
        %v1256 = vsel %vm474, %v1112, 0
        %v1259 = vsel %vm474, %v1182, 0
        %1261 = vmatprep.subr.mxu0 0.0
        %1262 = vmatpush1.xpose.msra.mxu0 %v1259
        %1263 = vmatprep.subr.mxu0 0.0
        %1264 = vmatpush1.xpose.msra.mxu0 0.0
        %1265 = vmatprep.subr.mxu0 0.0
        %1266 = vmatpush1.xpose.msra.mxu0 0.0
        %1267 = vmatprep.subr.mxu0 0.0
        %1268 = vmatpush1.xpose.msra.mxu0 0.0
        %1269 = vmatprep.subr.mxu0 0.0
        %1270 = vmatpush1.xpose.msra.mxu0 0.0
        %1271 = vmatprep.subr.mxu0 0.0
        %1272 = vmatpush1.xpose.msra.mxu0 0.0
        %1273 = vmatprep.subr.mxu0 0.0
        %1274 = vmatpush1.xpose.msra.mxu0 0.0
        %1275 = vmatprep.subr.mxu0 0.0
        %1276 = vmatpush1.xpose.msra.mxu0 0.0
        %1277 = vmatprep.subr.mxu0 0.0
        %1278 = vmatpush1.xpose.msra.mxu0 0.0
        %1279 = vmatprep.subr.mxu0 0.0
        %1280 = vmatpush1.xpose.msra.mxu0 0.0
        %1281 = vmatprep.subr.mxu0 0.0
        %1282 = vmatpush1.xpose.msra.mxu0 0.0
        %1283 = vmatprep.subr.mxu0 0.0
        %1284 = vmatpush1.xpose.msra.mxu0 0.0
        %1285 = vmatprep.subr.mxu0 0.0
        %1286 = vmatpush1.xpose.msra.mxu0 0.0
        %1287 = vmatprep.subr.mxu0 0.0
        %1288 = vmatpush1.xpose.msra.mxu0 0.0
        %1289 = vmatprep.subr.mxu0 0.0
        %1290 = vmatpush1.xpose.msra.mxu0 0.0
        %1291 = vmatprep.subr.mxu0 0.0
        %1292 = vmatpush1.xpose.msra.mxu0 0.0
        %1293 = vmatprep.subr.mxu0 0.0
        %1294 = vmatpush1.xpose.msra.mxu0 0.0
        %1295 = vmatprep.subr.mxu0 0.0
        %1296 = vmatpush1.xpose.msra.mxu0 0.0
        %1297 = vmatprep.subr.mxu0 0.0
        %1298 = vmatpush1.xpose.msra.mxu0 0.0
        %1299 = vmatprep.subr.mxu0 0.0
        %1300 = vmatpush1.xpose.msra.mxu0 0.0
        %1301 = vmatprep.subr.mxu0 0.0
        %1302 = vmatpush1.xpose.msra.mxu0 0.0
        %1303 = vmatprep.subr.mxu0 0.0
        %1304 = vmatpush1.xpose.msra.mxu0 0.0
        %1305 = vmatprep.subr.mxu0 0.0
        %1306 = vmatpush1.xpose.msra.mxu0 0.0
        %1307 = vmatprep.subr.mxu0 0.0
        %1308 = vmatpush1.xpose.msra.mxu0 0.0
        %1309 = vmatprep.subr.mxu0 0.0
        %1310 = vmatpush1.xpose.msra.mxu0 0.0
        %1311 = vmatprep.subr.mxu0 0.0
        %1312 = vmatpush1.xpose.msra.mxu0 0.0
        %1313 = vmatprep.subr.mxu0 0.0
        %1314 = vmatpush1.xpose.msra.mxu0 0.0
        %1315 = vmatprep.subr.mxu0 0.0
        %1316 = vmatpush1.xpose.msra.mxu0 0.0
        %1317 = vmatprep.subr.mxu0 0.0
        %1318 = vmatpush1.xpose.msra.mxu0 0.0
        %1319 = vmatprep.subr.mxu0 0.0
        %1320 = vmatpush1.xpose.msra.mxu0 0.0
        %1321 = vmatprep.subr.mxu0 0.0
        %1322 = vmatpush1.xpose.msra.mxu0 0.0
        %1323 = vmatprep.subr.mxu0 0.0
        %1324 = vmatpush1.xpose.msra.mxu0 0.0
        %1325 = vmatprep.mubr.f32.mxu0 0.0
        %1326 = vmatmul.mubr.f32.gmra.mrb[0].mxu0 %v1256
        %v1327 = vpop.f32.mrb[0].mxu0
        %v1328 = vadd.f32 0.0, %v1327
        %v1329 = vpop.f32.mrb[0].mxu0
        %1330 = vdwg.mxu0
        %v1331 = vmul.f32 %v1328, 0.5
        %v1332 = vsel %vm552, %v1331, -inf
        %1333 = vmax.xlane.f32.xlu0 %v1332
        %v1334 = vpop.xlane.xlu0 %1333
        %v1335 = vsub.f32 %v1331, %v1334
        %v1336 = vmul.f32 %v1335, 1.442695
        %v1337 = vpow.pop %v1336
        %v1338 = vsel %vm552, %v1337, 0.0
        %1339 = vadd.xlane.f32.xlu0 %v1338
        %v1340 = vpop.xlane.xlu0 %1339
        %v1341 = vrcp.pop %v1340
        %v1342 = vmul.f32 %v1337, %v1341
        %v1344 = vsel %vm552, %v1342, 0
        %1346 = vmatprep.subr.mxu0 0.0
        %1347 = vmatpush1.msra.mxu0 %v1252
        %1348 = vmatprep.subr.mxu0 0.0
        %1349 = vmatpush1.msra.mxu0 0.0
        %1350 = vmatprep.subr.mxu0 0.0
        %1351 = vmatpush1.msra.mxu0 0.0
        %1352 = vmatprep.subr.mxu0 0.0
        %1353 = vmatpush1.msra.mxu0 0.0
        %1354 = vmatprep.subr.mxu0 0.0
        %1355 = vmatpush1.msra.mxu0 0.0
        %1356 = vmatprep.subr.mxu0 0.0
        %1357 = vmatpush1.msra.mxu0 0.0
        %1358 = vmatprep.subr.mxu0 0.0
        %1359 = vmatpush1.msra.mxu0 0.0
        %1360 = vmatprep.subr.mxu0 0.0
        %1361 = vmatpush1.msra.mxu0 0.0
        %1362 = vmatprep.subr.mxu0 0.0
        %1363 = vmatpush1.msra.mxu0 0.0
        %1364 = vmatprep.subr.mxu0 0.0
        %1365 = vmatpush1.msra.mxu0 0.0
        %1366 = vmatprep.subr.mxu0 0.0
        %1367 = vmatpush1.msra.mxu0 0.0
        %1368 = vmatprep.subr.mxu0 0.0
        %1369 = vmatpush1.msra.mxu0 0.0
        %1370 = vmatprep.subr.mxu0 0.0
        %1371 = vmatpush1.msra.mxu0 0.0
        %1372 = vmatprep.subr.mxu0 0.0
        %1373 = vmatpush1.msra.mxu0 0.0
        %1374 = vmatprep.subr.mxu0 0.0
        %1375 = vmatpush1.msra.mxu0 0.0
        %1376 = vmatprep.subr.mxu0 0.0
        %1377 = vmatpush1.msra.mxu0 0.0
        %1378 = vmatprep.subr.mxu0 0.0
        %1379 = vmatpush1.msra.mxu0 0.0
        %1380 = vmatprep.subr.mxu0 0.0
        %1381 = vmatpush1.msra.mxu0 0.0
        %1382 = vmatprep.subr.mxu0 0.0
        %1383 = vmatpush1.msra.mxu0 0.0
        %1384 = vmatprep.subr.mxu0 0.0
        %1385 = vmatpush1.msra.mxu0 0.0
        %1386 = vmatprep.subr.mxu0 0.0
        %1387 = vmatpush1.msra.mxu0 0.0
        %1388 = vmatprep.subr.mxu0 0.0
        %1389 = vmatpush1.msra.mxu0 0.0
        %1390 = vmatprep.subr.mxu0 0.0
        %1391 = vmatpush1.msra.mxu0 0.0
        %1392 = vmatprep.subr.mxu0 0.0
        %1393 = vmatpush1.msra.mxu0 0.0
        %1394 = vmatprep.subr.mxu0 0.0
        %1395 = vmatpush1.msra.mxu0 0.0
        %1396 = vmatprep.subr.mxu0 0.0
        %1397 = vmatpush1.msra.mxu0 0.0
        %1398 = vmatprep.subr.mxu0 0.0
        %1399 = vmatpush1.msra.mxu0 0.0
        %1400 = vmatprep.subr.mxu0 0.0
        %1401 = vmatpush1.msra.mxu0 0.0
        %1402 = vmatprep.subr.mxu0 0.0
        %1403 = vmatpush1.msra.mxu0 0.0
        %1404 = vmatprep.subr.mxu0 0.0
        %1405 = vmatpush1.msra.mxu0 0.0
        %1406 = vmatprep.subr.mxu0 0.0
        %1407 = vmatpush1.msra.mxu0 0.0
        %1408 = vmatprep.subr.mxu0 0.0
        %1409 = vmatpush1.msra.mxu0 0.0
        %1410 = vmatprep.mubr.f32.mxu0 0.0
        %1411 = vmatmul.mubr.f32.gmra.mrb[0].mxu0 %v1344
        %v1412 = vpop.f32.mrb[0].mxu0
        %v1413 = vadd.f32 0.0, %v1412
        %v1414 = vpop.f32.mrb[0].mxu0
        %1415 = vdwg.mxu0
        %1417 = vrot.lane.b32.xlu0 %v1413, 8
        %v1418 = vpop.permute.xlu0 %1417
        %vm1420 = vcmask 97344
        %1421 = vst.msk [vmem:[#allocation2] sm:$0xff] %vm1420, %v1418
        %s1422 = scalar_lea.vmem %s1, 96
        %v1423 = vld [vmem:[%s1422] sm:$0xff]
        %v1424 = vld [vmem:[%s1422 + $0x8] sm:$0xff]
        %v1425 = vld [vmem:[%s1422 + $0x10] sm:$0xff]
        %v1426 = vld [vmem:[%s1422 + $0x18] sm:$0xff]
        %s1427 = scalar_lea.vmem %s2, 96
        %v1428 = vld [vmem:[%s1427] sm:$0xff]
        %v1429 = vld [vmem:[%s1427 + $0x8] sm:$0xff]
        %v1430 = vld [vmem:[%s1427 + $0x10] sm:$0xff]
        %v1431 = vld [vmem:[%s1427 + $0x18] sm:$0xff]
        %s1432 = scalar_lea.vmem %s3, 96
        %v1433 = vld [vmem:[%s1432] sm:$0xff]
        %v1434 = vld [vmem:[%s1432 + $0x8] sm:$0xff]
        %v1435 = vld [vmem:[%s1432 + $0x10] sm:$0xff]
        %v1436 = vld [vmem:[%s1432 + $0x18] sm:$0xff]
        %1437 = vmatprep.subr.mxu0 0.0
        %1438 = vmatpush1.msra.mxu0 %v1423
        %1439 = vmatprep.subr.mxu0 0.0
        %1440 = vmatpush1.msra.mxu0 %v1424
        %1441 = vmatprep.subr.mxu0 0.0
        %1442 = vmatpush1.msra.mxu0 %v1425
        %1443 = vmatprep.subr.mxu0 0.0
        %1444 = vmatpush1.msra.mxu0 %v1426
        %1445 = vmatprep.subr.mxu0 0.0
        %1446 = vmatpush1.msra.mxu0 0.0
        %1447 = vmatprep.subr.mxu0 0.0
        %1448 = vmatpush1.msra.mxu0 0.0
        %1449 = vmatprep.subr.mxu0 0.0
        %1450 = vmatpush1.msra.mxu0 0.0
        %1451 = vmatprep.subr.mxu0 0.0
        %1452 = vmatpush1.msra.mxu0 0.0
        %1453 = vmatprep.subr.mxu0 0.0
        %1454 = vmatpush1.msra.mxu0 0.0
        %1455 = vmatprep.subr.mxu0 0.0
        %1456 = vmatpush1.msra.mxu0 0.0
        %1457 = vmatprep.subr.mxu0 0.0
        %1458 = vmatpush1.msra.mxu0 0.0
        %1459 = vmatprep.subr.mxu0 0.0
        %1460 = vmatpush1.msra.mxu0 0.0
        %1461 = vmatprep.subr.mxu0 0.0
        %1462 = vmatpush1.msra.mxu0 0.0
        %1463 = vmatprep.subr.mxu0 0.0
        %1464 = vmatpush1.msra.mxu0 0.0
        %1465 = vmatprep.subr.mxu0 0.0
        %1466 = vmatpush1.msra.mxu0 0.0
        %1467 = vmatprep.subr.mxu0 0.0
        %1468 = vmatpush1.msra.mxu0 0.0
        %1469 = vmatprep.subr.mxu0 0.0
        %1470 = vmatpush1.msra.mxu0 0.0
        %1471 = vmatprep.subr.mxu0 0.0
        %1472 = vmatpush1.msra.mxu0 0.0
        %1473 = vmatprep.subr.mxu0 0.0
        %1474 = vmatpush1.msra.mxu0 0.0
        %1475 = vmatprep.subr.mxu0 0.0
        %1476 = vmatpush1.msra.mxu0 0.0
        %1477 = vmatprep.subr.mxu0 0.0
        %1478 = vmatpush1.msra.mxu0 0.0
        %1479 = vmatprep.subr.mxu0 0.0
        %1480 = vmatpush1.msra.mxu0 0.0
        %1481 = vmatprep.subr.mxu0 0.0
        %1482 = vmatpush1.msra.mxu0 0.0
        %1483 = vmatprep.subr.mxu0 0.0
        %1484 = vmatpush1.msra.mxu0 0.0
        %1485 = vmatprep.subr.mxu0 0.0
        %1486 = vmatpush1.msra.mxu0 0.0
        %1487 = vmatprep.subr.mxu0 0.0
        %1488 = vmatpush1.msra.mxu0 0.0
        %1489 = vmatprep.subr.mxu0 0.0
        %1490 = vmatpush1.msra.mxu0 0.0
        %1491 = vmatprep.subr.mxu0 0.0
        %1492 = vmatpush1.msra.mxu0 0.0
        %1493 = vmatprep.subr.mxu0 0.0
        %1494 = vmatpush1.msra.mxu0 0.0
        %1495 = vmatprep.subr.mxu0 0.0
        %1496 = vmatpush1.msra.mxu0 0.0
        %1497 = vmatprep.subr.mxu0 0.0
        %1498 = vmatpush1.msra.mxu0 0.0
        %1499 = vmatprep.subr.mxu0 0.0
        %1500 = vmatpush1.msra.mxu0 0.0
        %1501 = vmatprep.mubr.f32.mxu0 0.0
        %1502 = vmatmul.mubr.f32.gmra.mrb[0].mxu0 %v262
        %v1503 = vpop.f32.mrb[0].mxu0
        %v1504 = vadd.f32 0.0, %v1503
        %v1505 = vpop.f32.mrb[0].mxu0
        %1506 = vdwg.mxu0
        %1507 = vmatprep.subr.mxu0 0.0
        %1508 = vmatpush1.msra.mxu0 %v1428
        %1509 = vmatprep.subr.mxu0 0.0
        %1510 = vmatpush1.msra.mxu0 %v1429
        %1511 = vmatprep.subr.mxu0 0.0
        %1512 = vmatpush1.msra.mxu0 %v1430
        %1513 = vmatprep.subr.mxu0 0.0
        %1514 = vmatpush1.msra.mxu0 %v1431
        %1515 = vmatprep.subr.mxu0 0.0
        %1516 = vmatpush1.msra.mxu0 0.0
        %1517 = vmatprep.subr.mxu0 0.0
        %1518 = vmatpush1.msra.mxu0 0.0
        %1519 = vmatprep.subr.mxu0 0.0
        %1520 = vmatpush1.msra.mxu0 0.0
        %1521 = vmatprep.subr.mxu0 0.0
        %1522 = vmatpush1.msra.mxu0 0.0
        %1523 = vmatprep.subr.mxu0 0.0
        %1524 = vmatpush1.msra.mxu0 0.0
        %1525 = vmatprep.subr.mxu0 0.0
        %1526 = vmatpush1.msra.mxu0 0.0
        %1527 = vmatprep.subr.mxu0 0.0
        %1528 = vmatpush1.msra.mxu0 0.0
        %1529 = vmatprep.subr.mxu0 0.0
        %1530 = vmatpush1.msra.mxu0 0.0
        %1531 = vmatprep.subr.mxu0 0.0
        %1532 = vmatpush1.msra.mxu0 0.0
        %1533 = vmatprep.subr.mxu0 0.0
        %1534 = vmatpush1.msra.mxu0 0.0
        %1535 = vmatprep.subr.mxu0 0.0
        %1536 = vmatpush1.msra.mxu0 0.0
        %1537 = vmatprep.subr.mxu0 0.0
        %1538 = vmatpush1.msra.mxu0 0.0
        %1539 = vmatprep.subr.mxu0 0.0
        %1540 = vmatpush1.msra.mxu0 0.0
        %1541 = vmatprep.subr.mxu0 0.0
        %1542 = vmatpush1.msra.mxu0 0.0
        %1543 = vmatprep.subr.mxu0 0.0
        %1544 = vmatpush1.msra.mxu0 0.0
        %1545 = vmatprep.subr.mxu0 0.0
        %1546 = vmatpush1.msra.mxu0 0.0
        %1547 = vmatprep.subr.mxu0 0.0
        %1548 = vmatpush1.msra.mxu0 0.0
        %1549 = vmatprep.subr.mxu0 0.0
        %1550 = vmatpush1.msra.mxu0 0.0
        %1551 = vmatprep.subr.mxu0 0.0
        %1552 = vmatpush1.msra.mxu0 0.0
        %1553 = vmatprep.subr.mxu0 0.0
        %1554 = vmatpush1.msra.mxu0 0.0
        %1555 = vmatprep.subr.mxu0 0.0
        %1556 = vmatpush1.msra.mxu0 0.0
        %1557 = vmatprep.subr.mxu0 0.0
        %1558 = vmatpush1.msra.mxu0 0.0
        %1559 = vmatprep.subr.mxu0 0.0
        %1560 = vmatpush1.msra.mxu0 0.0
        %1561 = vmatprep.subr.mxu0 0.0
        %1562 = vmatpush1.msra.mxu0 0.0
        %1563 = vmatprep.subr.mxu0 0.0
        %1564 = vmatpush1.msra.mxu0 0.0
        %1565 = vmatprep.subr.mxu0 0.0
        %1566 = vmatpush1.msra.mxu0 0.0
        %1567 = vmatprep.subr.mxu0 0.0
        %1568 = vmatpush1.msra.mxu0 0.0
        %1569 = vmatprep.subr.mxu0 0.0
        %1570 = vmatpush1.msra.mxu0 0.0
        %1571 = vmatprep.mubr.f32.mxu0 0.0
        %1572 = vmatmul.mubr.f32.gmra.mrb[0].mxu0 %v262
        %v1573 = vpop.f32.mrb[0].mxu0
        %v1574 = vadd.f32 0.0, %v1573
        %v1575 = vpop.f32.mrb[0].mxu0
        %1576 = vdwg.mxu0
        %1577 = vmatprep.subr.mxu0 0.0
        %1578 = vmatpush1.msra.mxu0 %v1433
        %1579 = vmatprep.subr.mxu0 0.0
        %1580 = vmatpush1.msra.mxu0 %v1434
        %1581 = vmatprep.subr.mxu0 0.0
        %1582 = vmatpush1.msra.mxu0 %v1435
        %1583 = vmatprep.subr.mxu0 0.0
        %1584 = vmatpush1.msra.mxu0 %v1436
        %1585 = vmatprep.subr.mxu0 0.0
        %1586 = vmatpush1.msra.mxu0 0.0
        %1587 = vmatprep.subr.mxu0 0.0
        %1588 = vmatpush1.msra.mxu0 0.0
        %1589 = vmatprep.subr.mxu0 0.0
        %1590 = vmatpush1.msra.mxu0 0.0
        %1591 = vmatprep.subr.mxu0 0.0
        %1592 = vmatpush1.msra.mxu0 0.0
        %1593 = vmatprep.subr.mxu0 0.0
        %1594 = vmatpush1.msra.mxu0 0.0
        %1595 = vmatprep.subr.mxu0 0.0
        %1596 = vmatpush1.msra.mxu0 0.0
        %1597 = vmatprep.subr.mxu0 0.0
        %1598 = vmatpush1.msra.mxu0 0.0
        %1599 = vmatprep.subr.mxu0 0.0
        %1600 = vmatpush1.msra.mxu0 0.0
        %1601 = vmatprep.subr.mxu0 0.0
        %1602 = vmatpush1.msra.mxu0 0.0
        %1603 = vmatprep.subr.mxu0 0.0
        %1604 = vmatpush1.msra.mxu0 0.0
        %1605 = vmatprep.subr.mxu0 0.0
        %1606 = vmatpush1.msra.mxu0 0.0
        %1607 = vmatprep.subr.mxu0 0.0
        %1608 = vmatpush1.msra.mxu0 0.0
        %1609 = vmatprep.subr.mxu0 0.0
        %1610 = vmatpush1.msra.mxu0 0.0
        %1611 = vmatprep.subr.mxu0 0.0
        %1612 = vmatpush1.msra.mxu0 0.0
        %1613 = vmatprep.subr.mxu0 0.0
        %1614 = vmatpush1.msra.mxu0 0.0
        %1615 = vmatprep.subr.mxu0 0.0
        %1616 = vmatpush1.msra.mxu0 0.0
        %1617 = vmatprep.subr.mxu0 0.0
        %1618 = vmatpush1.msra.mxu0 0.0
        %1619 = vmatprep.subr.mxu0 0.0
        %1620 = vmatpush1.msra.mxu0 0.0
        %1621 = vmatprep.subr.mxu0 0.0
        %1622 = vmatpush1.msra.mxu0 0.0
        %1623 = vmatprep.subr.mxu0 0.0
        %1624 = vmatpush1.msra.mxu0 0.0
        %1625 = vmatprep.subr.mxu0 0.0
        %1626 = vmatpush1.msra.mxu0 0.0
        %1627 = vmatprep.subr.mxu0 0.0
        %1628 = vmatpush1.msra.mxu0 0.0
        %1629 = vmatprep.subr.mxu0 0.0
        %1630 = vmatpush1.msra.mxu0 0.0
        %1631 = vmatprep.subr.mxu0 0.0
        %1632 = vmatpush1.msra.mxu0 0.0
        %1633 = vmatprep.subr.mxu0 0.0
        %1634 = vmatpush1.msra.mxu0 0.0
        %1635 = vmatprep.subr.mxu0 0.0
        %1636 = vmatpush1.msra.mxu0 0.0
        %1637 = vmatprep.subr.mxu0 0.0
        %1638 = vmatpush1.msra.mxu0 0.0
        %1639 = vmatprep.subr.mxu0 0.0
        %1640 = vmatpush1.msra.mxu0 0.0
        %1641 = vmatprep.mubr.f32.mxu0 0.0
        %1642 = vmatmul.mubr.f32.gmra.mrb[0].mxu0 %v262
        %v1643 = vpop.f32.mrb[0].mxu0
        %v1644 = vadd.f32 0.0, %v1643
        %v1645 = vpop.f32.mrb[0].mxu0
        %1646 = vdwg.mxu0
        %v1648 = vsel %vm474, %v1504, 0
        %v1651 = vsel %vm474, %v1574, 0
        %1653 = vmatprep.subr.mxu0 0.0
        %1654 = vmatpush1.xpose.msra.mxu0 %v1651
        %1655 = vmatprep.subr.mxu0 0.0
        %1656 = vmatpush1.xpose.msra.mxu0 0.0
        %1657 = vmatprep.subr.mxu0 0.0
        %1658 = vmatpush1.xpose.msra.mxu0 0.0
        %1659 = vmatprep.subr.mxu0 0.0
        %1660 = vmatpush1.xpose.msra.mxu0 0.0
        %1661 = vmatprep.subr.mxu0 0.0
        %1662 = vmatpush1.xpose.msra.mxu0 0.0
        %1663 = vmatprep.subr.mxu0 0.0
        %1664 = vmatpush1.xpose.msra.mxu0 0.0
        %1665 = vmatprep.subr.mxu0 0.0
        %1666 = vmatpush1.xpose.msra.mxu0 0.0
        %1667 = vmatprep.subr.mxu0 0.0
        %1668 = vmatpush1.xpose.msra.mxu0 0.0
        %1669 = vmatprep.subr.mxu0 0.0
        %1670 = vmatpush1.xpose.msra.mxu0 0.0
        %1671 = vmatprep.subr.mxu0 0.0
        %1672 = vmatpush1.xpose.msra.mxu0 0.0
        %1673 = vmatprep.subr.mxu0 0.0
        %1674 = vmatpush1.xpose.msra.mxu0 0.0
        %1675 = vmatprep.subr.mxu0 0.0
        %1676 = vmatpush1.xpose.msra.mxu0 0.0
        %1677 = vmatprep.subr.mxu0 0.0
        %1678 = vmatpush1.xpose.msra.mxu0 0.0
        %1679 = vmatprep.subr.mxu0 0.0
        %1680 = vmatpush1.xpose.msra.mxu0 0.0
        %1681 = vmatprep.subr.mxu0 0.0
        %1682 = vmatpush1.xpose.msra.mxu0 0.0
        %1683 = vmatprep.subr.mxu0 0.0
        %1684 = vmatpush1.xpose.msra.mxu0 0.0
        %1685 = vmatprep.subr.mxu0 0.0
        %1686 = vmatpush1.xpose.msra.mxu0 0.0
        %1687 = vmatprep.subr.mxu0 0.0
        %1688 = vmatpush1.xpose.msra.mxu0 0.0
        %1689 = vmatprep.subr.mxu0 0.0
        %1690 = vmatpush1.xpose.msra.mxu0 0.0
        %1691 = vmatprep.subr.mxu0 0.0
        %1692 = vmatpush1.xpose.msra.mxu0 0.0
        %1693 = vmatprep.subr.mxu0 0.0
        %1694 = vmatpush1.xpose.msra.mxu0 0.0
        %1695 = vmatprep.subr.mxu0 0.0
        %1696 = vmatpush1.xpose.msra.mxu0 0.0
        %1697 = vmatprep.subr.mxu0 0.0
        %1698 = vmatpush1.xpose.msra.mxu0 0.0
        %1699 = vmatprep.subr.mxu0 0.0
        %1700 = vmatpush1.xpose.msra.mxu0 0.0
        %1701 = vmatprep.subr.mxu0 0.0
        %1702 = vmatpush1.xpose.msra.mxu0 0.0
        %1703 = vmatprep.subr.mxu0 0.0
        %1704 = vmatpush1.xpose.msra.mxu0 0.0
        %1705 = vmatprep.subr.mxu0 0.0
        %1706 = vmatpush1.xpose.msra.mxu0 0.0
        %1707 = vmatprep.subr.mxu0 0.0
        %1708 = vmatpush1.xpose.msra.mxu0 0.0
        %1709 = vmatprep.subr.mxu0 0.0
        %1710 = vmatpush1.xpose.msra.mxu0 0.0
        %1711 = vmatprep.subr.mxu0 0.0
        %1712 = vmatpush1.xpose.msra.mxu0 0.0
        %1713 = vmatprep.subr.mxu0 0.0
        %1714 = vmatpush1.xpose.msra.mxu0 0.0
        %1715 = vmatprep.subr.mxu0 0.0
        %1716 = vmatpush1.xpose.msra.mxu0 0.0
        %1717 = vmatprep.mubr.f32.mxu0 0.0
        %1718 = vmatmul.mubr.f32.gmra.mrb[0].mxu0 %v1648
        %v1719 = vpop.f32.mrb[0].mxu0
        %v1720 = vadd.f32 0.0, %v1719
        %v1721 = vpop.f32.mrb[0].mxu0
        %1722 = vdwg.mxu0
        %v1723 = vmul.f32 %v1720, 0.5
        %v1724 = vsel %vm552, %v1723, -inf
        %1725 = vmax.xlane.f32.xlu0 %v1724
        %v1726 = vpop.xlane.xlu0 %1725
        %v1727 = vsub.f32 %v1723, %v1726
        %v1728 = vmul.f32 %v1727, 1.442695
        %v1729 = vpow.pop %v1728
        %v1730 = vsel %vm552, %v1729, 0.0
        %1731 = vadd.xlane.f32.xlu0 %v1730
        %v1732 = vpop.xlane.xlu0 %1731
        %v1733 = vrcp.pop %v1732
        %v1734 = vmul.f32 %v1729, %v1733
        %v1736 = vsel %vm552, %v1734, 0
        %1738 = vmatprep.subr.mxu0 0.0
        %1739 = vmatpush1.msra.mxu0 %v1644
        %1740 = vmatprep.subr.mxu0 0.0
        %1741 = vmatpush1.msra.mxu0 0.0
        %1742 = vmatprep.subr.mxu0 0.0
        %1743 = vmatpush1.msra.mxu0 0.0
        %1744 = vmatprep.subr.mxu0 0.0
        %1745 = vmatpush1.msra.mxu0 0.0
        %1746 = vmatprep.subr.mxu0 0.0
        %1747 = vmatpush1.msra.mxu0 0.0
        %1748 = vmatprep.subr.mxu0 0.0
        %1749 = vmatpush1.msra.mxu0 0.0
        %1750 = vmatprep.subr.mxu0 0.0
        %1751 = vmatpush1.msra.mxu0 0.0
        %1752 = vmatprep.subr.mxu0 0.0
        %1753 = vmatpush1.msra.mxu0 0.0
        %1754 = vmatprep.subr.mxu0 0.0
        %1755 = vmatpush1.msra.mxu0 0.0
        %1756 = vmatprep.subr.mxu0 0.0
        %1757 = vmatpush1.msra.mxu0 0.0
        %1758 = vmatprep.subr.mxu0 0.0
        %1759 = vmatpush1.msra.mxu0 0.0
        %1760 = vmatprep.subr.mxu0 0.0
        %1761 = vmatpush1.msra.mxu0 0.0
        %1762 = vmatprep.subr.mxu0 0.0
        %1763 = vmatpush1.msra.mxu0 0.0
        %1764 = vmatprep.subr.mxu0 0.0
        %1765 = vmatpush1.msra.mxu0 0.0
        %1766 = vmatprep.subr.mxu0 0.0
        %1767 = vmatpush1.msra.mxu0 0.0
        %1768 = vmatprep.subr.mxu0 0.0
        %1769 = vmatpush1.msra.mxu0 0.0
        %1770 = vmatprep.subr.mxu0 0.0
        %1771 = vmatpush1.msra.mxu0 0.0
        %1772 = vmatprep.subr.mxu0 0.0
        %1773 = vmatpush1.msra.mxu0 0.0
        %1774 = vmatprep.subr.mxu0 0.0
        %1775 = vmatpush1.msra.mxu0 0.0
        %1776 = vmatprep.subr.mxu0 0.0
        %1777 = vmatpush1.msra.mxu0 0.0
        %1778 = vmatprep.subr.mxu0 0.0
        %1779 = vmatpush1.msra.mxu0 0.0
        %1780 = vmatprep.subr.mxu0 0.0
        %1781 = vmatpush1.msra.mxu0 0.0
        %1782 = vmatprep.subr.mxu0 0.0
        %1783 = vmatpush1.msra.mxu0 0.0
        %1784 = vmatprep.subr.mxu0 0.0
        %1785 = vmatpush1.msra.mxu0 0.0
        %1786 = vmatprep.subr.mxu0 0.0
        %1787 = vmatpush1.msra.mxu0 0.0
        %1788 = vmatprep.subr.mxu0 0.0
        %1789 = vmatpush1.msra.mxu0 0.0
        %1790 = vmatprep.subr.mxu0 0.0
        %1791 = vmatpush1.msra.mxu0 0.0
        %1792 = vmatprep.subr.mxu0 0.0
        %1793 = vmatpush1.msra.mxu0 0.0
        %1794 = vmatprep.subr.mxu0 0.0
        %1795 = vmatpush1.msra.mxu0 0.0
        %1796 = vmatprep.subr.mxu0 0.0
        %1797 = vmatpush1.msra.mxu0 0.0
        %1798 = vmatprep.subr.mxu0 0.0
        %1799 = vmatpush1.msra.mxu0 0.0
        %1800 = vmatprep.subr.mxu0 0.0
        %1801 = vmatpush1.msra.mxu0 0.0
        %1802 = vmatprep.mubr.f32.mxu0 0.0
        %1803 = vmatmul.mubr.f32.gmra.mrb[0].mxu0 %v1736
        %v1804 = vpop.f32.mrb[0].mxu0
        %v1805 = vadd.f32 0.0, %v1804
        %v1806 = vpop.f32.mrb[0].mxu0
        %1807 = vdwg.mxu0
        %1809 = vrot.lane.b32.xlu0 %v1805, 12
        %v1810 = vpop.permute.xlu0 %1809
        %vm1812 = vcmask 130144
        %1813 = vst.msk [vmem:[#allocation2] sm:$0xff] %vm1812, %v1810
        %s1814 = scalar_lea.vmem %s1, 128
        %v1815 = vld [vmem:[%s1814] sm:$0xff]
        %v1816 = vld [vmem:[%s1814 + $0x8] sm:$0xff]
        %v1817 = vld [vmem:[%s1814 + $0x10] sm:$0xff]
        %v1818 = vld [vmem:[%s1814 + $0x18] sm:$0xff]
        %s1819 = scalar_lea.vmem %s2, 128
        %v1820 = vld [vmem:[%s1819] sm:$0xff]
        %v1821 = vld [vmem:[%s1819 + $0x8] sm:$0xff]
        %v1822 = vld [vmem:[%s1819 + $0x10] sm:$0xff]
        %v1823 = vld [vmem:[%s1819 + $0x18] sm:$0xff]
        %s1824 = scalar_lea.vmem %s3, 128
        %v1825 = vld [vmem:[%s1824] sm:$0xff]
        %v1826 = vld [vmem:[%s1824 + $0x8] sm:$0xff]
        %v1827 = vld [vmem:[%s1824 + $0x10] sm:$0xff]
        %v1828 = vld [vmem:[%s1824 + $0x18] sm:$0xff]
        %1829 = vmatprep.subr.mxu0 0.0
        %1830 = vmatpush1.msra.mxu0 %v1815
        %1831 = vmatprep.subr.mxu0 0.0
        %1832 = vmatpush1.msra.mxu0 %v1816
        %1833 = vmatprep.subr.mxu0 0.0
        %1834 = vmatpush1.msra.mxu0 %v1817
        %1835 = vmatprep.subr.mxu0 0.0
        %1836 = vmatpush1.msra.mxu0 %v1818
        %1837 = vmatprep.subr.mxu0 0.0
        %1838 = vmatpush1.msra.mxu0 0.0
        %1839 = vmatprep.subr.mxu0 0.0
        %1840 = vmatpush1.msra.mxu0 0.0
        %1841 = vmatprep.subr.mxu0 0.0
        %1842 = vmatpush1.msra.mxu0 0.0
        %1843 = vmatprep.subr.mxu0 0.0
        %1844 = vmatpush1.msra.mxu0 0.0
        %1845 = vmatprep.subr.mxu0 0.0
        %1846 = vmatpush1.msra.mxu0 0.0
        %1847 = vmatprep.subr.mxu0 0.0
        %1848 = vmatpush1.msra.mxu0 0.0
        %1849 = vmatprep.subr.mxu0 0.0
        %1850 = vmatpush1.msra.mxu0 0.0
        %1851 = vmatprep.subr.mxu0 0.0
        %1852 = vmatpush1.msra.mxu0 0.0
        %1853 = vmatprep.subr.mxu0 0.0
        %1854 = vmatpush1.msra.mxu0 0.0
        %1855 = vmatprep.subr.mxu0 0.0
        %1856 = vmatpush1.msra.mxu0 0.0
        %1857 = vmatprep.subr.mxu0 0.0
        %1858 = vmatpush1.msra.mxu0 0.0
        %1859 = vmatprep.subr.mxu0 0.0
        %1860 = vmatpush1.msra.mxu0 0.0
        %1861 = vmatprep.subr.mxu0 0.0
        %1862 = vmatpush1.msra.mxu0 0.0
        %1863 = vmatprep.subr.mxu0 0.0
        %1864 = vmatpush1.msra.mxu0 0.0
        %1865 = vmatprep.subr.mxu0 0.0
        %1866 = vmatpush1.msra.mxu0 0.0
        %1867 = vmatprep.subr.mxu0 0.0
        %1868 = vmatpush1.msra.mxu0 0.0
        %1869 = vmatprep.subr.mxu0 0.0
        %1870 = vmatpush1.msra.mxu0 0.0
        %1871 = vmatprep.subr.mxu0 0.0
        %1872 = vmatpush1.msra.mxu0 0.0
        %1873 = vmatprep.subr.mxu0 0.0
        %1874 = vmatpush1.msra.mxu0 0.0
        %1875 = vmatprep.subr.mxu0 0.0
        %1876 = vmatpush1.msra.mxu0 0.0
        %1877 = vmatprep.subr.mxu0 0.0
        %1878 = vmatpush1.msra.mxu0 0.0
        %1879 = vmatprep.subr.mxu0 0.0
        %1880 = vmatpush1.msra.mxu0 0.0
        %1881 = vmatprep.subr.mxu0 0.0
        %1882 = vmatpush1.msra.mxu0 0.0
        %1883 = vmatprep.subr.mxu0 0.0
        %1884 = vmatpush1.msra.mxu0 0.0
        %1885 = vmatprep.subr.mxu0 0.0
        %1886 = vmatpush1.msra.mxu0 0.0
        %1887 = vmatprep.subr.mxu0 0.0
        %1888 = vmatpush1.msra.mxu0 0.0
        %1889 = vmatprep.subr.mxu0 0.0
        %1890 = vmatpush1.msra.mxu0 0.0
        %1891 = vmatprep.subr.mxu0 0.0
        %1892 = vmatpush1.msra.mxu0 0.0
        %1893 = vmatprep.mubr.f32.mxu0 0.0
        %1894 = vmatmul.mubr.f32.gmra.mrb[0].mxu0 %v262
        %v1895 = vpop.f32.mrb[0].mxu0
        %v1896 = vadd.f32 0.0, %v1895
        %v1897 = vpop.f32.mrb[0].mxu0
        %1898 = vdwg.mxu0
        %1899 = vmatprep.subr.mxu0 0.0
        %1900 = vmatpush1.msra.mxu0 %v1820
        %1901 = vmatprep.subr.mxu0 0.0
        %1902 = vmatpush1.msra.mxu0 %v1821
        %1903 = vmatprep.subr.mxu0 0.0
        %1904 = vmatpush1.msra.mxu0 %v1822
        %1905 = vmatprep.subr.mxu0 0.0
        %1906 = vmatpush1.msra.mxu0 %v1823
        %1907 = vmatprep.subr.mxu0 0.0
        %1908 = vmatpush1.msra.mxu0 0.0
        %1909 = vmatprep.subr.mxu0 0.0
        %1910 = vmatpush1.msra.mxu0 0.0
        %1911 = vmatprep.subr.mxu0 0.0
        %1912 = vmatpush1.msra.mxu0 0.0
        %1913 = vmatprep.subr.mxu0 0.0
        %1914 = vmatpush1.msra.mxu0 0.0
        %1915 = vmatprep.subr.mxu0 0.0
        %1916 = vmatpush1.msra.mxu0 0.0
        %1917 = vmatprep.subr.mxu0 0.0
        %1918 = vmatpush1.msra.mxu0 0.0
        %1919 = vmatprep.subr.mxu0 0.0
        %1920 = vmatpush1.msra.mxu0 0.0
        %1921 = vmatprep.subr.mxu0 0.0
        %1922 = vmatpush1.msra.mxu0 0.0
        %1923 = vmatprep.subr.mxu0 0.0
        %1924 = vmatpush1.msra.mxu0 0.0
        %1925 = vmatprep.subr.mxu0 0.0
        %1926 = vmatpush1.msra.mxu0 0.0
        %1927 = vmatprep.subr.mxu0 0.0
        %1928 = vmatpush1.msra.mxu0 0.0
        %1929 = vmatprep.subr.mxu0 0.0
        %1930 = vmatpush1.msra.mxu0 0.0
        %1931 = vmatprep.subr.mxu0 0.0
        %1932 = vmatpush1.msra.mxu0 0.0
        %1933 = vmatprep.subr.mxu0 0.0
        %1934 = vmatpush1.msra.mxu0 0.0
        %1935 = vmatprep.subr.mxu0 0.0
        %1936 = vmatpush1.msra.mxu0 0.0
        %1937 = vmatprep.subr.mxu0 0.0
        %1938 = vmatpush1.msra.mxu0 0.0
        %1939 = vmatprep.subr.mxu0 0.0
        %1940 = vmatpush1.msra.mxu0 0.0
        %1941 = vmatprep.subr.mxu0 0.0
        %1942 = vmatpush1.msra.mxu0 0.0
        %1943 = vmatprep.subr.mxu0 0.0
        %1944 = vmatpush1.msra.mxu0 0.0
        %1945 = vmatprep.subr.mxu0 0.0
        %1946 = vmatpush1.msra.mxu0 0.0
        %1947 = vmatprep.subr.mxu0 0.0
        %1948 = vmatpush1.msra.mxu0 0.0
        %1949 = vmatprep.subr.mxu0 0.0
        %1950 = vmatpush1.msra.mxu0 0.0
        %1951 = vmatprep.subr.mxu0 0.0
        %1952 = vmatpush1.msra.mxu0 0.0
        %1953 = vmatprep.subr.mxu0 0.0
        %1954 = vmatpush1.msra.mxu0 0.0
        %1955 = vmatprep.subr.mxu0 0.0
        %1956 = vmatpush1.msra.mxu0 0.0
        %1957 = vmatprep.subr.mxu0 0.0
        %1958 = vmatpush1.msra.mxu0 0.0
        %1959 = vmatprep.subr.mxu0 0.0
        %1960 = vmatpush1.msra.mxu0 0.0
        %1961 = vmatprep.subr.mxu0 0.0
        %1962 = vmatpush1.msra.mxu0 0.0
        %1963 = vmatprep.mubr.f32.mxu0 0.0
        %1964 = vmatmul.mubr.f32.gmra.mrb[0].mxu0 %v262
        %v1965 = vpop.f32.mrb[0].mxu0
        %v1966 = vadd.f32 0.0, %v1965
        %v1967 = vpop.f32.mrb[0].mxu0
        %1968 = vdwg.mxu0
        %1969 = vmatprep.subr.mxu0 0.0
        %1970 = vmatpush1.msra.mxu0 %v1825
        %1971 = vmatprep.subr.mxu0 0.0
        %1972 = vmatpush1.msra.mxu0 %v1826
        %1973 = vmatprep.subr.mxu0 0.0
        %1974 = vmatpush1.msra.mxu0 %v1827
        %1975 = vmatprep.subr.mxu0 0.0
        %1976 = vmatpush1.msra.mxu0 %v1828
        %1977 = vmatprep.subr.mxu0 0.0
        %1978 = vmatpush1.msra.mxu0 0.0
        %1979 = vmatprep.subr.mxu0 0.0
        %1980 = vmatpush1.msra.mxu0 0.0
        %1981 = vmatprep.subr.mxu0 0.0
        %1982 = vmatpush1.msra.mxu0 0.0
        %1983 = vmatprep.subr.mxu0 0.0
        %1984 = vmatpush1.msra.mxu0 0.0
        %1985 = vmatprep.subr.mxu0 0.0
        %1986 = vmatpush1.msra.mxu0 0.0
        %1987 = vmatprep.subr.mxu0 0.0
        %1988 = vmatpush1.msra.mxu0 0.0
        %1989 = vmatprep.subr.mxu0 0.0
        %1990 = vmatpush1.msra.mxu0 0.0
        %1991 = vmatprep.subr.mxu0 0.0
        %1992 = vmatpush1.msra.mxu0 0.0
        %1993 = vmatprep.subr.mxu0 0.0
        %1994 = vmatpush1.msra.mxu0 0.0
        %1995 = vmatprep.subr.mxu0 0.0
        %1996 = vmatpush1.msra.mxu0 0.0
        %1997 = vmatprep.subr.mxu0 0.0
        %1998 = vmatpush1.msra.mxu0 0.0
        %1999 = vmatprep.subr.mxu0 0.0
        %2000 = vmatpush1.msra.mxu0 0.0
        %2001 = vmatprep.subr.mxu0 0.0
        %2002 = vmatpush1.msra.mxu0 0.0
        %2003 = vmatprep.subr.mxu0 0.0
        %2004 = vmatpush1.msra.mxu0 0.0
        %2005 = vmatprep.subr.mxu0 0.0
        %2006 = vmatpush1.msra.mxu0 0.0
        %2007 = vmatprep.subr.mxu0 0.0
        %2008 = vmatpush1.msra.mxu0 0.0
        %2009 = vmatprep.subr.mxu0 0.0
        %2010 = vmatpush1.msra.mxu0 0.0
        %2011 = vmatprep.subr.mxu0 0.0
        %2012 = vmatpush1.msra.mxu0 0.0
        %2013 = vmatprep.subr.mxu0 0.0
        %2014 = vmatpush1.msra.mxu0 0.0
        %2015 = vmatprep.subr.mxu0 0.0
        %2016 = vmatpush1.msra.mxu0 0.0
        %2017 = vmatprep.subr.mxu0 0.0
        %2018 = vmatpush1.msra.mxu0 0.0
        %2019 = vmatprep.subr.mxu0 0.0
        %2020 = vmatpush1.msra.mxu0 0.0
        %2021 = vmatprep.subr.mxu0 0.0
        %2022 = vmatpush1.msra.mxu0 0.0
        %2023 = vmatprep.subr.mxu0 0.0
        %2024 = vmatpush1.msra.mxu0 0.0
        %2025 = vmatprep.subr.mxu0 0.0
        %2026 = vmatpush1.msra.mxu0 0.0
        %2027 = vmatprep.subr.mxu0 0.0
        %2028 = vmatpush1.msra.mxu0 0.0
        %2029 = vmatprep.subr.mxu0 0.0
        %2030 = vmatpush1.msra.mxu0 0.0
        %2031 = vmatprep.subr.mxu0 0.0
        %2032 = vmatpush1.msra.mxu0 0.0
        %2033 = vmatprep.mubr.f32.mxu0 0.0
        %2034 = vmatmul.mubr.f32.gmra.mrb[0].mxu0 %v262
        %v2035 = vpop.f32.mrb[0].mxu0
        %v2036 = vadd.f32 0.0, %v2035
        %v2037 = vpop.f32.mrb[0].mxu0
        %2038 = vdwg.mxu0
        %v2040 = vsel %vm474, %v1896, 0
        %v2043 = vsel %vm474, %v1966, 0
        %2045 = vmatprep.subr.mxu0 0.0
        %2046 = vmatpush1.xpose.msra.mxu0 %v2043
        %2047 = vmatprep.subr.mxu0 0.0
        %2048 = vmatpush1.xpose.msra.mxu0 0.0
        %2049 = vmatprep.subr.mxu0 0.0
        %2050 = vmatpush1.xpose.msra.mxu0 0.0
        %2051 = vmatprep.subr.mxu0 0.0
        %2052 = vmatpush1.xpose.msra.mxu0 0.0
        %2053 = vmatprep.subr.mxu0 0.0
        %2054 = vmatpush1.xpose.msra.mxu0 0.0
        %2055 = vmatprep.subr.mxu0 0.0
        %2056 = vmatpush1.xpose.msra.mxu0 0.0
        %2057 = vmatprep.subr.mxu0 0.0
        %2058 = vmatpush1.xpose.msra.mxu0 0.0
        %2059 = vmatprep.subr.mxu0 0.0
        %2060 = vmatpush1.xpose.msra.mxu0 0.0
        %2061 = vmatprep.subr.mxu0 0.0
        %2062 = vmatpush1.xpose.msra.mxu0 0.0
        %2063 = vmatprep.subr.mxu0 0.0
        %2064 = vmatpush1.xpose.msra.mxu0 0.0
        %2065 = vmatprep.subr.mxu0 0.0
        %2066 = vmatpush1.xpose.msra.mxu0 0.0
        %2067 = vmatprep.subr.mxu0 0.0
        %2068 = vmatpush1.xpose.msra.mxu0 0.0
        %2069 = vmatprep.subr.mxu0 0.0
        %2070 = vmatpush1.xpose.msra.mxu0 0.0
        %2071 = vmatprep.subr.mxu0 0.0
        %2072 = vmatpush1.xpose.msra.mxu0 0.0
        %2073 = vmatprep.subr.mxu0 0.0
        %2074 = vmatpush1.xpose.msra.mxu0 0.0
        %2075 = vmatprep.subr.mxu0 0.0
        %2076 = vmatpush1.xpose.msra.mxu0 0.0
        %2077 = vmatprep.subr.mxu0 0.0
        %2078 = vmatpush1.xpose.msra.mxu0 0.0
        %2079 = vmatprep.subr.mxu0 0.0
        %2080 = vmatpush1.xpose.msra.mxu0 0.0
        %2081 = vmatprep.subr.mxu0 0.0
        %2082 = vmatpush1.xpose.msra.mxu0 0.0
        %2083 = vmatprep.subr.mxu0 0.0
        %2084 = vmatpush1.xpose.msra.mxu0 0.0
        %2085 = vmatprep.subr.mxu0 0.0
        %2086 = vmatpush1.xpose.msra.mxu0 0.0
        %2087 = vmatprep.subr.mxu0 0.0
        %2088 = vmatpush1.xpose.msra.mxu0 0.0
        %2089 = vmatprep.subr.mxu0 0.0
        %2090 = vmatpush1.xpose.msra.mxu0 0.0
        %2091 = vmatprep.subr.mxu0 0.0
        %2092 = vmatpush1.xpose.msra.mxu0 0.0
        %2093 = vmatprep.subr.mxu0 0.0
        %2094 = vmatpush1.xpose.msra.mxu0 0.0
        %2095 = vmatprep.subr.mxu0 0.0
        %2096 = vmatpush1.xpose.msra.mxu0 0.0
        %2097 = vmatprep.subr.mxu0 0.0
        %2098 = vmatpush1.xpose.msra.mxu0 0.0
        %2099 = vmatprep.subr.mxu0 0.0
        %2100 = vmatpush1.xpose.msra.mxu0 0.0
        %2101 = vmatprep.subr.mxu0 0.0
        %2102 = vmatpush1.xpose.msra.mxu0 0.0
        %2103 = vmatprep.subr.mxu0 0.0
        %2104 = vmatpush1.xpose.msra.mxu0 0.0
        %2105 = vmatprep.subr.mxu0 0.0
        %2106 = vmatpush1.xpose.msra.mxu0 0.0
        %2107 = vmatprep.subr.mxu0 0.0
        %2108 = vmatpush1.xpose.msra.mxu0 0.0
        %2109 = vmatprep.mubr.f32.mxu0 0.0
        %2110 = vmatmul.mubr.f32.gmra.mrb[0].mxu0 %v2040
        %v2111 = vpop.f32.mrb[0].mxu0
        %v2112 = vadd.f32 0.0, %v2111
        %v2113 = vpop.f32.mrb[0].mxu0
        %2114 = vdwg.mxu0
        %v2115 = vmul.f32 %v2112, 0.5
        %v2116 = vsel %vm552, %v2115, -inf
        %2117 = vmax.xlane.f32.xlu0 %v2116
        %v2118 = vpop.xlane.xlu0 %2117
        %v2119 = vsub.f32 %v2115, %v2118
        %v2120 = vmul.f32 %v2119, 1.442695
        %v2121 = vpow.pop %v2120
        %v2122 = vsel %vm552, %v2121, 0.0
        %2123 = vadd.xlane.f32.xlu0 %v2122
        %v2124 = vpop.xlane.xlu0 %2123
        %v2125 = vrcp.pop %v2124
        %v2126 = vmul.f32 %v2121, %v2125
        %v2128 = vsel %vm552, %v2126, 0
        %2130 = vmatprep.subr.mxu0 0.0
        %2131 = vmatpush1.msra.mxu0 %v2036
        %2132 = vmatprep.subr.mxu0 0.0
        %2133 = vmatpush1.msra.mxu0 0.0
        %2134 = vmatprep.subr.mxu0 0.0
        %2135 = vmatpush1.msra.mxu0 0.0
        %2136 = vmatprep.subr.mxu0 0.0
        %2137 = vmatpush1.msra.mxu0 0.0
        %2138 = vmatprep.subr.mxu0 0.0
        %2139 = vmatpush1.msra.mxu0 0.0
        %2140 = vmatprep.subr.mxu0 0.0
        %2141 = vmatpush1.msra.mxu0 0.0
        %2142 = vmatprep.subr.mxu0 0.0
        %2143 = vmatpush1.msra.mxu0 0.0
        %2144 = vmatprep.subr.mxu0 0.0
        %2145 = vmatpush1.msra.mxu0 0.0
        %2146 = vmatprep.subr.mxu0 0.0
        %2147 = vmatpush1.msra.mxu0 0.0
        %2148 = vmatprep.subr.mxu0 0.0
        %2149 = vmatpush1.msra.mxu0 0.0
        %2150 = vmatprep.subr.mxu0 0.0
        %2151 = vmatpush1.msra.mxu0 0.0
        %2152 = vmatprep.subr.mxu0 0.0
        %2153 = vmatpush1.msra.mxu0 0.0
        %2154 = vmatprep.subr.mxu0 0.0
        %2155 = vmatpush1.msra.mxu0 0.0
        %2156 = vmatprep.subr.mxu0 0.0
        %2157 = vmatpush1.msra.mxu0 0.0
        %2158 = vmatprep.subr.mxu0 0.0
        %2159 = vmatpush1.msra.mxu0 0.0
        %2160 = vmatprep.subr.mxu0 0.0
        %2161 = vmatpush1.msra.mxu0 0.0
        %2162 = vmatprep.subr.mxu0 0.0
        %2163 = vmatpush1.msra.mxu0 0.0
        %2164 = vmatprep.subr.mxu0 0.0
        %2165 = vmatpush1.msra.mxu0 0.0
        %2166 = vmatprep.subr.mxu0 0.0
        %2167 = vmatpush1.msra.mxu0 0.0
        %2168 = vmatprep.subr.mxu0 0.0
        %2169 = vmatpush1.msra.mxu0 0.0
        %2170 = vmatprep.subr.mxu0 0.0
        %2171 = vmatpush1.msra.mxu0 0.0
        %2172 = vmatprep.subr.mxu0 0.0
        %2173 = vmatpush1.msra.mxu0 0.0
        %2174 = vmatprep.subr.mxu0 0.0
        %2175 = vmatpush1.msra.mxu0 0.0
        %2176 = vmatprep.subr.mxu0 0.0
        %2177 = vmatpush1.msra.mxu0 0.0
        %2178 = vmatprep.subr.mxu0 0.0
        %2179 = vmatpush1.msra.mxu0 0.0
        %2180 = vmatprep.subr.mxu0 0.0
        %2181 = vmatpush1.msra.mxu0 0.0
        %2182 = vmatprep.subr.mxu0 0.0
        %2183 = vmatpush1.msra.mxu0 0.0
        %2184 = vmatprep.subr.mxu0 0.0
        %2185 = vmatpush1.msra.mxu0 0.0
        %2186 = vmatprep.subr.mxu0 0.0
        %2187 = vmatpush1.msra.mxu0 0.0
        %2188 = vmatprep.subr.mxu0 0.0
        %2189 = vmatpush1.msra.mxu0 0.0
        %2190 = vmatprep.subr.mxu0 0.0
        %2191 = vmatpush1.msra.mxu0 0.0
        %2192 = vmatprep.subr.mxu0 0.0
        %2193 = vmatpush1.msra.mxu0 0.0
        %2194 = vmatprep.mubr.f32.mxu0 0.0
        %2195 = vmatmul.mubr.f32.gmra.mrb[0].mxu0 %v2128
        %v2196 = vpop.f32.mrb[0].mxu0
        %v2197 = vadd.f32 0.0, %v2196
        %v2198 = vpop.f32.mrb[0].mxu0
        %2199 = vdwg.mxu0
        %2201 = vrot.lane.b32.xlu0 %v2197, 16
        %v2202 = vpop.permute.xlu0 %2201
        %vm2204 = vcmask 162944
        %2205 = vst.msk [vmem:[#allocation2] sm:$0xff] %vm2204, %v2202
        %s2206 = scalar_lea.vmem %s1, 160
        %v2207 = vld [vmem:[%s2206] sm:$0xff]
        %v2208 = vld [vmem:[%s2206 + $0x8] sm:$0xff]
        %v2209 = vld [vmem:[%s2206 + $0x10] sm:$0xff]
        %v2210 = vld [vmem:[%s2206 + $0x18] sm:$0xff]
        %s2211 = scalar_lea.vmem %s2, 160
        %v2212 = vld [vmem:[%s2211] sm:$0xff]
        %v2213 = vld [vmem:[%s2211 + $0x8] sm:$0xff]
        %v2214 = vld [vmem:[%s2211 + $0x10] sm:$0xff]
        %v2215 = vld [vmem:[%s2211 + $0x18] sm:$0xff]
        %s2216 = scalar_lea.vmem %s3, 160
        %v2217 = vld [vmem:[%s2216] sm:$0xff]
        %v2218 = vld [vmem:[%s2216 + $0x8] sm:$0xff]
        %v2219 = vld [vmem:[%s2216 + $0x10] sm:$0xff]
        %v2220 = vld [vmem:[%s2216 + $0x18] sm:$0xff]
        %2221 = vmatprep.subr.mxu0 0.0
        %2222 = vmatpush1.msra.mxu0 %v2207
        %2223 = vmatprep.subr.mxu0 0.0
        %2224 = vmatpush1.msra.mxu0 %v2208
        %2225 = vmatprep.subr.mxu0 0.0
        %2226 = vmatpush1.msra.mxu0 %v2209
        %2227 = vmatprep.subr.mxu0 0.0
        %2228 = vmatpush1.msra.mxu0 %v2210
        %2229 = vmatprep.subr.mxu0 0.0
        %2230 = vmatpush1.msra.mxu0 0.0
        %2231 = vmatprep.subr.mxu0 0.0
        %2232 = vmatpush1.msra.mxu0 0.0
        %2233 = vmatprep.subr.mxu0 0.0
        %2234 = vmatpush1.msra.mxu0 0.0
        %2235 = vmatprep.subr.mxu0 0.0
        %2236 = vmatpush1.msra.mxu0 0.0
        %2237 = vmatprep.subr.mxu0 0.0
        %2238 = vmatpush1.msra.mxu0 0.0
        %2239 = vmatprep.subr.mxu0 0.0
        %2240 = vmatpush1.msra.mxu0 0.0
        %2241 = vmatprep.subr.mxu0 0.0
        %2242 = vmatpush1.msra.mxu0 0.0
        %2243 = vmatprep.subr.mxu0 0.0
        %2244 = vmatpush1.msra.mxu0 0.0
        %2245 = vmatprep.subr.mxu0 0.0
        %2246 = vmatpush1.msra.mxu0 0.0
        %2247 = vmatprep.subr.mxu0 0.0
        %2248 = vmatpush1.msra.mxu0 0.0
        %2249 = vmatprep.subr.mxu0 0.0
        %2250 = vmatpush1.msra.mxu0 0.0
        %2251 = vmatprep.subr.mxu0 0.0
        %2252 = vmatpush1.msra.mxu0 0.0
        %2253 = vmatprep.subr.mxu0 0.0
        %2254 = vmatpush1.msra.mxu0 0.0
        %2255 = vmatprep.subr.mxu0 0.0
        %2256 = vmatpush1.msra.mxu0 0.0
        %2257 = vmatprep.subr.mxu0 0.0
        %2258 = vmatpush1.msra.mxu0 0.0
        %2259 = vmatprep.subr.mxu0 0.0
        %2260 = vmatpush1.msra.mxu0 0.0
        %2261 = vmatprep.subr.mxu0 0.0
        %2262 = vmatpush1.msra.mxu0 0.0
        %2263 = vmatprep.subr.mxu0 0.0
        %2264 = vmatpush1.msra.mxu0 0.0
        %2265 = vmatprep.subr.mxu0 0.0
        %2266 = vmatpush1.msra.mxu0 0.0
        %2267 = vmatprep.subr.mxu0 0.0
        %2268 = vmatpush1.msra.mxu0 0.0
        %2269 = vmatprep.subr.mxu0 0.0
        %2270 = vmatpush1.msra.mxu0 0.0
        %2271 = vmatprep.subr.mxu0 0.0
        %2272 = vmatpush1.msra.mxu0 0.0
        %2273 = vmatprep.subr.mxu0 0.0
        %2274 = vmatpush1.msra.mxu0 0.0
        %2275 = vmatprep.subr.mxu0 0.0
        %2276 = vmatpush1.msra.mxu0 0.0
        %2277 = vmatprep.subr.mxu0 0.0
        %2278 = vmatpush1.msra.mxu0 0.0
        %2279 = vmatprep.subr.mxu0 0.0
        %2280 = vmatpush1.msra.mxu0 0.0
        %2281 = vmatprep.subr.mxu0 0.0
        %2282 = vmatpush1.msra.mxu0 0.0
        %2283 = vmatprep.subr.mxu0 0.0
        %2284 = vmatpush1.msra.mxu0 0.0
        %2285 = vmatprep.mubr.f32.mxu0 0.0
        %2286 = vmatmul.mubr.f32.gmra.mrb[0].mxu0 %v262
        %v2287 = vpop.f32.mrb[0].mxu0
        %v2288 = vadd.f32 0.0, %v2287
        %v2289 = vpop.f32.mrb[0].mxu0
        %2290 = vdwg.mxu0
        %2291 = vmatprep.subr.mxu0 0.0
        %2292 = vmatpush1.msra.mxu0 %v2212
        %2293 = vmatprep.subr.mxu0 0.0
        %2294 = vmatpush1.msra.mxu0 %v2213
        %2295 = vmatprep.subr.mxu0 0.0
        %2296 = vmatpush1.msra.mxu0 %v2214
        %2297 = vmatprep.subr.mxu0 0.0
        %2298 = vmatpush1.msra.mxu0 %v2215
        %2299 = vmatprep.subr.mxu0 0.0
        %2300 = vmatpush1.msra.mxu0 0.0
        %2301 = vmatprep.subr.mxu0 0.0
        %2302 = vmatpush1.msra.mxu0 0.0
        %2303 = vmatprep.subr.mxu0 0.0
        %2304 = vmatpush1.msra.mxu0 0.0
        %2305 = vmatprep.subr.mxu0 0.0
        %2306 = vmatpush1.msra.mxu0 0.0
        %2307 = vmatprep.subr.mxu0 0.0
        %2308 = vmatpush1.msra.mxu0 0.0
        %2309 = vmatprep.subr.mxu0 0.0
        %2310 = vmatpush1.msra.mxu0 0.0
        %2311 = vmatprep.subr.mxu0 0.0
        %2312 = vmatpush1.msra.mxu0 0.0
        %2313 = vmatprep.subr.mxu0 0.0
        %2314 = vmatpush1.msra.mxu0 0.0
        %2315 = vmatprep.subr.mxu0 0.0
        %2316 = vmatpush1.msra.mxu0 0.0
        %2317 = vmatprep.subr.mxu0 0.0
        %2318 = vmatpush1.msra.mxu0 0.0
        %2319 = vmatprep.subr.mxu0 0.0
        %2320 = vmatpush1.msra.mxu0 0.0
        %2321 = vmatprep.subr.mxu0 0.0
        %2322 = vmatpush1.msra.mxu0 0.0
        %2323 = vmatprep.subr.mxu0 0.0
        %2324 = vmatpush1.msra.mxu0 0.0
        %2325 = vmatprep.subr.mxu0 0.0
        %2326 = vmatpush1.msra.mxu0 0.0
        %2327 = vmatprep.subr.mxu0 0.0
        %2328 = vmatpush1.msra.mxu0 0.0
        %2329 = vmatprep.subr.mxu0 0.0
        %2330 = vmatpush1.msra.mxu0 0.0
        %2331 = vmatprep.subr.mxu0 0.0
        %2332 = vmatpush1.msra.mxu0 0.0
        %2333 = vmatprep.subr.mxu0 0.0
        %2334 = vmatpush1.msra.mxu0 0.0
        %2335 = vmatprep.subr.mxu0 0.0
        %2336 = vmatpush1.msra.mxu0 0.0
        %2337 = vmatprep.subr.mxu0 0.0
        %2338 = vmatpush1.msra.mxu0 0.0
        %2339 = vmatprep.subr.mxu0 0.0
        %2340 = vmatpush1.msra.mxu0 0.0
        %2341 = vmatprep.subr.mxu0 0.0
        %2342 = vmatpush1.msra.mxu0 0.0
        %2343 = vmatprep.subr.mxu0 0.0
        %2344 = vmatpush1.msra.mxu0 0.0
        %2345 = vmatprep.subr.mxu0 0.0
        %2346 = vmatpush1.msra.mxu0 0.0
        %2347 = vmatprep.subr.mxu0 0.0
        %2348 = vmatpush1.msra.mxu0 0.0
        %2349 = vmatprep.subr.mxu0 0.0
        %2350 = vmatpush1.msra.mxu0 0.0
        %2351 = vmatprep.subr.mxu0 0.0
        %2352 = vmatpush1.msra.mxu0 0.0
        %2353 = vmatprep.subr.mxu0 0.0
        %2354 = vmatpush1.msra.mxu0 0.0
        %2355 = vmatprep.mubr.f32.mxu0 0.0
        %2356 = vmatmul.mubr.f32.gmra.mrb[0].mxu0 %v262
        %v2357 = vpop.f32.mrb[0].mxu0
        %v2358 = vadd.f32 0.0, %v2357
        %v2359 = vpop.f32.mrb[0].mxu0
        %2360 = vdwg.mxu0
        %2361 = vmatprep.subr.mxu0 0.0
        %2362 = vmatpush1.msra.mxu0 %v2217
        %2363 = vmatprep.subr.mxu0 0.0
        %2364 = vmatpush1.msra.mxu0 %v2218
        %2365 = vmatprep.subr.mxu0 0.0
        %2366 = vmatpush1.msra.mxu0 %v2219
        %2367 = vmatprep.subr.mxu0 0.0
        %2368 = vmatpush1.msra.mxu0 %v2220
        %2369 = vmatprep.subr.mxu0 0.0
        %2370 = vmatpush1.msra.mxu0 0.0
        %2371 = vmatprep.subr.mxu0 0.0
        %2372 = vmatpush1.msra.mxu0 0.0
        %2373 = vmatprep.subr.mxu0 0.0
        %2374 = vmatpush1.msra.mxu0 0.0
        %2375 = vmatprep.subr.mxu0 0.0
        %2376 = vmatpush1.msra.mxu0 0.0
        %2377 = vmatprep.subr.mxu0 0.0
        %2378 = vmatpush1.msra.mxu0 0.0
        %2379 = vmatprep.subr.mxu0 0.0
        %2380 = vmatpush1.msra.mxu0 0.0
        %2381 = vmatprep.subr.mxu0 0.0
        %2382 = vmatpush1.msra.mxu0 0.0
        %2383 = vmatprep.subr.mxu0 0.0
        %2384 = vmatpush1.msra.mxu0 0.0
        %2385 = vmatprep.subr.mxu0 0.0
        %2386 = vmatpush1.msra.mxu0 0.0
        %2387 = vmatprep.subr.mxu0 0.0
        %2388 = vmatpush1.msra.mxu0 0.0
        %2389 = vmatprep.subr.mxu0 0.0
        %2390 = vmatpush1.msra.mxu0 0.0
        %2391 = vmatprep.subr.mxu0 0.0
        %2392 = vmatpush1.msra.mxu0 0.0
        %2393 = vmatprep.subr.mxu0 0.0
        %2394 = vmatpush1.msra.mxu0 0.0
        %2395 = vmatprep.subr.mxu0 0.0
        %2396 = vmatpush1.msra.mxu0 0.0
        %2397 = vmatprep.subr.mxu0 0.0
        %2398 = vmatpush1.msra.mxu0 0.0
        %2399 = vmatprep.subr.mxu0 0.0
        %2400 = vmatpush1.msra.mxu0 0.0
        %2401 = vmatprep.subr.mxu0 0.0
        %2402 = vmatpush1.msra.mxu0 0.0
        %2403 = vmatprep.subr.mxu0 0.0
        %2404 = vmatpush1.msra.mxu0 0.0
        %2405 = vmatprep.subr.mxu0 0.0
        %2406 = vmatpush1.msra.mxu0 0.0
        %2407 = vmatprep.subr.mxu0 0.0
        %2408 = vmatpush1.msra.mxu0 0.0
        %2409 = vmatprep.subr.mxu0 0.0
        %2410 = vmatpush1.msra.mxu0 0.0
        %2411 = vmatprep.subr.mxu0 0.0
        %2412 = vmatpush1.msra.mxu0 0.0
        %2413 = vmatprep.subr.mxu0 0.0
        %2414 = vmatpush1.msra.mxu0 0.0
        %2415 = vmatprep.subr.mxu0 0.0
        %2416 = vmatpush1.msra.mxu0 0.0
        %2417 = vmatprep.subr.mxu0 0.0
        %2418 = vmatpush1.msra.mxu0 0.0
        %2419 = vmatprep.subr.mxu0 0.0
        %2420 = vmatpush1.msra.mxu0 0.0
        %2421 = vmatprep.subr.mxu0 0.0
        %2422 = vmatpush1.msra.mxu0 0.0
        %2423 = vmatprep.subr.mxu0 0.0
        %2424 = vmatpush1.msra.mxu0 0.0
        %2425 = vmatprep.mubr.f32.mxu0 0.0
        %2426 = vmatmul.mubr.f32.gmra.mrb[0].mxu0 %v262
        %v2427 = vpop.f32.mrb[0].mxu0
        %v2428 = vadd.f32 0.0, %v2427
        %v2429 = vpop.f32.mrb[0].mxu0
        %2430 = vdwg.mxu0
        %v2432 = vsel %vm474, %v2288, 0
        %v2435 = vsel %vm474, %v2358, 0
        %2437 = vmatprep.subr.mxu0 0.0
        %2438 = vmatpush1.xpose.msra.mxu0 %v2435
        %2439 = vmatprep.subr.mxu0 0.0
        %2440 = vmatpush1.xpose.msra.mxu0 0.0
        %2441 = vmatprep.subr.mxu0 0.0
        %2442 = vmatpush1.xpose.msra.mxu0 0.0
        %2443 = vmatprep.subr.mxu0 0.0
        %2444 = vmatpush1.xpose.msra.mxu0 0.0
        %2445 = vmatprep.subr.mxu0 0.0
        %2446 = vmatpush1.xpose.msra.mxu0 0.0
        %2447 = vmatprep.subr.mxu0 0.0
        %2448 = vmatpush1.xpose.msra.mxu0 0.0
        %2449 = vmatprep.subr.mxu0 0.0
        %2450 = vmatpush1.xpose.msra.mxu0 0.0
        %2451 = vmatprep.subr.mxu0 0.0
        %2452 = vmatpush1.xpose.msra.mxu0 0.0
        %2453 = vmatprep.subr.mxu0 0.0
        %2454 = vmatpush1.xpose.msra.mxu0 0.0
        %2455 = vmatprep.subr.mxu0 0.0
        %2456 = vmatpush1.xpose.msra.mxu0 0.0
        %2457 = vmatprep.subr.mxu0 0.0
        %2458 = vmatpush1.xpose.msra.mxu0 0.0
        %2459 = vmatprep.subr.mxu0 0.0
        %2460 = vmatpush1.xpose.msra.mxu0 0.0
        %2461 = vmatprep.subr.mxu0 0.0
        %2462 = vmatpush1.xpose.msra.mxu0 0.0
        %2463 = vmatprep.subr.mxu0 0.0
        %2464 = vmatpush1.xpose.msra.mxu0 0.0
        %2465 = vmatprep.subr.mxu0 0.0
        %2466 = vmatpush1.xpose.msra.mxu0 0.0
        %2467 = vmatprep.subr.mxu0 0.0
        %2468 = vmatpush1.xpose.msra.mxu0 0.0
        %2469 = vmatprep.subr.mxu0 0.0
        %2470 = vmatpush1.xpose.msra.mxu0 0.0
        %2471 = vmatprep.subr.mxu0 0.0
        %2472 = vmatpush1.xpose.msra.mxu0 0.0
        %2473 = vmatprep.subr.mxu0 0.0
        %2474 = vmatpush1.xpose.msra.mxu0 0.0
        %2475 = vmatprep.subr.mxu0 0.0
        %2476 = vmatpush1.xpose.msra.mxu0 0.0
        %2477 = vmatprep.subr.mxu0 0.0
        %2478 = vmatpush1.xpose.msra.mxu0 0.0
        %2479 = vmatprep.subr.mxu0 0.0
        %2480 = vmatpush1.xpose.msra.mxu0 0.0
        %2481 = vmatprep.subr.mxu0 0.0
        %2482 = vmatpush1.xpose.msra.mxu0 0.0
        %2483 = vmatprep.subr.mxu0 0.0
        %2484 = vmatpush1.xpose.msra.mxu0 0.0
        %2485 = vmatprep.subr.mxu0 0.0
        %2486 = vmatpush1.xpose.msra.mxu0 0.0
        %2487 = vmatprep.subr.mxu0 0.0
        %2488 = vmatpush1.xpose.msra.mxu0 0.0
        %2489 = vmatprep.subr.mxu0 0.0
        %2490 = vmatpush1.xpose.msra.mxu0 0.0
        %2491 = vmatprep.subr.mxu0 0.0
        %2492 = vmatpush1.xpose.msra.mxu0 0.0
        %2493 = vmatprep.subr.mxu0 0.0
        %2494 = vmatpush1.xpose.msra.mxu0 0.0
        %2495 = vmatprep.subr.mxu0 0.0
        %2496 = vmatpush1.xpose.msra.mxu0 0.0
        %2497 = vmatprep.subr.mxu0 0.0
        %2498 = vmatpush1.xpose.msra.mxu0 0.0
        %2499 = vmatprep.subr.mxu0 0.0
        %2500 = vmatpush1.xpose.msra.mxu0 0.0
        %2501 = vmatprep.mubr.f32.mxu0 0.0
        %2502 = vmatmul.mubr.f32.gmra.mrb[0].mxu0 %v2432
        %v2503 = vpop.f32.mrb[0].mxu0
        %v2504 = vadd.f32 0.0, %v2503
        %v2505 = vpop.f32.mrb[0].mxu0
        %2506 = vdwg.mxu0
        %v2507 = vmul.f32 %v2504, 0.5
        %v2508 = vsel %vm552, %v2507, -inf
        %2509 = vmax.xlane.f32.xlu0 %v2508
        %v2510 = vpop.xlane.xlu0 %2509
        %v2511 = vsub.f32 %v2507, %v2510
        %v2512 = vmul.f32 %v2511, 1.442695
        %v2513 = vpow.pop %v2512
        %v2514 = vsel %vm552, %v2513, 0.0
        %2515 = vadd.xlane.f32.xlu0 %v2514
        %v2516 = vpop.xlane.xlu0 %2515
        %v2517 = vrcp.pop %v2516
        %v2518 = vmul.f32 %v2513, %v2517
        %v2520 = vsel %vm552, %v2518, 0
        %2522 = vmatprep.subr.mxu0 0.0
        %2523 = vmatpush1.msra.mxu0 %v2428
        %2524 = vmatprep.subr.mxu0 0.0
        %2525 = vmatpush1.msra.mxu0 0.0
        %2526 = vmatprep.subr.mxu0 0.0
        %2527 = vmatpush1.msra.mxu0 0.0
        %2528 = vmatprep.subr.mxu0 0.0
        %2529 = vmatpush1.msra.mxu0 0.0
        %2530 = vmatprep.subr.mxu0 0.0
        %2531 = vmatpush1.msra.mxu0 0.0
        %2532 = vmatprep.subr.mxu0 0.0
        %2533 = vmatpush1.msra.mxu0 0.0
        %2534 = vmatprep.subr.mxu0 0.0
        %2535 = vmatpush1.msra.mxu0 0.0
        %2536 = vmatprep.subr.mxu0 0.0
        %2537 = vmatpush1.msra.mxu0 0.0
        %2538 = vmatprep.subr.mxu0 0.0
        %2539 = vmatpush1.msra.mxu0 0.0
        %2540 = vmatprep.subr.mxu0 0.0
        %2541 = vmatpush1.msra.mxu0 0.0
        %2542 = vmatprep.subr.mxu0 0.0
        %2543 = vmatpush1.msra.mxu0 0.0
        %2544 = vmatprep.subr.mxu0 0.0
        %2545 = vmatpush1.msra.mxu0 0.0
        %2546 = vmatprep.subr.mxu0 0.0
        %2547 = vmatpush1.msra.mxu0 0.0
        %2548 = vmatprep.subr.mxu0 0.0
        %2549 = vmatpush1.msra.mxu0 0.0
        %2550 = vmatprep.subr.mxu0 0.0
        %2551 = vmatpush1.msra.mxu0 0.0
        %2552 = vmatprep.subr.mxu0 0.0
        %2553 = vmatpush1.msra.mxu0 0.0
        %2554 = vmatprep.subr.mxu0 0.0
        %2555 = vmatpush1.msra.mxu0 0.0
        %2556 = vmatprep.subr.mxu0 0.0
        %2557 = vmatpush1.msra.mxu0 0.0
        %2558 = vmatprep.subr.mxu0 0.0
        %2559 = vmatpush1.msra.mxu0 0.0
        %2560 = vmatprep.subr.mxu0 0.0
        %2561 = vmatpush1.msra.mxu0 0.0
        %2562 = vmatprep.subr.mxu0 0.0
        %2563 = vmatpush1.msra.mxu0 0.0
        %2564 = vmatprep.subr.mxu0 0.0
        %2565 = vmatpush1.msra.mxu0 0.0
        %2566 = vmatprep.subr.mxu0 0.0
        %2567 = vmatpush1.msra.mxu0 0.0
        %2568 = vmatprep.subr.mxu0 0.0
        %2569 = vmatpush1.msra.mxu0 0.0
        %2570 = vmatprep.subr.mxu0 0.0
        %2571 = vmatpush1.msra.mxu0 0.0
        %2572 = vmatprep.subr.mxu0 0.0
        %2573 = vmatpush1.msra.mxu0 0.0
        %2574 = vmatprep.subr.mxu0 0.0
        %2575 = vmatpush1.msra.mxu0 0.0
        %2576 = vmatprep.subr.mxu0 0.0
        %2577 = vmatpush1.msra.mxu0 0.0
        %2578 = vmatprep.subr.mxu0 0.0
        %2579 = vmatpush1.msra.mxu0 0.0
        %2580 = vmatprep.subr.mxu0 0.0
        %2581 = vmatpush1.msra.mxu0 0.0
        %2582 = vmatprep.subr.mxu0 0.0
        %2583 = vmatpush1.msra.mxu0 0.0
        %2584 = vmatprep.subr.mxu0 0.0
        %2585 = vmatpush1.msra.mxu0 0.0
        %2586 = vmatprep.mubr.f32.mxu0 0.0
        %2587 = vmatmul.mubr.f32.gmra.mrb[0].mxu0 %v2520
        %v2588 = vpop.f32.mrb[0].mxu0
        %v2589 = vadd.f32 0.0, %v2588
        %v2590 = vpop.f32.mrb[0].mxu0
        %2591 = vdwg.mxu0
        %2593 = vrot.lane.b32.xlu0 %v2589, 20
        %v2594 = vpop.permute.xlu0 %2593
        %vm2596 = vcmask 195744
        %2597 = vst.msk [vmem:[#allocation2] sm:$0xff] %vm2596, %v2594
        %s2598 = scalar_lea.vmem %s1, 192
        %v2599 = vld [vmem:[%s2598] sm:$0xff]
        %v2600 = vld [vmem:[%s2598 + $0x8] sm:$0xff]
        %v2601 = vld [vmem:[%s2598 + $0x10] sm:$0xff]
        %v2602 = vld [vmem:[%s2598 + $0x18] sm:$0xff]
        %s2603 = scalar_lea.vmem %s2, 192
        %v2604 = vld [vmem:[%s2603] sm:$0xff]
        %v2605 = vld [vmem:[%s2603 + $0x8] sm:$0xff]
        %v2606 = vld [vmem:[%s2603 + $0x10] sm:$0xff]
        %v2607 = vld [vmem:[%s2603 + $0x18] sm:$0xff]
        %s2608 = scalar_lea.vmem %s3, 192
        %v2609 = vld [vmem:[%s2608] sm:$0xff]
        %v2610 = vld [vmem:[%s2608 + $0x8] sm:$0xff]
        %v2611 = vld [vmem:[%s2608 + $0x10] sm:$0xff]
        %v2612 = vld [vmem:[%s2608 + $0x18] sm:$0xff]
        %2613 = vmatprep.subr.mxu0 0.0
        %2614 = vmatpush1.msra.mxu0 %v2599
        %2615 = vmatprep.subr.mxu0 0.0
        %2616 = vmatpush1.msra.mxu0 %v2600
        %2617 = vmatprep.subr.mxu0 0.0
        %2618 = vmatpush1.msra.mxu0 %v2601
        %2619 = vmatprep.subr.mxu0 0.0
        %2620 = vmatpush1.msra.mxu0 %v2602
        %2621 = vmatprep.subr.mxu0 0.0
        %2622 = vmatpush1.msra.mxu0 0.0
        %2623 = vmatprep.subr.mxu0 0.0
        %2624 = vmatpush1.msra.mxu0 0.0
        %2625 = vmatprep.subr.mxu0 0.0
        %2626 = vmatpush1.msra.mxu0 0.0
        %2627 = vmatprep.subr.mxu0 0.0
        %2628 = vmatpush1.msra.mxu0 0.0
        %2629 = vmatprep.subr.mxu0 0.0
        %2630 = vmatpush1.msra.mxu0 0.0
        %2631 = vmatprep.subr.mxu0 0.0
        %2632 = vmatpush1.msra.mxu0 0.0
        %2633 = vmatprep.subr.mxu0 0.0
        %2634 = vmatpush1.msra.mxu0 0.0
        %2635 = vmatprep.subr.mxu0 0.0
        %2636 = vmatpush1.msra.mxu0 0.0
        %2637 = vmatprep.subr.mxu0 0.0
        %2638 = vmatpush1.msra.mxu0 0.0
        %2639 = vmatprep.subr.mxu0 0.0
        %2640 = vmatpush1.msra.mxu0 0.0
        %2641 = vmatprep.subr.mxu0 0.0
        %2642 = vmatpush1.msra.mxu0 0.0
        %2643 = vmatprep.subr.mxu0 0.0
        %2644 = vmatpush1.msra.mxu0 0.0
        %2645 = vmatprep.subr.mxu0 0.0
        %2646 = vmatpush1.msra.mxu0 0.0
        %2647 = vmatprep.subr.mxu0 0.0
        %2648 = vmatpush1.msra.mxu0 0.0
        %2649 = vmatprep.subr.mxu0 0.0
        %2650 = vmatpush1.msra.mxu0 0.0
        %2651 = vmatprep.subr.mxu0 0.0
        %2652 = vmatpush1.msra.mxu0 0.0
        %2653 = vmatprep.subr.mxu0 0.0
        %2654 = vmatpush1.msra.mxu0 0.0
        %2655 = vmatprep.subr.mxu0 0.0
        %2656 = vmatpush1.msra.mxu0 0.0
        %2657 = vmatprep.subr.mxu0 0.0
        %2658 = vmatpush1.msra.mxu0 0.0
        %2659 = vmatprep.subr.mxu0 0.0
        %2660 = vmatpush1.msra.mxu0 0.0
        %2661 = vmatprep.subr.mxu0 0.0
        %2662 = vmatpush1.msra.mxu0 0.0
        %2663 = vmatprep.subr.mxu0 0.0
        %2664 = vmatpush1.msra.mxu0 0.0
        %2665 = vmatprep.subr.mxu0 0.0
        %2666 = vmatpush1.msra.mxu0 0.0
        %2667 = vmatprep.subr.mxu0 0.0
        %2668 = vmatpush1.msra.mxu0 0.0
        %2669 = vmatprep.subr.mxu0 0.0
        %2670 = vmatpush1.msra.mxu0 0.0
        %2671 = vmatprep.subr.mxu0 0.0
        %2672 = vmatpush1.msra.mxu0 0.0
        %2673 = vmatprep.subr.mxu0 0.0
        %2674 = vmatpush1.msra.mxu0 0.0
        %2675 = vmatprep.subr.mxu0 0.0
        %2676 = vmatpush1.msra.mxu0 0.0
        %2677 = vmatprep.mubr.f32.mxu0 0.0
        %2678 = vmatmul.mubr.f32.gmra.mrb[0].mxu0 %v262
        %v2679 = vpop.f32.mrb[0].mxu0
        %v2680 = vadd.f32 0.0, %v2679
        %v2681 = vpop.f32.mrb[0].mxu0
        %2682 = vdwg.mxu0
        %2683 = vmatprep.subr.mxu0 0.0
        %2684 = vmatpush1.msra.mxu0 %v2604
        %2685 = vmatprep.subr.mxu0 0.0
        %2686 = vmatpush1.msra.mxu0 %v2605
        %2687 = vmatprep.subr.mxu0 0.0
        %2688 = vmatpush1.msra.mxu0 %v2606
        %2689 = vmatprep.subr.mxu0 0.0
        %2690 = vmatpush1.msra.mxu0 %v2607
        %2691 = vmatprep.subr.mxu0 0.0
        %2692 = vmatpush1.msra.mxu0 0.0
        %2693 = vmatprep.subr.mxu0 0.0
        %2694 = vmatpush1.msra.mxu0 0.0
        %2695 = vmatprep.subr.mxu0 0.0
        %2696 = vmatpush1.msra.mxu0 0.0
        %2697 = vmatprep.subr.mxu0 0.0
        %2698 = vmatpush1.msra.mxu0 0.0
        %2699 = vmatprep.subr.mxu0 0.0
        %2700 = vmatpush1.msra.mxu0 0.0
        %2701 = vmatprep.subr.mxu0 0.0
        %2702 = vmatpush1.msra.mxu0 0.0
        %2703 = vmatprep.subr.mxu0 0.0
        %2704 = vmatpush1.msra.mxu0 0.0
        %2705 = vmatprep.subr.mxu0 0.0
        %2706 = vmatpush1.msra.mxu0 0.0
        %2707 = vmatprep.subr.mxu0 0.0
        %2708 = vmatpush1.msra.mxu0 0.0
        %2709 = vmatprep.subr.mxu0 0.0
        %2710 = vmatpush1.msra.mxu0 0.0
        %2711 = vmatprep.subr.mxu0 0.0
        %2712 = vmatpush1.msra.mxu0 0.0
        %2713 = vmatprep.subr.mxu0 0.0
        %2714 = vmatpush1.msra.mxu0 0.0
        %2715 = vmatprep.subr.mxu0 0.0
        %2716 = vmatpush1.msra.mxu0 0.0
        %2717 = vmatprep.subr.mxu0 0.0
        %2718 = vmatpush1.msra.mxu0 0.0
        %2719 = vmatprep.subr.mxu0 0.0
        %2720 = vmatpush1.msra.mxu0 0.0
        %2721 = vmatprep.subr.mxu0 0.0
        %2722 = vmatpush1.msra.mxu0 0.0
        %2723 = vmatprep.subr.mxu0 0.0
        %2724 = vmatpush1.msra.mxu0 0.0
        %2725 = vmatprep.subr.mxu0 0.0
        %2726 = vmatpush1.msra.mxu0 0.0
        %2727 = vmatprep.subr.mxu0 0.0
        %2728 = vmatpush1.msra.mxu0 0.0
        %2729 = vmatprep.subr.mxu0 0.0
        %2730 = vmatpush1.msra.mxu0 0.0
        %2731 = vmatprep.subr.mxu0 0.0
        %2732 = vmatpush1.msra.mxu0 0.0
        %2733 = vmatprep.subr.mxu0 0.0
        %2734 = vmatpush1.msra.mxu0 0.0
        %2735 = vmatprep.subr.mxu0 0.0
        %2736 = vmatpush1.msra.mxu0 0.0
        %2737 = vmatprep.subr.mxu0 0.0
        %2738 = vmatpush1.msra.mxu0 0.0
        %2739 = vmatprep.subr.mxu0 0.0
        %2740 = vmatpush1.msra.mxu0 0.0
        %2741 = vmatprep.subr.mxu0 0.0
        %2742 = vmatpush1.msra.mxu0 0.0
        %2743 = vmatprep.subr.mxu0 0.0
        %2744 = vmatpush1.msra.mxu0 0.0
        %2745 = vmatprep.subr.mxu0 0.0
        %2746 = vmatpush1.msra.mxu0 0.0
        %2747 = vmatprep.mubr.f32.mxu0 0.0
        %2748 = vmatmul.mubr.f32.gmra.mrb[0].mxu0 %v262
        %v2749 = vpop.f32.mrb[0].mxu0
        %v2750 = vadd.f32 0.0, %v2749
        %v2751 = vpop.f32.mrb[0].mxu0
        %2752 = vdwg.mxu0
        %2753 = vmatprep.subr.mxu0 0.0
        %2754 = vmatpush1.msra.mxu0 %v2609
        %2755 = vmatprep.subr.mxu0 0.0
        %2756 = vmatpush1.msra.mxu0 %v2610
        %2757 = vmatprep.subr.mxu0 0.0
        %2758 = vmatpush1.msra.mxu0 %v2611
        %2759 = vmatprep.subr.mxu0 0.0
        %2760 = vmatpush1.msra.mxu0 %v2612
        %2761 = vmatprep.subr.mxu0 0.0
        %2762 = vmatpush1.msra.mxu0 0.0
        %2763 = vmatprep.subr.mxu0 0.0
        %2764 = vmatpush1.msra.mxu0 0.0
        %2765 = vmatprep.subr.mxu0 0.0
        %2766 = vmatpush1.msra.mxu0 0.0
        %2767 = vmatprep.subr.mxu0 0.0
        %2768 = vmatpush1.msra.mxu0 0.0
        %2769 = vmatprep.subr.mxu0 0.0
        %2770 = vmatpush1.msra.mxu0 0.0
        %2771 = vmatprep.subr.mxu0 0.0
        %2772 = vmatpush1.msra.mxu0 0.0
        %2773 = vmatprep.subr.mxu0 0.0
        %2774 = vmatpush1.msra.mxu0 0.0
        %2775 = vmatprep.subr.mxu0 0.0
        %2776 = vmatpush1.msra.mxu0 0.0
        %2777 = vmatprep.subr.mxu0 0.0
        %2778 = vmatpush1.msra.mxu0 0.0
        %2779 = vmatprep.subr.mxu0 0.0
        %2780 = vmatpush1.msra.mxu0 0.0
        %2781 = vmatprep.subr.mxu0 0.0
        %2782 = vmatpush1.msra.mxu0 0.0
        %2783 = vmatprep.subr.mxu0 0.0
        %2784 = vmatpush1.msra.mxu0 0.0
        %2785 = vmatprep.subr.mxu0 0.0
        %2786 = vmatpush1.msra.mxu0 0.0
        %2787 = vmatprep.subr.mxu0 0.0
        %2788 = vmatpush1.msra.mxu0 0.0
        %2789 = vmatprep.subr.mxu0 0.0
        %2790 = vmatpush1.msra.mxu0 0.0
        %2791 = vmatprep.subr.mxu0 0.0
        %2792 = vmatpush1.msra.mxu0 0.0
        %2793 = vmatprep.subr.mxu0 0.0
        %2794 = vmatpush1.msra.mxu0 0.0
        %2795 = vmatprep.subr.mxu0 0.0
        %2796 = vmatpush1.msra.mxu0 0.0
        %2797 = vmatprep.subr.mxu0 0.0
        %2798 = vmatpush1.msra.mxu0 0.0
        %2799 = vmatprep.subr.mxu0 0.0
        %2800 = vmatpush1.msra.mxu0 0.0
        %2801 = vmatprep.subr.mxu0 0.0
        %2802 = vmatpush1.msra.mxu0 0.0
        %2803 = vmatprep.subr.mxu0 0.0
        %2804 = vmatpush1.msra.mxu0 0.0
        %2805 = vmatprep.subr.mxu0 0.0
        %2806 = vmatpush1.msra.mxu0 0.0
        %2807 = vmatprep.subr.mxu0 0.0
        %2808 = vmatpush1.msra.mxu0 0.0
        %2809 = vmatprep.subr.mxu0 0.0
        %2810 = vmatpush1.msra.mxu0 0.0
        %2811 = vmatprep.subr.mxu0 0.0
        %2812 = vmatpush1.msra.mxu0 0.0
        %2813 = vmatprep.subr.mxu0 0.0
        %2814 = vmatpush1.msra.mxu0 0.0
        %2815 = vmatprep.subr.mxu0 0.0
        %2816 = vmatpush1.msra.mxu0 0.0
        %2817 = vmatprep.mubr.f32.mxu0 0.0
        %2818 = vmatmul.mubr.f32.gmra.mrb[0].mxu0 %v262
        %v2819 = vpop.f32.mrb[0].mxu0
        %v2820 = vadd.f32 0.0, %v2819
        %v2821 = vpop.f32.mrb[0].mxu0
        %2822 = vdwg.mxu0
        %v2824 = vsel %vm474, %v2680, 0
        %v2827 = vsel %vm474, %v2750, 0
        %2829 = vmatprep.subr.mxu0 0.0
        %2830 = vmatpush1.xpose.msra.mxu0 %v2827
        %2831 = vmatprep.subr.mxu0 0.0
        %2832 = vmatpush1.xpose.msra.mxu0 0.0
        %2833 = vmatprep.subr.mxu0 0.0
        %2834 = vmatpush1.xpose.msra.mxu0 0.0
        %2835 = vmatprep.subr.mxu0 0.0
        %2836 = vmatpush1.xpose.msra.mxu0 0.0
        %2837 = vmatprep.subr.mxu0 0.0
        %2838 = vmatpush1.xpose.msra.mxu0 0.0
        %2839 = vmatprep.subr.mxu0 0.0
        %2840 = vmatpush1.xpose.msra.mxu0 0.0
        %2841 = vmatprep.subr.mxu0 0.0
        %2842 = vmatpush1.xpose.msra.mxu0 0.0
        %2843 = vmatprep.subr.mxu0 0.0
        %2844 = vmatpush1.xpose.msra.mxu0 0.0
        %2845 = vmatprep.subr.mxu0 0.0
        %2846 = vmatpush1.xpose.msra.mxu0 0.0
        %2847 = vmatprep.subr.mxu0 0.0
        %2848 = vmatpush1.xpose.msra.mxu0 0.0
        %2849 = vmatprep.subr.mxu0 0.0
        %2850 = vmatpush1.xpose.msra.mxu0 0.0
        %2851 = vmatprep.subr.mxu0 0.0
        %2852 = vmatpush1.xpose.msra.mxu0 0.0
        %2853 = vmatprep.subr.mxu0 0.0
        %2854 = vmatpush1.xpose.msra.mxu0 0.0
        %2855 = vmatprep.subr.mxu0 0.0
        %2856 = vmatpush1.xpose.msra.mxu0 0.0
        %2857 = vmatprep.subr.mxu0 0.0
        %2858 = vmatpush1.xpose.msra.mxu0 0.0
        %2859 = vmatprep.subr.mxu0 0.0
        %2860 = vmatpush1.xpose.msra.mxu0 0.0
        %2861 = vmatprep.subr.mxu0 0.0
        %2862 = vmatpush1.xpose.msra.mxu0 0.0
        %2863 = vmatprep.subr.mxu0 0.0
        %2864 = vmatpush1.xpose.msra.mxu0 0.0
        %2865 = vmatprep.subr.mxu0 0.0
        %2866 = vmatpush1.xpose.msra.mxu0 0.0
        %2867 = vmatprep.subr.mxu0 0.0
        %2868 = vmatpush1.xpose.msra.mxu0 0.0
        %2869 = vmatprep.subr.mxu0 0.0
        %2870 = vmatpush1.xpose.msra.mxu0 0.0
        %2871 = vmatprep.subr.mxu0 0.0
        %2872 = vmatpush1.xpose.msra.mxu0 0.0
        %2873 = vmatprep.subr.mxu0 0.0
        %2874 = vmatpush1.xpose.msra.mxu0 0.0
        %2875 = vmatprep.subr.mxu0 0.0
        %2876 = vmatpush1.xpose.msra.mxu0 0.0
        %2877 = vmatprep.subr.mxu0 0.0
        %2878 = vmatpush1.xpose.msra.mxu0 0.0
        %2879 = vmatprep.subr.mxu0 0.0
        %2880 = vmatpush1.xpose.msra.mxu0 0.0
        %2881 = vmatprep.subr.mxu0 0.0
        %2882 = vmatpush1.xpose.msra.mxu0 0.0
        %2883 = vmatprep.subr.mxu0 0.0
        %2884 = vmatpush1.xpose.msra.mxu0 0.0
        %2885 = vmatprep.subr.mxu0 0.0
        %2886 = vmatpush1.xpose.msra.mxu0 0.0
        %2887 = vmatprep.subr.mxu0 0.0
        %2888 = vmatpush1.xpose.msra.mxu0 0.0
        %2889 = vmatprep.subr.mxu0 0.0
        %2890 = vmatpush1.xpose.msra.mxu0 0.0
        %2891 = vmatprep.subr.mxu0 0.0
        %2892 = vmatpush1.xpose.msra.mxu0 0.0
        %2893 = vmatprep.mubr.f32.mxu0 0.0
        %2894 = vmatmul.mubr.f32.gmra.mrb[0].mxu0 %v2824
        %v2895 = vpop.f32.mrb[0].mxu0
        %v2896 = vadd.f32 0.0, %v2895
        %v2897 = vpop.f32.mrb[0].mxu0
        %2898 = vdwg.mxu0
        %v2899 = vmul.f32 %v2896, 0.5
        %v2900 = vsel %vm552, %v2899, -inf
        %2901 = vmax.xlane.f32.xlu0 %v2900
        %v2902 = vpop.xlane.xlu0 %2901
        %v2903 = vsub.f32 %v2899, %v2902
        %v2904 = vmul.f32 %v2903, 1.442695
        %v2905 = vpow.pop %v2904
        %v2906 = vsel %vm552, %v2905, 0.0
        %2907 = vadd.xlane.f32.xlu0 %v2906
        %v2908 = vpop.xlane.xlu0 %2907
        %v2909 = vrcp.pop %v2908
        %v2910 = vmul.f32 %v2905, %v2909
        %v2912 = vsel %vm552, %v2910, 0
        %2914 = vmatprep.subr.mxu0 0.0
        %2915 = vmatpush1.msra.mxu0 %v2820
        %2916 = vmatprep.subr.mxu0 0.0
        %2917 = vmatpush1.msra.mxu0 0.0
        %2918 = vmatprep.subr.mxu0 0.0
        %2919 = vmatpush1.msra.mxu0 0.0
        %2920 = vmatprep.subr.mxu0 0.0
        %2921 = vmatpush1.msra.mxu0 0.0
        %2922 = vmatprep.subr.mxu0 0.0
        %2923 = vmatpush1.msra.mxu0 0.0
        %2924 = vmatprep.subr.mxu0 0.0
        %2925 = vmatpush1.msra.mxu0 0.0
        %2926 = vmatprep.subr.mxu0 0.0
        %2927 = vmatpush1.msra.mxu0 0.0
        %2928 = vmatprep.subr.mxu0 0.0
        %2929 = vmatpush1.msra.mxu0 0.0
        %2930 = vmatprep.subr.mxu0 0.0
        %2931 = vmatpush1.msra.mxu0 0.0
        %2932 = vmatprep.subr.mxu0 0.0
        %2933 = vmatpush1.msra.mxu0 0.0
        %2934 = vmatprep.subr.mxu0 0.0
        %2935 = vmatpush1.msra.mxu0 0.0
        %2936 = vmatprep.subr.mxu0 0.0
        %2937 = vmatpush1.msra.mxu0 0.0
        %2938 = vmatprep.subr.mxu0 0.0
        %2939 = vmatpush1.msra.mxu0 0.0
        %2940 = vmatprep.subr.mxu0 0.0
        %2941 = vmatpush1.msra.mxu0 0.0
        %2942 = vmatprep.subr.mxu0 0.0
        %2943 = vmatpush1.msra.mxu0 0.0
        %2944 = vmatprep.subr.mxu0 0.0
        %2945 = vmatpush1.msra.mxu0 0.0
        %2946 = vmatprep.subr.mxu0 0.0
        %2947 = vmatpush1.msra.mxu0 0.0
        %2948 = vmatprep.subr.mxu0 0.0
        %2949 = vmatpush1.msra.mxu0 0.0
        %2950 = vmatprep.subr.mxu0 0.0
        %2951 = vmatpush1.msra.mxu0 0.0
        %2952 = vmatprep.subr.mxu0 0.0
        %2953 = vmatpush1.msra.mxu0 0.0
        %2954 = vmatprep.subr.mxu0 0.0
        %2955 = vmatpush1.msra.mxu0 0.0
        %2956 = vmatprep.subr.mxu0 0.0
        %2957 = vmatpush1.msra.mxu0 0.0
        %2958 = vmatprep.subr.mxu0 0.0
        %2959 = vmatpush1.msra.mxu0 0.0
        %2960 = vmatprep.subr.mxu0 0.0
        %2961 = vmatpush1.msra.mxu0 0.0
        %2962 = vmatprep.subr.mxu0 0.0
        %2963 = vmatpush1.msra.mxu0 0.0
        %2964 = vmatprep.subr.mxu0 0.0
        %2965 = vmatpush1.msra.mxu0 0.0
        %2966 = vmatprep.subr.mxu0 0.0
        %2967 = vmatpush1.msra.mxu0 0.0
        %2968 = vmatprep.subr.mxu0 0.0
        %2969 = vmatpush1.msra.mxu0 0.0
        %2970 = vmatprep.subr.mxu0 0.0
        %2971 = vmatpush1.msra.mxu0 0.0
        %2972 = vmatprep.subr.mxu0 0.0
        %2973 = vmatpush1.msra.mxu0 0.0
        %2974 = vmatprep.subr.mxu0 0.0
        %2975 = vmatpush1.msra.mxu0 0.0
        %2976 = vmatprep.subr.mxu0 0.0
        %2977 = vmatpush1.msra.mxu0 0.0
        %2978 = vmatprep.mubr.f32.mxu0 0.0
        %2979 = vmatmul.mubr.f32.gmra.mrb[0].mxu0 %v2912
        %v2980 = vpop.f32.mrb[0].mxu0
        %v2981 = vadd.f32 0.0, %v2980
        %v2982 = vpop.f32.mrb[0].mxu0
        %2983 = vdwg.mxu0
        %2985 = vrot.lane.b32.xlu0 %v2981, 24
        %v2986 = vpop.permute.xlu0 %2985
        %vm2988 = vcmask 228544
        %2989 = vst.msk [vmem:[#allocation2] sm:$0xff] %vm2988, %v2986
        %s2990 = scalar_lea.vmem %s1, 224
        %v2991 = vld [vmem:[%s2990] sm:$0xff]
        %v2992 = vld [vmem:[%s2990 + $0x8] sm:$0xff]
        %v2993 = vld [vmem:[%s2990 + $0x10] sm:$0xff]
        %v2994 = vld [vmem:[%s2990 + $0x18] sm:$0xff]
        %s2995 = scalar_lea.vmem %s2, 224
        %v2996 = vld [vmem:[%s2995] sm:$0xff]
        %v2997 = vld [vmem:[%s2995 + $0x8] sm:$0xff]
        %v2998 = vld [vmem:[%s2995 + $0x10] sm:$0xff]
        %v2999 = vld [vmem:[%s2995 + $0x18] sm:$0xff]
        %s3000 = scalar_lea.vmem %s3, 224
        %v3001 = vld [vmem:[%s3000] sm:$0xff]
        %v3002 = vld [vmem:[%s3000 + $0x8] sm:$0xff]
        %v3003 = vld [vmem:[%s3000 + $0x10] sm:$0xff]
        %v3004 = vld [vmem:[%s3000 + $0x18] sm:$0xff]
        %3005 = vmatprep.subr.mxu0 0.0
        %3006 = vmatpush1.msra.mxu0 %v2991
        %3007 = vmatprep.subr.mxu0 0.0
        %3008 = vmatpush1.msra.mxu0 %v2992
        %3009 = vmatprep.subr.mxu0 0.0
        %3010 = vmatpush1.msra.mxu0 %v2993
        %3011 = vmatprep.subr.mxu0 0.0
        %3012 = vmatpush1.msra.mxu0 %v2994
        %3013 = vmatprep.subr.mxu0 0.0
        %3014 = vmatpush1.msra.mxu0 0.0
        %3015 = vmatprep.subr.mxu0 0.0
        %3016 = vmatpush1.msra.mxu0 0.0
        %3017 = vmatprep.subr.mxu0 0.0
        %3018 = vmatpush1.msra.mxu0 0.0
        %3019 = vmatprep.subr.mxu0 0.0
        %3020 = vmatpush1.msra.mxu0 0.0
        %3021 = vmatprep.subr.mxu0 0.0
        %3022 = vmatpush1.msra.mxu0 0.0
        %3023 = vmatprep.subr.mxu0 0.0
        %3024 = vmatpush1.msra.mxu0 0.0
        %3025 = vmatprep.subr.mxu0 0.0
        %3026 = vmatpush1.msra.mxu0 0.0
        %3027 = vmatprep.subr.mxu0 0.0
        %3028 = vmatpush1.msra.mxu0 0.0
        %3029 = vmatprep.subr.mxu0 0.0
        %3030 = vmatpush1.msra.mxu0 0.0
        %3031 = vmatprep.subr.mxu0 0.0
        %3032 = vmatpush1.msra.mxu0 0.0
        %3033 = vmatprep.subr.mxu0 0.0
        %3034 = vmatpush1.msra.mxu0 0.0
        %3035 = vmatprep.subr.mxu0 0.0
        %3036 = vmatpush1.msra.mxu0 0.0
        %3037 = vmatprep.subr.mxu0 0.0
        %3038 = vmatpush1.msra.mxu0 0.0
        %3039 = vmatprep.subr.mxu0 0.0
        %3040 = vmatpush1.msra.mxu0 0.0
        %3041 = vmatprep.subr.mxu0 0.0
        %3042 = vmatpush1.msra.mxu0 0.0
        %3043 = vmatprep.subr.mxu0 0.0
        %3044 = vmatpush1.msra.mxu0 0.0
        %3045 = vmatprep.subr.mxu0 0.0
        %3046 = vmatpush1.msra.mxu0 0.0
        %3047 = vmatprep.subr.mxu0 0.0
        %3048 = vmatpush1.msra.mxu0 0.0
        %3049 = vmatprep.subr.mxu0 0.0
        %3050 = vmatpush1.msra.mxu0 0.0
        %3051 = vmatprep.subr.mxu0 0.0
        %3052 = vmatpush1.msra.mxu0 0.0
        %3053 = vmatprep.subr.mxu0 0.0
        %3054 = vmatpush1.msra.mxu0 0.0
        %3055 = vmatprep.subr.mxu0 0.0
        %3056 = vmatpush1.msra.mxu0 0.0
        %3057 = vmatprep.subr.mxu0 0.0
        %3058 = vmatpush1.msra.mxu0 0.0
        %3059 = vmatprep.subr.mxu0 0.0
        %3060 = vmatpush1.msra.mxu0 0.0
        %3061 = vmatprep.subr.mxu0 0.0
        %3062 = vmatpush1.msra.mxu0 0.0
        %3063 = vmatprep.subr.mxu0 0.0
        %3064 = vmatpush1.msra.mxu0 0.0
        %3065 = vmatprep.subr.mxu0 0.0
        %3066 = vmatpush1.msra.mxu0 0.0
        %3067 = vmatprep.subr.mxu0 0.0
        %3068 = vmatpush1.msra.mxu0 0.0
        %3069 = vmatprep.mubr.f32.mxu0 0.0
        %3070 = vmatmul.mubr.f32.gmra.mrb[0].mxu0 %v262
        %v3071 = vpop.f32.mrb[0].mxu0
        %v3072 = vadd.f32 0.0, %v3071
        %v3073 = vpop.f32.mrb[0].mxu0
        %3074 = vdwg.mxu0
        %3075 = vmatprep.subr.mxu0 0.0
        %3076 = vmatpush1.msra.mxu0 %v2996
        %3077 = vmatprep.subr.mxu0 0.0
        %3078 = vmatpush1.msra.mxu0 %v2997
        %3079 = vmatprep.subr.mxu0 0.0
        %3080 = vmatpush1.msra.mxu0 %v2998
        %3081 = vmatprep.subr.mxu0 0.0
        %3082 = vmatpush1.msra.mxu0 %v2999
        %3083 = vmatprep.subr.mxu0 0.0
        %3084 = vmatpush1.msra.mxu0 0.0
        %3085 = vmatprep.subr.mxu0 0.0
        %3086 = vmatpush1.msra.mxu0 0.0
        %3087 = vmatprep.subr.mxu0 0.0
        %3088 = vmatpush1.msra.mxu0 0.0
        %3089 = vmatprep.subr.mxu0 0.0
        %3090 = vmatpush1.msra.mxu0 0.0
        %3091 = vmatprep.subr.mxu0 0.0
        %3092 = vmatpush1.msra.mxu0 0.0
        %3093 = vmatprep.subr.mxu0 0.0
        %3094 = vmatpush1.msra.mxu0 0.0
        %3095 = vmatprep.subr.mxu0 0.0
        %3096 = vmatpush1.msra.mxu0 0.0
        %3097 = vmatprep.subr.mxu0 0.0
        %3098 = vmatpush1.msra.mxu0 0.0
        %3099 = vmatprep.subr.mxu0 0.0
        %3100 = vmatpush1.msra.mxu0 0.0
        %3101 = vmatprep.subr.mxu0 0.0
        %3102 = vmatpush1.msra.mxu0 0.0
        %3103 = vmatprep.subr.mxu0 0.0
        %3104 = vmatpush1.msra.mxu0 0.0
        %3105 = vmatprep.subr.mxu0 0.0
        %3106 = vmatpush1.msra.mxu0 0.0
        %3107 = vmatprep.subr.mxu0 0.0
        %3108 = vmatpush1.msra.mxu0 0.0
        %3109 = vmatprep.subr.mxu0 0.0
        %3110 = vmatpush1.msra.mxu0 0.0
        %3111 = vmatprep.subr.mxu0 0.0
        %3112 = vmatpush1.msra.mxu0 0.0
        %3113 = vmatprep.subr.mxu0 0.0
        %3114 = vmatpush1.msra.mxu0 0.0
        %3115 = vmatprep.subr.mxu0 0.0
        %3116 = vmatpush1.msra.mxu0 0.0
        %3117 = vmatprep.subr.mxu0 0.0
        %3118 = vmatpush1.msra.mxu0 0.0
        %3119 = vmatprep.subr.mxu0 0.0
        %3120 = vmatpush1.msra.mxu0 0.0
        %3121 = vmatprep.subr.mxu0 0.0
        %3122 = vmatpush1.msra.mxu0 0.0
        %3123 = vmatprep.subr.mxu0 0.0
        %3124 = vmatpush1.msra.mxu0 0.0
        %3125 = vmatprep.subr.mxu0 0.0
        %3126 = vmatpush1.msra.mxu0 0.0
        %3127 = vmatprep.subr.mxu0 0.0
        %3128 = vmatpush1.msra.mxu0 0.0
        %3129 = vmatprep.subr.mxu0 0.0
        %3130 = vmatpush1.msra.mxu0 0.0
        %3131 = vmatprep.subr.mxu0 0.0
        %3132 = vmatpush1.msra.mxu0 0.0
        %3133 = vmatprep.subr.mxu0 0.0
        %3134 = vmatpush1.msra.mxu0 0.0
        %3135 = vmatprep.subr.mxu0 0.0
        %3136 = vmatpush1.msra.mxu0 0.0
        %3137 = vmatprep.subr.mxu0 0.0
        %3138 = vmatpush1.msra.mxu0 0.0
        %3139 = vmatprep.mubr.f32.mxu0 0.0
        %3140 = vmatmul.mubr.f32.gmra.mrb[0].mxu0 %v262
        %v3141 = vpop.f32.mrb[0].mxu0
        %v3142 = vadd.f32 0.0, %v3141
        %v3143 = vpop.f32.mrb[0].mxu0
        %3144 = vdwg.mxu0
        %3145 = vmatprep.subr.mxu0 0.0
        %3146 = vmatpush1.msra.mxu0 %v3001
        %3147 = vmatprep.subr.mxu0 0.0
        %3148 = vmatpush1.msra.mxu0 %v3002
        %3149 = vmatprep.subr.mxu0 0.0
        %3150 = vmatpush1.msra.mxu0 %v3003
        %3151 = vmatprep.subr.mxu0 0.0
        %3152 = vmatpush1.msra.mxu0 %v3004
        %3153 = vmatprep.subr.mxu0 0.0
        %3154 = vmatpush1.msra.mxu0 0.0
        %3155 = vmatprep.subr.mxu0 0.0
        %3156 = vmatpush1.msra.mxu0 0.0
        %3157 = vmatprep.subr.mxu0 0.0
        %3158 = vmatpush1.msra.mxu0 0.0
        %3159 = vmatprep.subr.mxu0 0.0
        %3160 = vmatpush1.msra.mxu0 0.0
        %3161 = vmatprep.subr.mxu0 0.0
        %3162 = vmatpush1.msra.mxu0 0.0
        %3163 = vmatprep.subr.mxu0 0.0
        %3164 = vmatpush1.msra.mxu0 0.0
        %3165 = vmatprep.subr.mxu0 0.0
        %3166 = vmatpush1.msra.mxu0 0.0
        %3167 = vmatprep.subr.mxu0 0.0
        %3168 = vmatpush1.msra.mxu0 0.0
        %3169 = vmatprep.subr.mxu0 0.0
        %3170 = vmatpush1.msra.mxu0 0.0
        %3171 = vmatprep.subr.mxu0 0.0
        %3172 = vmatpush1.msra.mxu0 0.0
        %3173 = vmatprep.subr.mxu0 0.0
        %3174 = vmatpush1.msra.mxu0 0.0
        %3175 = vmatprep.subr.mxu0 0.0
        %3176 = vmatpush1.msra.mxu0 0.0
        %3177 = vmatprep.subr.mxu0 0.0
        %3178 = vmatpush1.msra.mxu0 0.0
        %3179 = vmatprep.subr.mxu0 0.0
        %3180 = vmatpush1.msra.mxu0 0.0
        %3181 = vmatprep.subr.mxu0 0.0
        %3182 = vmatpush1.msra.mxu0 0.0
        %3183 = vmatprep.subr.mxu0 0.0
        %3184 = vmatpush1.msra.mxu0 0.0
        %3185 = vmatprep.subr.mxu0 0.0
        %3186 = vmatpush1.msra.mxu0 0.0
        %3187 = vmatprep.subr.mxu0 0.0
        %3188 = vmatpush1.msra.mxu0 0.0
        %3189 = vmatprep.subr.mxu0 0.0
        %3190 = vmatpush1.msra.mxu0 0.0
        %3191 = vmatprep.subr.mxu0 0.0
        %3192 = vmatpush1.msra.mxu0 0.0
        %3193 = vmatprep.subr.mxu0 0.0
        %3194 = vmatpush1.msra.mxu0 0.0
        %3195 = vmatprep.subr.mxu0 0.0
        %3196 = vmatpush1.msra.mxu0 0.0
        %3197 = vmatprep.subr.mxu0 0.0
        %3198 = vmatpush1.msra.mxu0 0.0
        %3199 = vmatprep.subr.mxu0 0.0
        %3200 = vmatpush1.msra.mxu0 0.0
        %3201 = vmatprep.subr.mxu0 0.0
        %3202 = vmatpush1.msra.mxu0 0.0
        %3203 = vmatprep.subr.mxu0 0.0
        %3204 = vmatpush1.msra.mxu0 0.0
        %3205 = vmatprep.subr.mxu0 0.0
        %3206 = vmatpush1.msra.mxu0 0.0
        %3207 = vmatprep.subr.mxu0 0.0
        %3208 = vmatpush1.msra.mxu0 0.0
        %3209 = vmatprep.mubr.f32.mxu0 0.0
        %3210 = vmatmul.mubr.f32.gmra.mrb[0].mxu0 %v262
        %v3211 = vpop.f32.mrb[0].mxu0
        %v3212 = vadd.f32 0.0, %v3211
        %v3213 = vpop.f32.mrb[0].mxu0
        %3214 = vdwg.mxu0
        %v3216 = vsel %vm474, %v3072, 0
        %v3219 = vsel %vm474, %v3142, 0
        %3221 = vmatprep.subr.mxu0 0.0
        %3222 = vmatpush1.xpose.msra.mxu0 %v3219
        %3223 = vmatprep.subr.mxu0 0.0
        %3224 = vmatpush1.xpose.msra.mxu0 0.0
        %3225 = vmatprep.subr.mxu0 0.0
        %3226 = vmatpush1.xpose.msra.mxu0 0.0
        %3227 = vmatprep.subr.mxu0 0.0
        %3228 = vmatpush1.xpose.msra.mxu0 0.0
        %3229 = vmatprep.subr.mxu0 0.0
        %3230 = vmatpush1.xpose.msra.mxu0 0.0
        %3231 = vmatprep.subr.mxu0 0.0
        %3232 = vmatpush1.xpose.msra.mxu0 0.0
        %3233 = vmatprep.subr.mxu0 0.0
        %3234 = vmatpush1.xpose.msra.mxu0 0.0
        %3235 = vmatprep.subr.mxu0 0.0
        %3236 = vmatpush1.xpose.msra.mxu0 0.0
        %3237 = vmatprep.subr.mxu0 0.0
        %3238 = vmatpush1.xpose.msra.mxu0 0.0
        %3239 = vmatprep.subr.mxu0 0.0
        %3240 = vmatpush1.xpose.msra.mxu0 0.0
        %3241 = vmatprep.subr.mxu0 0.0
        %3242 = vmatpush1.xpose.msra.mxu0 0.0
        %3243 = vmatprep.subr.mxu0 0.0
        %3244 = vmatpush1.xpose.msra.mxu0 0.0
        %3245 = vmatprep.subr.mxu0 0.0
        %3246 = vmatpush1.xpose.msra.mxu0 0.0
        %3247 = vmatprep.subr.mxu0 0.0
        %3248 = vmatpush1.xpose.msra.mxu0 0.0
        %3249 = vmatprep.subr.mxu0 0.0
        %3250 = vmatpush1.xpose.msra.mxu0 0.0
        %3251 = vmatprep.subr.mxu0 0.0
        %3252 = vmatpush1.xpose.msra.mxu0 0.0
        %3253 = vmatprep.subr.mxu0 0.0
        %3254 = vmatpush1.xpose.msra.mxu0 0.0
        %3255 = vmatprep.subr.mxu0 0.0
        %3256 = vmatpush1.xpose.msra.mxu0 0.0
        %3257 = vmatprep.subr.mxu0 0.0
        %3258 = vmatpush1.xpose.msra.mxu0 0.0
        %3259 = vmatprep.subr.mxu0 0.0
        %3260 = vmatpush1.xpose.msra.mxu0 0.0
        %3261 = vmatprep.subr.mxu0 0.0
        %3262 = vmatpush1.xpose.msra.mxu0 0.0
        %3263 = vmatprep.subr.mxu0 0.0
        %3264 = vmatpush1.xpose.msra.mxu0 0.0
        %3265 = vmatprep.subr.mxu0 0.0
        %3266 = vmatpush1.xpose.msra.mxu0 0.0
        %3267 = vmatprep.subr.mxu0 0.0
        %3268 = vmatpush1.xpose.msra.mxu0 0.0
        %3269 = vmatprep.subr.mxu0 0.0
        %3270 = vmatpush1.xpose.msra.mxu0 0.0
        %3271 = vmatprep.subr.mxu0 0.0
        %3272 = vmatpush1.xpose.msra.mxu0 0.0
        %3273 = vmatprep.subr.mxu0 0.0
        %3274 = vmatpush1.xpose.msra.mxu0 0.0
        %3275 = vmatprep.subr.mxu0 0.0
        %3276 = vmatpush1.xpose.msra.mxu0 0.0
        %3277 = vmatprep.subr.mxu0 0.0
        %3278 = vmatpush1.xpose.msra.mxu0 0.0
        %3279 = vmatprep.subr.mxu0 0.0
        %3280 = vmatpush1.xpose.msra.mxu0 0.0
        %3281 = vmatprep.subr.mxu0 0.0
        %3282 = vmatpush1.xpose.msra.mxu0 0.0
        %3283 = vmatprep.subr.mxu0 0.0
        %3284 = vmatpush1.xpose.msra.mxu0 0.0
        %3285 = vmatprep.mubr.f32.mxu0 0.0
        %3286 = vmatmul.mubr.f32.gmra.mrb[0].mxu0 %v3216
        %v3287 = vpop.f32.mrb[0].mxu0
        %v3288 = vadd.f32 0.0, %v3287
        %v3289 = vpop.f32.mrb[0].mxu0
        %3290 = vdwg.mxu0
        %v3291 = vmul.f32 %v3288, 0.5
        %v3292 = vsel %vm552, %v3291, -inf
        %3293 = vmax.xlane.f32.xlu0 %v3292
        %v3294 = vpop.xlane.xlu0 %3293
        %v3295 = vsub.f32 %v3291, %v3294
        %v3296 = vmul.f32 %v3295, 1.442695
        %v3297 = vpow.pop %v3296
        %v3298 = vsel %vm552, %v3297, 0.0
        %3299 = vadd.xlane.f32.xlu0 %v3298
        %v3300 = vpop.xlane.xlu0 %3299
        %v3301 = vrcp.pop %v3300
        %v3302 = vmul.f32 %v3297, %v3301
        %v3304 = vsel %vm552, %v3302, 0
        %3306 = vmatprep.subr.mxu0 0.0
        %3307 = vmatpush1.msra.mxu0 %v3212
        %3308 = vmatprep.subr.mxu0 0.0
        %3309 = vmatpush1.msra.mxu0 0.0
        %3310 = vmatprep.subr.mxu0 0.0
        %3311 = vmatpush1.msra.mxu0 0.0
        %3312 = vmatprep.subr.mxu0 0.0
        %3313 = vmatpush1.msra.mxu0 0.0
        %3314 = vmatprep.subr.mxu0 0.0
        %3315 = vmatpush1.msra.mxu0 0.0
        %3316 = vmatprep.subr.mxu0 0.0
        %3317 = vmatpush1.msra.mxu0 0.0
        %3318 = vmatprep.subr.mxu0 0.0
        %3319 = vmatpush1.msra.mxu0 0.0
        %3320 = vmatprep.subr.mxu0 0.0
        %3321 = vmatpush1.msra.mxu0 0.0
        %3322 = vmatprep.subr.mxu0 0.0
        %3323 = vmatpush1.msra.mxu0 0.0
        %3324 = vmatprep.subr.mxu0 0.0
        %3325 = vmatpush1.msra.mxu0 0.0
        %3326 = vmatprep.subr.mxu0 0.0
        %3327 = vmatpush1.msra.mxu0 0.0
        %3328 = vmatprep.subr.mxu0 0.0
        %3329 = vmatpush1.msra.mxu0 0.0
        %3330 = vmatprep.subr.mxu0 0.0
        %3331 = vmatpush1.msra.mxu0 0.0
        %3332 = vmatprep.subr.mxu0 0.0
        %3333 = vmatpush1.msra.mxu0 0.0
        %3334 = vmatprep.subr.mxu0 0.0
        %3335 = vmatpush1.msra.mxu0 0.0
        %3336 = vmatprep.subr.mxu0 0.0
        %3337 = vmatpush1.msra.mxu0 0.0
        %3338 = vmatprep.subr.mxu0 0.0
        %3339 = vmatpush1.msra.mxu0 0.0
        %3340 = vmatprep.subr.mxu0 0.0
        %3341 = vmatpush1.msra.mxu0 0.0
        %3342 = vmatprep.subr.mxu0 0.0
        %3343 = vmatpush1.msra.mxu0 0.0
        %3344 = vmatprep.subr.mxu0 0.0
        %3345 = vmatpush1.msra.mxu0 0.0
        %3346 = vmatprep.subr.mxu0 0.0
        %3347 = vmatpush1.msra.mxu0 0.0
        %3348 = vmatprep.subr.mxu0 0.0
        %3349 = vmatpush1.msra.mxu0 0.0
        %3350 = vmatprep.subr.mxu0 0.0
        %3351 = vmatpush1.msra.mxu0 0.0
        %3352 = vmatprep.subr.mxu0 0.0
        %3353 = vmatpush1.msra.mxu0 0.0
        %3354 = vmatprep.subr.mxu0 0.0
        %3355 = vmatpush1.msra.mxu0 0.0
        %3356 = vmatprep.subr.mxu0 0.0
        %3357 = vmatpush1.msra.mxu0 0.0
        %3358 = vmatprep.subr.mxu0 0.0
        %3359 = vmatpush1.msra.mxu0 0.0
        %3360 = vmatprep.subr.mxu0 0.0
        %3361 = vmatpush1.msra.mxu0 0.0
        %3362 = vmatprep.subr.mxu0 0.0
        %3363 = vmatpush1.msra.mxu0 0.0
        %3364 = vmatprep.subr.mxu0 0.0
        %3365 = vmatpush1.msra.mxu0 0.0
        %3366 = vmatprep.subr.mxu0 0.0
        %3367 = vmatpush1.msra.mxu0 0.0
        %3368 = vmatprep.subr.mxu0 0.0
        %3369 = vmatpush1.msra.mxu0 0.0
        %3370 = vmatprep.mubr.f32.mxu0 0.0
        %3371 = vmatmul.mubr.f32.gmra.mrb[0].mxu0 %v3304
        %v3372 = vpop.f32.mrb[0].mxu0
        %v3373 = vadd.f32 0.0, %v3372
        %v3374 = vpop.f32.mrb[0].mxu0
        %3375 = vdwg.mxu0
        %3377 = vrot.lane.b32.xlu0 %v3373, 28
        %v3378 = vpop.permute.xlu0 %3377
        %vm3380 = vcmask 261344
        %3381 = vst.msk [vmem:[#allocation2] sm:$0xff] %vm3380, %v3378
        %v3382 = vld [vmem:[#allocation2] sm:$0xff]
        %v3383 = vld [vmem:[%s4] sm:$0xff]
        %v3384 = vld [vmem:[%s4 + $0x8] sm:$0xff]
        %v3385 = vld [vmem:[%s4 + $0x10] sm:$0xff]
        %v3386 = vld [vmem:[%s4 + $0x18] sm:$0xff]
        %v3387 = vld [vmem:[%s5] sm:$0x1]
        %v3389 = vlaneseq
        %v3390 = vshrl.u32 %v3389, 7
        %v3391 = vsub.s32 0, %v3390
        %v3392 = vrot.slane %v3387, %v3391
        %v3395 = vsel %vm260, %v3382, 0
        %3397 = vmatprep.subr.mxu0 0.0
        %3398 = vmatpush1.msra.mxu0 %v3383
        %3399 = vmatprep.subr.mxu0 0.0
        %3400 = vmatpush1.msra.mxu0 %v3384
        %3401 = vmatprep.subr.mxu0 0.0
        %3402 = vmatpush1.msra.mxu0 %v3385
        %3403 = vmatprep.subr.mxu0 0.0
        %3404 = vmatpush1.msra.mxu0 %v3386
        %3405 = vmatprep.subr.mxu0 0.0
        %3406 = vmatpush1.msra.mxu0 0.0
        %3407 = vmatprep.subr.mxu0 0.0
        %3408 = vmatpush1.msra.mxu0 0.0
        %3409 = vmatprep.subr.mxu0 0.0
        %3410 = vmatpush1.msra.mxu0 0.0
        %3411 = vmatprep.subr.mxu0 0.0
        %3412 = vmatpush1.msra.mxu0 0.0
        %3413 = vmatprep.subr.mxu0 0.0
        %3414 = vmatpush1.msra.mxu0 0.0
        %3415 = vmatprep.subr.mxu0 0.0
        %3416 = vmatpush1.msra.mxu0 0.0
        %3417 = vmatprep.subr.mxu0 0.0
        %3418 = vmatpush1.msra.mxu0 0.0
        %3419 = vmatprep.subr.mxu0 0.0
        %3420 = vmatpush1.msra.mxu0 0.0
        %3421 = vmatprep.subr.mxu0 0.0
        %3422 = vmatpush1.msra.mxu0 0.0
        %3423 = vmatprep.subr.mxu0 0.0
        %3424 = vmatpush1.msra.mxu0 0.0
        %3425 = vmatprep.subr.mxu0 0.0
        %3426 = vmatpush1.msra.mxu0 0.0
        %3427 = vmatprep.subr.mxu0 0.0
        %3428 = vmatpush1.msra.mxu0 0.0
        %3429 = vmatprep.subr.mxu0 0.0
        %3430 = vmatpush1.msra.mxu0 0.0
        %3431 = vmatprep.subr.mxu0 0.0
        %3432 = vmatpush1.msra.mxu0 0.0
        %3433 = vmatprep.subr.mxu0 0.0
        %3434 = vmatpush1.msra.mxu0 0.0
        %3435 = vmatprep.subr.mxu0 0.0
        %3436 = vmatpush1.msra.mxu0 0.0
        %3437 = vmatprep.subr.mxu0 0.0
        %3438 = vmatpush1.msra.mxu0 0.0
        %3439 = vmatprep.subr.mxu0 0.0
        %3440 = vmatpush1.msra.mxu0 0.0
        %3441 = vmatprep.subr.mxu0 0.0
        %3442 = vmatpush1.msra.mxu0 0.0
        %3443 = vmatprep.subr.mxu0 0.0
        %3444 = vmatpush1.msra.mxu0 0.0
        %3445 = vmatprep.subr.mxu0 0.0
        %3446 = vmatpush1.msra.mxu0 0.0
        %3447 = vmatprep.subr.mxu0 0.0
        %3448 = vmatpush1.msra.mxu0 0.0
        %3449 = vmatprep.subr.mxu0 0.0
        %3450 = vmatpush1.msra.mxu0 0.0
        %3451 = vmatprep.subr.mxu0 0.0
        %3452 = vmatpush1.msra.mxu0 0.0
        %3453 = vmatprep.subr.mxu0 0.0
        %3454 = vmatpush1.msra.mxu0 0.0
        %3455 = vmatprep.subr.mxu0 0.0
        %3456 = vmatpush1.msra.mxu0 0.0
        %3457 = vmatprep.subr.mxu0 0.0
        %3458 = vmatpush1.msra.mxu0 0.0
        %3459 = vmatprep.subr.mxu0 0.0
        %3460 = vmatpush1.msra.mxu0 0.0
        %3461 = vmatprep.mubr.f32.mxu0 0.0
        %3462 = vmatmul.mubr.f32.gmra.mrb[0].mxu0 %v3395
        %v3463 = vpop.f32.mrb[0].mxu0
        %v3464 = vadd.f32 %v3392, %v3463
        %v3465 = vpop.f32.mrb[0].mxu0
        %3466 = vdwg.mxu0
        %3467 = vst.msk [vmem:[%s242] sm:$0xff] %vm260, %v3464
        %s3468 = sand.u32 %s159, 1
        %s3469 = scalar_lea.sflag [#allocation4], %s3468
        %s3470 = sand.u32 %s159, 1
        %s3471 = smul.addr %s3470, 8
        %s3472 = scalar_lea.vmem [#allocation3], %s3471
        // Predicated region
        $region45: #{tpu_custom_call.1} parent=43 // pred_check
          %p3473 = pneg %p169
        $region46: #{tpu_custom_call.1} parent=43 // pred_check_branch
          %3475 = sbr.rel (%p3473) target = $region48
        $region47: #{tpu_custom_call.1} parent=43 // pred_region
          %s3477 = ssub.s32 128, 128
          %3478 = vsyncadd %s3469, %s3477
          %s3479 = smul.addr %s20, 128
          %s3480 = scalar_lea.hbm %s6, %s3479
          %s3482 = sshll.u32 %s3472, 4
          %s3483 = int_to_ptr.vmem [resolvable:$true] %s3482
          %3485 = dma.vmem_to_hbm [thread:$0]  %s3483, 128, %s3480, %s3469
        $region48: #{tpu_custom_call.1} parent=43 // pred_fallthru
          _
      $region44: #{tpu_custom_call.1} parent=5 // pred_fallthru
        _
      %p3486 = scmp.le.s32.totalorder 2, %s15
      // Predicated region
      $region49: #{tpu_custom_call.1} parent=5 // pred_check
        %p3487 = pneg %p3486
      $region50: #{tpu_custom_call.1} parent=5 // pred_check_branch
        %3489 = sbr.rel (%p3487) target = $region52
      $region51: #{tpu_custom_call.1} parent=5 // pred_region
        %s3490 = ssub.s32 %s15, 2
        // Predicated region
        $region53: #{tpu_custom_call.1} parent=51 // pred_check
          %p3491 = pneg %p175
        $region54: #{tpu_custom_call.1} parent=51 // pred_check_branch
          %3493 = sbr.rel (%p3491) target = $region56
        $region55: #{tpu_custom_call.1} parent=51 // pred_region
          %s3494 = sand.u32 %s160, 1
          %s3495 = scalar_lea.sflag [#allocation4], %s3494
          %s3496 = sand.u32 %s160, 1
          %s3497 = smul.addr %s3496, 8
          %s3498 = scalar_lea.vmem [#allocation3], %s3497
          %3499 = dma.done %s3495, 128
        $region56: #{tpu_custom_call.1} parent=51 // pred_fallthru
          _
      $region52: #{tpu_custom_call.1} parent=5 // pred_fallthru
        _
    $region6: #{tpu_custom_call.1} parent=1 // loop_footer
      %s19 = sadd.s32 1, %s15
    $region7: #{tpu_custom_call.1} parent=1 // loop_footer_branch
      %14 = sbr.rel target = $region3
    $region8: #{tpu_custom_call.1} parent=1 // loop_exit
      _
    %3500 = vsyncpa [#allocation4], 1
    %s3501 = scalar_lea.sflag [#allocation4], 1
    %3502 = vsyncpa %s3501, 1

</llo_original>
